<compile_context>
chip_gen: v6e
topology: v6e:2x2x1
jax: 0.10.0
libtpu: 0.0.40
codegen_flags: <defaults>
</compile_context>

<pallas_src>
import jax
import jax.numpy as jnp
from jax import lax
from jax.experimental import pallas as pl
from jax.experimental.pallas import tpu as pltpu


def cnn_to_tensors_pallas(x_nchw, weight, bias):
    """x_nchw: (N, 3, H, W) f32; weight: (1024, 3, 3, 3) f32; bias: (1024,) f32 -> (N, 1024) f32."""
    N, Cin, H, W = x_nchw.shape
    Cout, _, KH, KW = weight.shape

    CINP = 8                    # pad Cin 3 -> 8 per tap (zero channels contribute nothing)
    KUSED = KH * KW * CINP      # 72 used contraction lanes
    KPAD = 128                  # pad K to a full lane group for the MXU
    L = H * W                   # one conv output per valid (h, w) position
    CHUNK = 8                   # epilogue row chunk = one sublane group
    assert L % CHUNK == 0
    n_chunks = L // CHUNK

    # ---- wrapper: im2col-lite layout prep only (bf16 MXU operands, f32 bias) ----
    x_nhwc = jnp.transpose(x_nchw, (0, 2, 3, 1))                        # (N, H, W, Cin)
    xpad = jnp.pad(x_nhwc, ((0, 0), (1, 1), (1, 1), (0, CINP - Cin)))   # (N, H+2, W+2, CINP)
    taps = [xpad[:, kh:kh + H, kw:kw + W, :]
            for kh in range(KH) for kw in range(KW)]                    # 9 x (N, H, W, CINP)
    patches = jnp.stack(taps, axis=3).reshape(N, L, KUSED)              # (N, L, 72), tap-major
    patches = jnp.pad(patches, ((0, 0), (0, 0), (0, KPAD - KUSED)))
    patches = patches.astype(jnp.bfloat16)                              # (N, L, 128) bf16

    # Conv weight -> (KPAD, Cout) bf16, row ordering (kh, kw, ci) matching the patches.
    w2d = jnp.transpose(weight, (2, 3, 1, 0))                           # (KH, KW, Cin, Cout)
    w2d = jnp.pad(w2d, ((0, 0), (0, 0), (0, CINP - Cin), (0, 0)))       # (KH, KW, CINP, Cout)
    w2d = w2d.reshape(KUSED, Cout)
    w2d = jnp.pad(w2d, ((0, KPAD - KUSED), (0, 0))).astype(jnp.bfloat16)  # (128, Cout)

    b2d = bias.reshape(1, Cout).astype(jnp.float32)
    inv_hw = 1.0 / float(H * W)

    def kernel(x_ref, w_ref, b_ref, o_ref, acc_ref):
        # x_ref: (1, L, KPAD) bf16   im2col-lite patches for this batch element
        # w_ref: (KPAD, Cout) bf16   fused conv weights
        # b_ref: (1, Cout) f32
        # o_ref: (1, 1, Cout) f32
        # acc_ref: (L, Cout) f32 VMEM scratch (single store pass, single read pass)
        # One fused conv matmul: all nine taps ride a single K=128 bf16 MXU pass.
        acc_ref[...] = jnp.dot(x_ref[0], w_ref[...],
                               preferred_element_type=jnp.float32)

        # Streamed f32 epilogue: bias + ReLU + position-sum, 8 rows (1 sublane group) at a time.
        b_blk = jnp.broadcast_to(b_ref[...], (CHUNK, Cout))   # hoisted, loop-invariant

        def body(i, carry):
            start = pl.multiple_of(i * CHUNK, CHUNK)
            zc = jnp.maximum(acc_ref[pl.ds(start, CHUNK), :] + b_blk, 0.0)
            return carry + zc                                  # pure VPU adds, 8 vregs live

        part = lax.fori_loop(0, n_chunks, body,
                             jnp.zeros((CHUNK, Cout), jnp.float32), unroll=True)
        total = jnp.sum(part, axis=0, keepdims=True)           # one cross-sublane (XLU) reduce
        o_ref[0] = (total * inv_hw).astype(o_ref.dtype)

    flops = int(N * (2 * L * KPAD * Cout + 3 * L * Cout))
    bytes_accessed = int(patches.size * 2 + w2d.size * 2 + b2d.size * 4 + N * Cout * 4)

    out3 = pl.pallas_call(
        kernel,
        out_shape=jax.ShapeDtypeStruct((N, 1, Cout), jnp.float32),
        grid_spec=pltpu.PrefetchScalarGridSpec(
            num_scalar_prefetch=0,
            grid=(N,),
            in_specs=[
                pl.BlockSpec((1, L, KPAD), lambda n: (n, 0, 0)),
                pl.BlockSpec((KPAD, Cout), lambda n: (0, 0)),
                pl.BlockSpec((1, Cout), lambda n: (0, 0)),
            ],
            out_specs=pl.BlockSpec((1, 1, Cout), lambda n: (n, 0, 0)),
            scratch_shapes=[pltpu.VMEM((L, Cout), jnp.float32)],
        ),
        compiler_params=pltpu.CompilerParams(
            dimension_semantics=("parallel",)),
        cost_estimate=pl.CostEstimate(
            flops=flops, transcendentals=0, bytes_accessed=bytes_accessed),
    )(patches, w2d, b2d)

    return out3.reshape(N, Cout)            # torch.flatten(avgpool(...), 1); metadata-only


def _reference(x_nchw, weight, bias):
    # Pure-JAX f32 reference (NCHW conv, bias, ReLU, global avg pool, flatten).
    y = jax.lax.conv_general_dilated(
        x_nchw, weight, window_strides=(1, 1), padding=((1, 1), (1, 1)),
        dimension_numbers=("NCHW", "OIHW", "NCHW"))
    y = y + bias.reshape(1, -1, 1, 1)
    y = jnp.maximum(y, 0.0)
    return jnp.mean(y, axis=(2, 3))


if __name__ == "__main__":
    key = jax.random.PRNGKey(0)
    kx, kwt, kb = jax.random.split(key, 3)

    N, Cin, H, W = 2, 3, 16, 16
    Cout, KH, KW = 1024, 3, 3

    x = jax.random.normal(kx, (N, Cin, H, W), dtype=jnp.float32)
    fan_in = Cin * KH * KW
    bound = 1.0 / (fan_in ** 0.5)
    weight = jax.random.uniform(kwt, (Cout, Cin, KH, KW), jnp.float32, -bound, bound)
    bias = jax.random.uniform(kb, (Cout,), jnp.float32, -bound, bound)

    out = cnn_to_tensors_pallas(x, weight, bias)
    out = jax.block_until_ready(out)

    ref = _reference(x, weight, bias)
    assert out.shape == (N, Cout), out.shape
    err = float(jnp.max(jnp.abs(out - ref)))
    # bf16 MXU operands -> loosened tolerance vs the f32 reference (errors ~1e-3 here).
    assert jnp.allclose(out, ref, atol=1e-2, rtol=1e-2), err

    print("KERNEL_OK")
</pallas_src>

<mosaic_0001>
module attributes {stable_mosaic.version = 11 : i64} {
  func.func @kernel(%arg0: i32, %arg1: memref<1x256x128xbf16, #tpu.memory_space<vmem>>, %arg2: memref<128x1024xbf16, #tpu.memory_space<vmem>>, %arg3: memref<1x1024xf32, #tpu.memory_space<vmem>>, %arg4: memref<1x1x1024xf32, #tpu.memory_space<vmem>>, %arg5: memref<256x1024xf32, #tpu.memory_space<vmem>>) attributes {dimension_semantics = [#tpu.dimension_semantics<parallel>], iteration_bounds = array<i64: 2>, scalar_prefetch = 0 : i64, scratch_operands = 1 : i64, tpu.core_type = #tpu.core_type<tc>, window_params = [{transform_indices = @transform_0, window_bounds = array<i64: 1, 256, 128>}, {pipeline_mode = #tpu.pipeline_mode<synchronous>, transform_indices = @transform_1, window_bounds = array<i64: 128, 1024>}, {pipeline_mode = #tpu.pipeline_mode<synchronous>, transform_indices = @transform_2, window_bounds = array<i64: 1, 1024>}, {transform_indices = @transform_3, window_bounds = array<i64: 1, 1, 1024>}]} {
    %c0 = arith.constant 0 : index
    %c0_0 = arith.constant 0 : index
    %c0_1 = arith.constant 0 : index
    %0 = vector.load %arg1[%c0, %c0_0, %c0_1] : memref<1x256x128xbf16, #tpu.memory_space<vmem>>, vector<1x256x128xbf16>
    %1 = vector.shape_cast %0 : vector<1x256x128xbf16> to vector<256x128xbf16>
    %c0_2 = arith.constant 0 : index
    %c0_3 = arith.constant 0 : index
    %2 = vector.load %arg2[%c0_2, %c0_3] : memref<128x1024xbf16, #tpu.memory_space<vmem>>, vector<128x1024xbf16>
    %cst = arith.constant dense<0.000000e+00> : vector<256x1024xf32>
    %3 = tpu.matmul %1, %2, %cst {dimension_numbers = #tpu.dot_dimension_numbers<[1], [0], [0], [1], [0, 0, 1, 1], [], []>} : vector<256x128xbf16>, vector<128x1024xbf16>, vector<256x1024xf32> -> vector<256x1024xf32>
    %c0_4 = arith.constant 0 : index
    %c0_5 = arith.constant 0 : index
    %4 = vector.load %arg5[%c0_4, %c0_5] : memref<256x1024xf32, #tpu.memory_space<vmem>>, vector<256x1024xf32>
    tpu.vector_store %arg5[%c0_4, %c0_5], %3 {strides = array<i32>} : memref<256x1024xf32, #tpu.memory_space<vmem>>, vector<256x1024xf32>,
    %c0_6 = arith.constant 0 : index
    %c0_7 = arith.constant 0 : index
    %5 = vector.load %arg3[%c0_6, %c0_7] : memref<1x1024xf32, #tpu.memory_space<vmem>>, vector<1x1024xf32>
    %6 = vector.shape_cast %5 : vector<1x1024xf32> to vector<1x1024xf32>
    %7 = vector.broadcast %6 : vector<1x1024xf32> to vector<8x1024xf32>
    %cst_8 = arith.constant 0.000000e+00 : f32
    %8 = vector.broadcast %cst_8 : f32 to vector<8x1024xf32>
    %c0_i32 = arith.constant 0 : i32
    %c8_i32 = arith.constant 8 : i32
    %9 = arith.muli %c0_i32, %c8_i32 : i32
    %10 = tpu.assume_multiple %9, 8 : i32
    %11 = arith.index_cast %10 : i32 to index
    %c0_9 = arith.constant 0 : index
    %12 = vector.load %arg5[%11, %c0_9] : memref<256x1024xf32, #tpu.memory_space<vmem>>, vector<8x1024xf32>
    %13 = arith.addf %12, %7 : vector<8x1024xf32>
    %cst_10 = arith.constant 0.000000e+00 : f32
    %14 = vector.broadcast %cst_10 : f32 to vector<8x1024xf32>
    %15 = arith.maximumf %13, %14 : vector<8x1024xf32>
    %16 = arith.addf %8, %15 : vector<8x1024xf32>
    %c1_i32 = arith.constant 1 : i32
    %c8_i32_11 = arith.constant 8 : i32
    %17 = arith.muli %c1_i32, %c8_i32_11 : i32
    %18 = tpu.assume_multiple %17, 8 : i32
    %19 = arith.index_cast %18 : i32 to index
    %c0_12 = arith.constant 0 : index
    %20 = vector.load %arg5[%19, %c0_12] : memref<256x1024xf32, #tpu.memory_space<vmem>>, vector<8x1024xf32>
    %21 = arith.addf %20, %7 : vector<8x1024xf32>
    %cst_13 = arith.constant 0.000000e+00 : f32
    %22 = vector.broadcast %cst_13 : f32 to vector<8x1024xf32>
    %23 = arith.maximumf %21, %22 : vector<8x1024xf32>
    %24 = arith.addf %16, %23 : vector<8x1024xf32>
    %c2_i32 = arith.constant 2 : i32
    %c8_i32_14 = arith.constant 8 : i32
    %25 = arith.muli %c2_i32, %c8_i32_14 : i32
    %26 = tpu.assume_multiple %25, 8 : i32
    %27 = arith.index_cast %26 : i32 to index
    %c0_15 = arith.constant 0 : index
    %28 = vector.load %arg5[%27, %c0_15] : memref<256x1024xf32, #tpu.memory_space<vmem>>, vector<8x1024xf32>
    %29 = arith.addf %28, %7 : vector<8x1024xf32>
    %cst_16 = arith.constant 0.000000e+00 : f32
    %30 = vector.broadcast %cst_16 : f32 to vector<8x1024xf32>
    %31 = arith.maximumf %29, %30 : vector<8x1024xf32>
    %32 = arith.addf %24, %31 : vector<8x1024xf32>
    %c3_i32 = arith.constant 3 : i32
    %c8_i32_17 = arith.constant 8 : i32
    %33 = arith.muli %c3_i32, %c8_i32_17 : i32
    %34 = tpu.assume_multiple %33, 8 : i32
    %35 = arith.index_cast %34 : i32 to index
    %c0_18 = arith.constant 0 : index
    %36 = vector.load %arg5[%35, %c0_18] : memref<256x1024xf32, #tpu.memory_space<vmem>>, vector<8x1024xf32>
    %37 = arith.addf %36, %7 : vector<8x1024xf32>
    %cst_19 = arith.constant 0.000000e+00 : f32
    %38 = vector.broadcast %cst_19 : f32 to vector<8x1024xf32>
    %39 = arith.maximumf %37, %38 : vector<8x1024xf32>
    %40 = arith.addf %32, %39 : vector<8x1024xf32>
    %c4_i32 = arith.constant 4 : i32
    %c8_i32_20 = arith.constant 8 : i32
    %41 = arith.muli %c4_i32, %c8_i32_20 : i32
    %42 = tpu.assume_multiple %41, 8 : i32
    %43 = arith.index_cast %42 : i32 to index
    %c0_21 = arith.constant 0 : index
    %44 = vector.load %arg5[%43, %c0_21] : memref<256x1024xf32, #tpu.memory_space<vmem>>, vector<8x1024xf32>
    %45 = arith.addf %44, %7 : vector<8x1024xf32>
    %cst_22 = arith.constant 0.000000e+00 : f32
    %46 = vector.broadcast %cst_22 : f32 to vector<8x1024xf32>
    %47 = arith.maximumf %45, %46 : vector<8x1024xf32>
    %48 = arith.addf %40, %47 : vector<8x1024xf32>
    %c5_i32 = arith.constant 5 : i32
    %c8_i32_23 = arith.constant 8 : i32
    %49 = arith.muli %c5_i32, %c8_i32_23 : i32
    %50 = tpu.assume_multiple %49, 8 : i32
    %51 = arith.index_cast %50 : i32 to index
    %c0_24 = arith.constant 0 : index
    %52 = vector.load %arg5[%51, %c0_24] : memref<256x1024xf32, #tpu.memory_space<vmem>>, vector<8x1024xf32>
    %53 = arith.addf %52, %7 : vector<8x1024xf32>
    %cst_25 = arith.constant 0.000000e+00 : f32
    %54 = vector.broadcast %cst_25 : f32 to vector<8x1024xf32>
    %55 = arith.maximumf %53, %54 : vector<8x1024xf32>
    %56 = arith.addf %48, %55 : vector<8x1024xf32>
    %c6_i32 = arith.constant 6 : i32
    %c8_i32_26 = arith.constant 8 : i32
    %57 = arith.muli %c6_i32, %c8_i32_26 : i32
    %58 = tpu.assume_multiple %57, 8 : i32
    %59 = arith.index_cast %58 : i32 to index
    %c0_27 = arith.constant 0 : index
    %60 = vector.load %arg5[%59, %c0_27] : memref<256x1024xf32, #tpu.memory_space<vmem>>, vector<8x1024xf32>
    %61 = arith.addf %60, %7 : vector<8x1024xf32>
    %cst_28 = arith.constant 0.000000e+00 : f32
    %62 = vector.broadcast %cst_28 : f32 to vector<8x1024xf32>
    %63 = arith.maximumf %61, %62 : vector<8x1024xf32>
    %64 = arith.addf %56, %63 : vector<8x1024xf32>
    %c7_i32 = arith.constant 7 : i32
    %c8_i32_29 = arith.constant 8 : i32
    %65 = arith.muli %c7_i32, %c8_i32_29 : i32
    %66 = tpu.assume_multiple %65, 8 : i32
    %67 = arith.index_cast %66 : i32 to index
    %c0_30 = arith.constant 0 : index
    %68 = vector.load %arg5[%67, %c0_30] : memref<256x1024xf32, #tpu.memory_space<vmem>>, vector<8x1024xf32>
    %69 = arith.addf %68, %7 : vector<8x1024xf32>
    %cst_31 = arith.constant 0.000000e+00 : f32
    %70 = vector.broadcast %cst_31 : f32 to vector<8x1024xf32>
    %71 = arith.maximumf %69, %70 : vector<8x1024xf32>
    %72 = arith.addf %64, %71 : vector<8x1024xf32>
    %c8_i32_32 = arith.constant 8 : i32
    %c8_i32_33 = arith.constant 8 : i32
    %73 = arith.muli %c8_i32_32, %c8_i32_33 : i32
    %74 = tpu.assume_multiple %73, 8 : i32
    %75 = arith.index_cast %74 : i32 to index
    %c0_34 = arith.constant 0 : index
    %76 = vector.load %arg5[%75, %c0_34] : memref<256x1024xf32, #tpu.memory_space<vmem>>, vector<8x1024xf32>
    %77 = arith.addf %76, %7 : vector<8x1024xf32>
    %cst_35 = arith.constant 0.000000e+00 : f32
    %78 = vector.broadcast %cst_35 : f32 to vector<8x1024xf32>
    %79 = arith.maximumf %77, %78 : vector<8x1024xf32>
    %80 = arith.addf %72, %79 : vector<8x1024xf32>
    %c9_i32 = arith.constant 9 : i32
    %c8_i32_36 = arith.constant 8 : i32
    %81 = arith.muli %c9_i32, %c8_i32_36 : i32
    %82 = tpu.assume_multiple %81, 8 : i32
    %83 = arith.index_cast %82 : i32 to index
    %c0_37 = arith.constant 0 : index
    %84 = vector.load %arg5[%83, %c0_37] : memref<256x1024xf32, #tpu.memory_space<vmem>>, vector<8x1024xf32>
    %85 = arith.addf %84, %7 : vector<8x1024xf32>
    %cst_38 = arith.constant 0.000000e+00 : f32
    %86 = vector.broadcast %cst_38 : f32 to vector<8x1024xf32>
    %87 = arith.maximumf %85, %86 : vector<8x1024xf32>
    %88 = arith.addf %80, %87 : vector<8x1024xf32>
    %c10_i32 = arith.constant 10 : i32
    %c8_i32_39 = arith.constant 8 : i32
    %89 = arith.muli %c10_i32, %c8_i32_39 : i32
    %90 = tpu.assume_multiple %89, 8 : i32
    %91 = arith.index_cast %90 : i32 to index
    %c0_40 = arith.constant 0 : index
    %92 = vector.load %arg5[%91, %c0_40] : memref<256x1024xf32, #tpu.memory_space<vmem>>, vector<8x1024xf32>
    %93 = arith.addf %92, %7 : vector<8x1024xf32>
    %cst_41 = arith.constant 0.000000e+00 : f32
    %94 = vector.broadcast %cst_41 : f32 to vector<8x1024xf32>
    %95 = arith.maximumf %93, %94 : vector<8x1024xf32>
    %96 = arith.addf %88, %95 : vector<8x1024xf32>
    %c11_i32 = arith.constant 11 : i32
    %c8_i32_42 = arith.constant 8 : i32
    %97 = arith.muli %c11_i32, %c8_i32_42 : i32
    %98 = tpu.assume_multiple %97, 8 : i32
    %99 = arith.index_cast %98 : i32 to index
    %c0_43 = arith.constant 0 : index
    %100 = vector.load %arg5[%99, %c0_43] : memref<256x1024xf32, #tpu.memory_space<vmem>>, vector<8x1024xf32>
    %101 = arith.addf %100, %7 : vector<8x1024xf32>
    %cst_44 = arith.constant 0.000000e+00 : f32
    %102 = vector.broadcast %cst_44 : f32 to vector<8x1024xf32>
    %103 = arith.maximumf %101, %102 : vector<8x1024xf32>
    %104 = arith.addf %96, %103 : vector<8x1024xf32>
    %c12_i32 = arith.constant 12 : i32
    %c8_i32_45 = arith.constant 8 : i32
    %105 = arith.muli %c12_i32, %c8_i32_45 : i32
    %106 = tpu.assume_multiple %105, 8 : i32
    %107 = arith.index_cast %106 : i32 to index
    %c0_46 = arith.constant 0 : index
    %108 = vector.load %arg5[%107, %c0_46] : memref<256x1024xf32, #tpu.memory_space<vmem>>, vector<8x1024xf32>
    %109 = arith.addf %108, %7 : vector<8x1024xf32>
    %cst_47 = arith.constant 0.000000e+00 : f32
    %110 = vector.broadcast %cst_47 : f32 to vector<8x1024xf32>
    %111 = arith.maximumf %109, %110 : vector<8x1024xf32>
    %112 = arith.addf %104, %111 : vector<8x1024xf32>
    %c13_i32 = arith.constant 13 : i32
    %c8_i32_48 = arith.constant 8 : i32
    %113 = arith.muli %c13_i32, %c8_i32_48 : i32
    %114 = tpu.assume_multiple %113, 8 : i32
    %115 = arith.index_cast %114 : i32 to index
    %c0_49 = arith.constant 0 : index
    %116 = vector.load %arg5[%115, %c0_49] : memref<256x1024xf32, #tpu.memory_space<vmem>>, vector<8x1024xf32>
    %117 = arith.addf %116, %7 : vector<8x1024xf32>
    %cst_50 = arith.constant 0.000000e+00 : f32
    %118 = vector.broadcast %cst_50 : f32 to vector<8x1024xf32>
    %119 = arith.maximumf %117, %118 : vector<8x1024xf32>
    %120 = arith.addf %112, %119 : vector<8x1024xf32>
    %c14_i32 = arith.constant 14 : i32
    %c8_i32_51 = arith.constant 8 : i32
    %121 = arith.muli %c14_i32, %c8_i32_51 : i32
    %122 = tpu.assume_multiple %121, 8 : i32
    %123 = arith.index_cast %122 : i32 to index
    %c0_52 = arith.constant 0 : index
    %124 = vector.load %arg5[%123, %c0_52] : memref<256x1024xf32, #tpu.memory_space<vmem>>, vector<8x1024xf32>
    %125 = arith.addf %124, %7 : vector<8x1024xf32>
    %cst_53 = arith.constant 0.000000e+00 : f32
    %126 = vector.broadcast %cst_53 : f32 to vector<8x1024xf32>
    %127 = arith.maximumf %125, %126 : vector<8x1024xf32>
    %128 = arith.addf %120, %127 : vector<8x1024xf32>
    %c15_i32 = arith.constant 15 : i32
    %c8_i32_54 = arith.constant 8 : i32
    %129 = arith.muli %c15_i32, %c8_i32_54 : i32
    %130 = tpu.assume_multiple %129, 8 : i32
    %131 = arith.index_cast %130 : i32 to index
    %c0_55 = arith.constant 0 : index
    %132 = vector.load %arg5[%131, %c0_55] : memref<256x1024xf32, #tpu.memory_space<vmem>>, vector<8x1024xf32>
    %133 = arith.addf %132, %7 : vector<8x1024xf32>
    %cst_56 = arith.constant 0.000000e+00 : f32
    %134 = vector.broadcast %cst_56 : f32 to vector<8x1024xf32>
    %135 = arith.maximumf %133, %134 : vector<8x1024xf32>
    %136 = arith.addf %128, %135 : vector<8x1024xf32>
    %c16_i32 = arith.constant 16 : i32
    %c8_i32_57 = arith.constant 8 : i32
    %137 = arith.muli %c16_i32, %c8_i32_57 : i32
    %138 = tpu.assume_multiple %137, 8 : i32
    %139 = arith.index_cast %138 : i32 to index
    %c0_58 = arith.constant 0 : index
    %140 = vector.load %arg5[%139, %c0_58] : memref<256x1024xf32, #tpu.memory_space<vmem>>, vector<8x1024xf32>
    %141 = arith.addf %140, %7 : vector<8x1024xf32>
    %cst_59 = arith.constant 0.000000e+00 : f32
    %142 = vector.broadcast %cst_59 : f32 to vector<8x1024xf32>
    %143 = arith.maximumf %141, %142 : vector<8x1024xf32>
    %144 = arith.addf %136, %143 : vector<8x1024xf32>
    %c17_i32 = arith.constant 17 : i32
    %c8_i32_60 = arith.constant 8 : i32
    %145 = arith.muli %c17_i32, %c8_i32_60 : i32
    %146 = tpu.assume_multiple %145, 8 : i32
    %147 = arith.index_cast %146 : i32 to index
    %c0_61 = arith.constant 0 : index
    %148 = vector.load %arg5[%147, %c0_61] : memref<256x1024xf32, #tpu.memory_space<vmem>>, vector<8x1024xf32>
    %149 = arith.addf %148, %7 : vector<8x1024xf32>
    %cst_62 = arith.constant 0.000000e+00 : f32
    %150 = vector.broadcast %cst_62 : f32 to vector<8x1024xf32>
    %151 = arith.maximumf %149, %150 : vector<8x1024xf32>
    %152 = arith.addf %144, %151 : vector<8x1024xf32>
    %c18_i32 = arith.constant 18 : i32
    %c8_i32_63 = arith.constant 8 : i32
    %153 = arith.muli %c18_i32, %c8_i32_63 : i32
    %154 = tpu.assume_multiple %153, 8 : i32
    %155 = arith.index_cast %154 : i32 to index
    %c0_64 = arith.constant 0 : index
    %156 = vector.load %arg5[%155, %c0_64] : memref<256x1024xf32, #tpu.memory_space<vmem>>, vector<8x1024xf32>
    %157 = arith.addf %156, %7 : vector<8x1024xf32>
    %cst_65 = arith.constant 0.000000e+00 : f32
    %158 = vector.broadcast %cst_65 : f32 to vector<8x1024xf32>
    %159 = arith.maximumf %157, %158 : vector<8x1024xf32>
    %160 = arith.addf %152, %159 : vector<8x1024xf32>
    %c19_i32 = arith.constant 19 : i32
    %c8_i32_66 = arith.constant 8 : i32
    %161 = arith.muli %c19_i32, %c8_i32_66 : i32
    %162 = tpu.assume_multiple %161, 8 : i32
    %163 = arith.index_cast %162 : i32 to index
    %c0_67 = arith.constant 0 : index
    %164 = vector.load %arg5[%163, %c0_67] : memref<256x1024xf32, #tpu.memory_space<vmem>>, vector<8x1024xf32>
    %165 = arith.addf %164, %7 : vector<8x1024xf32>
    %cst_68 = arith.constant 0.000000e+00 : f32
    %166 = vector.broadcast %cst_68 : f32 to vector<8x1024xf32>
    %167 = arith.maximumf %165, %166 : vector<8x1024xf32>
    %168 = arith.addf %160, %167 : vector<8x1024xf32>
    %c20_i32 = arith.constant 20 : i32
    %c8_i32_69 = arith.constant 8 : i32
    %169 = arith.muli %c20_i32, %c8_i32_69 : i32
    %170 = tpu.assume_multiple %169, 8 : i32
    %171 = arith.index_cast %170 : i32 to index
    %c0_70 = arith.constant 0 : index
    %172 = vector.load %arg5[%171, %c0_70] : memref<256x1024xf32, #tpu.memory_space<vmem>>, vector<8x1024xf32>
    %173 = arith.addf %172, %7 : vector<8x1024xf32>
    %cst_71 = arith.constant 0.000000e+00 : f32
    %174 = vector.broadcast %cst_71 : f32 to vector<8x1024xf32>
    %175 = arith.maximumf %173, %174 : vector<8x1024xf32>
    %176 = arith.addf %168, %175 : vector<8x1024xf32>
    %c21_i32 = arith.constant 21 : i32
    %c8_i32_72 = arith.constant 8 : i32
    %177 = arith.muli %c21_i32, %c8_i32_72 : i32
    %178 = tpu.assume_multiple %177, 8 : i32
    %179 = arith.index_cast %178 : i32 to index
    %c0_73 = arith.constant 0 : index
    %180 = vector.load %arg5[%179, %c0_73] : memref<256x1024xf32, #tpu.memory_space<vmem>>, vector<8x1024xf32>
    %181 = arith.addf %180, %7 : vector<8x1024xf32>
    %cst_74 = arith.constant 0.000000e+00 : f32
    %182 = vector.broadcast %cst_74 : f32 to vector<8x1024xf32>
    %183 = arith.maximumf %181, %182 : vector<8x1024xf32>
    %184 = arith.addf %176, %183 : vector<8x1024xf32>
    %c22_i32 = arith.constant 22 : i32
    %c8_i32_75 = arith.constant 8 : i32
    %185 = arith.muli %c22_i32, %c8_i32_75 : i32
    %186 = tpu.assume_multiple %185, 8 : i32
    %187 = arith.index_cast %186 : i32 to index
    %c0_76 = arith.constant 0 : index
    %188 = vector.load %arg5[%187, %c0_76] : memref<256x1024xf32, #tpu.memory_space<vmem>>, vector<8x1024xf32>
    %189 = arith.addf %188, %7 : vector<8x1024xf32>
    %cst_77 = arith.constant 0.000000e+00 : f32
    %190 = vector.broadcast %cst_77 : f32 to vector<8x1024xf32>
    %191 = arith.maximumf %189, %190 : vector<8x1024xf32>
    %192 = arith.addf %184, %191 : vector<8x1024xf32>
    %c23_i32 = arith.constant 23 : i32
    %c8_i32_78 = arith.constant 8 : i32
    %193 = arith.muli %c23_i32, %c8_i32_78 : i32
    %194 = tpu.assume_multiple %193, 8 : i32
    %195 = arith.index_cast %194 : i32 to index
    %c0_79 = arith.constant 0 : index
    %196 = vector.load %arg5[%195, %c0_79] : memref<256x1024xf32, #tpu.memory_space<vmem>>, vector<8x1024xf32>
    %197 = arith.addf %196, %7 : vector<8x1024xf32>
    %cst_80 = arith.constant 0.000000e+00 : f32
    %198 = vector.broadcast %cst_80 : f32 to vector<8x1024xf32>
    %199 = arith.maximumf %197, %198 : vector<8x1024xf32>
    %200 = arith.addf %192, %199 : vector<8x1024xf32>
    %c24_i32 = arith.constant 24 : i32
    %c8_i32_81 = arith.constant 8 : i32
    %201 = arith.muli %c24_i32, %c8_i32_81 : i32
    %202 = tpu.assume_multiple %201, 8 : i32
    %203 = arith.index_cast %202 : i32 to index
    %c0_82 = arith.constant 0 : index
    %204 = vector.load %arg5[%203, %c0_82] : memref<256x1024xf32, #tpu.memory_space<vmem>>, vector<8x1024xf32>
    %205 = arith.addf %204, %7 : vector<8x1024xf32>
    %cst_83 = arith.constant 0.000000e+00 : f32
    %206 = vector.broadcast %cst_83 : f32 to vector<8x1024xf32>
    %207 = arith.maximumf %205, %206 : vector<8x1024xf32>
    %208 = arith.addf %200, %207 : vector<8x1024xf32>
    %c25_i32 = arith.constant 25 : i32
    %c8_i32_84 = arith.constant 8 : i32
    %209 = arith.muli %c25_i32, %c8_i32_84 : i32
    %210 = tpu.assume_multiple %209, 8 : i32
    %211 = arith.index_cast %210 : i32 to index
    %c0_85 = arith.constant 0 : index
    %212 = vector.load %arg5[%211, %c0_85] : memref<256x1024xf32, #tpu.memory_space<vmem>>, vector<8x1024xf32>
    %213 = arith.addf %212, %7 : vector<8x1024xf32>
    %cst_86 = arith.constant 0.000000e+00 : f32
    %214 = vector.broadcast %cst_86 : f32 to vector<8x1024xf32>
    %215 = arith.maximumf %213, %214 : vector<8x1024xf32>
    %216 = arith.addf %208, %215 : vector<8x1024xf32>
    %c26_i32 = arith.constant 26 : i32
    %c8_i32_87 = arith.constant 8 : i32
    %217 = arith.muli %c26_i32, %c8_i32_87 : i32
    %218 = tpu.assume_multiple %217, 8 : i32
    %219 = arith.index_cast %218 : i32 to index
    %c0_88 = arith.constant 0 : index
    %220 = vector.load %arg5[%219, %c0_88] : memref<256x1024xf32, #tpu.memory_space<vmem>>, vector<8x1024xf32>
    %221 = arith.addf %220, %7 : vector<8x1024xf32>
    %cst_89 = arith.constant 0.000000e+00 : f32
    %222 = vector.broadcast %cst_89 : f32 to vector<8x1024xf32>
    %223 = arith.maximumf %221, %222 : vector<8x1024xf32>
    %224 = arith.addf %216, %223 : vector<8x1024xf32>
    %c27_i32 = arith.constant 27 : i32
    %c8_i32_90 = arith.constant 8 : i32
    %225 = arith.muli %c27_i32, %c8_i32_90 : i32
    %226 = tpu.assume_multiple %225, 8 : i32
    %227 = arith.index_cast %226 : i32 to index
    %c0_91 = arith.constant 0 : index
    %228 = vector.load %arg5[%227, %c0_91] : memref<256x1024xf32, #tpu.memory_space<vmem>>, vector<8x1024xf32>
    %229 = arith.addf %228, %7 : vector<8x1024xf32>
    %cst_92 = arith.constant 0.000000e+00 : f32
    %230 = vector.broadcast %cst_92 : f32 to vector<8x1024xf32>
    %231 = arith.maximumf %229, %230 : vector<8x1024xf32>
    %232 = arith.addf %224, %231 : vector<8x1024xf32>
    %c28_i32 = arith.constant 28 : i32
    %c8_i32_93 = arith.constant 8 : i32
    %233 = arith.muli %c28_i32, %c8_i32_93 : i32
    %234 = tpu.assume_multiple %233, 8 : i32
    %235 = arith.index_cast %234 : i32 to index
    %c0_94 = arith.constant 0 : index
    %236 = vector.load %arg5[%235, %c0_94] : memref<256x1024xf32, #tpu.memory_space<vmem>>, vector<8x1024xf32>
    %237 = arith.addf %236, %7 : vector<8x1024xf32>
    %cst_95 = arith.constant 0.000000e+00 : f32
    %238 = vector.broadcast %cst_95 : f32 to vector<8x1024xf32>
    %239 = arith.maximumf %237, %238 : vector<8x1024xf32>
    %240 = arith.addf %232, %239 : vector<8x1024xf32>
    %c29_i32 = arith.constant 29 : i32
    %c8_i32_96 = arith.constant 8 : i32
    %241 = arith.muli %c29_i32, %c8_i32_96 : i32
    %242 = tpu.assume_multiple %241, 8 : i32
    %243 = arith.index_cast %242 : i32 to index
    %c0_97 = arith.constant 0 : index
    %244 = vector.load %arg5[%243, %c0_97] : memref<256x1024xf32, #tpu.memory_space<vmem>>, vector<8x1024xf32>
    %245 = arith.addf %244, %7 : vector<8x1024xf32>
    %cst_98 = arith.constant 0.000000e+00 : f32
    %246 = vector.broadcast %cst_98 : f32 to vector<8x1024xf32>
    %247 = arith.maximumf %245, %246 : vector<8x1024xf32>
    %248 = arith.addf %240, %247 : vector<8x1024xf32>
    %c30_i32 = arith.constant 30 : i32
    %c8_i32_99 = arith.constant 8 : i32
    %249 = arith.muli %c30_i32, %c8_i32_99 : i32
    %250 = tpu.assume_multiple %249, 8 : i32
    %251 = arith.index_cast %250 : i32 to index
    %c0_100 = arith.constant 0 : index
    %252 = vector.load %arg5[%251, %c0_100] : memref<256x1024xf32, #tpu.memory_space<vmem>>, vector<8x1024xf32>
    %253 = arith.addf %252, %7 : vector<8x1024xf32>
    %cst_101 = arith.constant 0.000000e+00 : f32
    %254 = vector.broadcast %cst_101 : f32 to vector<8x1024xf32>
    %255 = arith.maximumf %253, %254 : vector<8x1024xf32>
    %256 = arith.addf %248, %255 : vector<8x1024xf32>
    %c31_i32 = arith.constant 31 : i32
    %c8_i32_102 = arith.constant 8 : i32
    %257 = arith.muli %c31_i32, %c8_i32_102 : i32
    %258 = tpu.assume_multiple %257, 8 : i32
    %259 = arith.index_cast %258 : i32 to index
    %c0_103 = arith.constant 0 : index
    %260 = vector.load %arg5[%259, %c0_103] : memref<256x1024xf32, #tpu.memory_space<vmem>>, vector<8x1024xf32>
    %261 = arith.addf %260, %7 : vector<8x1024xf32>
    %cst_104 = arith.constant 0.000000e+00 : f32
    %262 = vector.broadcast %cst_104 : f32 to vector<8x1024xf32>
    %263 = arith.maximumf %261, %262 : vector<8x1024xf32>
    %264 = arith.addf %256, %263 : vector<8x1024xf32>
    %c32_i32 = arith.constant 32 : i32
    %cst_105 = arith.constant dense<0.000000e+00> : vector<1024xf32>
    %265 = vector.multi_reduction <add>, %264, %cst_105 [0] : vector<8x1024xf32> to vector<1024xf32>
    %266 = vector.shape_cast %265 : vector<1024xf32> to vector<1x1024xf32>
    %cst_106 = arith.constant 3.906250e-03 : f32
    %267 = vector.broadcast %cst_106 : f32 to vector<1x1024xf32>
    %268 = arith.mulf %266, %267 : vector<1x1024xf32>
    %c0_107 = arith.constant 0 : index
    %c0_108 = arith.constant 0 : index
    %c0_109 = arith.constant 0 : index
    %269 = vector.load %arg4[%c0_107, %c0_108, %c0_109] : memref<1x1x1024xf32, #tpu.memory_space<vmem>>, vector<1x1x1024xf32>
    %270 = vector.shape_cast %269 : vector<1x1x1024xf32> to vector<1x1024xf32>
    %271 = vector.shape_cast %268 : vector<1x1024xf32> to vector<1x1x1024xf32>
    tpu.vector_store %arg4[%c0_107, %c0_108, %c0_109], %271 {strides = array<i32>} : memref<1x1x1024xf32, #tpu.memory_space<vmem>>, vector<1x1x1024xf32>,
    return
  }
  func.func @transform_0(%arg0: i32) -> (i32, i32, i32) {
    %c0_i32 = arith.constant 0 : i32
    %c0_i32_0 = arith.constant 0 : i32
    %c0_i32_1 = arith.constant 0 : i32
    return %arg0, %c0_i32, %c0_i32_0 : i32, i32, i32
  }
  func.func @transform_1(%arg0: i32) -> (i32, i32) {
    %c0_i32 = arith.constant 0 : i32
    %c0_i32_0 = arith.constant 0 : i32
    %c0_i32_1 = arith.constant 0 : i32
    return %c0_i32, %c0_i32_0 : i32, i32
  }
  func.func @transform_2(%arg0: i32) -> (i32, i32) {
    %c0_i32 = arith.constant 0 : i32
    %c0_i32_0 = arith.constant 0 : i32
    %c0_i32_1 = arith.constant 0 : i32
    return %c0_i32, %c0_i32_0 : i32, i32
  }
  func.func @transform_3(%arg0: i32) -> (i32, i32, i32) {
    %c0_i32 = arith.constant 0 : i32
    %c0_i32_0 = arith.constant 0 : i32
    %c0_i32_1 = arith.constant 0 : i32
    return %arg0, %c0_i32, %c0_i32_0 : i32, i32, i32
  }
}

</mosaic_0001>

<llo_original>
// kernel: tpu_custom_call.1
$region0: #{tpu_custom_call.1}
  #allocation0 [shape = 'u32[]', space=smem, size = 0x4, offset = 0x4, fixed_abs, tag = 'smem constant byte address 0x4 - core index']
  #allocation1 [shape = 'u32[144,128]{1,0:T(1,128)}', space=vmem, size = 0x12000, scoped, tag = 'internal scratch']
  #allocation2 [shape = 'f32[256,1024]{1,0:T(8,128)}', space=vmem, size = 0x100000, scoped, tag = 'scratch operand']
  %s0 = inlined_call_operand.hbm [shape: bf16[2,256,128], index: 0, kind: input, shape index: {}]
  %s1 = inlined_call_operand.hbm [shape: bf16[128,1024], index: 1, kind: input, shape index: {}]
  %s2 = inlined_call_operand.hbm [shape: f32[1,1024], index: 2, kind: input, shape index: {}]
  %s3 = inlined_call_operand.hbm [shape: f32[2,1,1024], index: 3, kind: output, shape index: {}]
  %s4 = sld [smem:[#allocation0]]
  $region57: #{tpu_custom_call.1} parent=0
    _
  %s6 = ssub.s32 1, %s4
  %s7 = scalar_select 0, %s6, %s4
  $region1: #{tpu_custom_call.1} parent=0
    #allocation3 [shape = 'u8[131072]{0}', space=vmem, size = 0x20000, scoped, tag = 'input window, operand 0']
    #allocation4 [shape = 's32[2]{0}', space=sflag, size = 0x8, scoped, tag = 'scoped memory for tpu_custom_call.1']
    #allocation5 [shape = 's32[2]{0}', space=sflag, size = 0x8, scoped, tag = 'scoped memory for tpu_custom_call.1']
    #allocation6 [shape = 'u8[262144]{0}', space=vmem, size = 0x40000, scoped, tag = 'input window, operand 1, single buffered']
    #allocation7 [shape = 's32[1]{0}', space=sflag, size = 0x4, scoped, tag = 'scoped memory for tpu_custom_call.1']
    #allocation8 [shape = 'u8[4096]{0}', space=vmem, size = 0x1000, scoped, tag = 'input window, operand 2, single buffered']
    #allocation9 [shape = 'u8[8192]{0}', space=vmem, size = 0x2000, scoped, tag = 'output window, operand 0']
    %8 = vsyncpa [#allocation4], 0
    %s9 = scalar_lea.sflag [#allocation4], 1
    %10 = vsyncpa %s9, 0
    %11 = vsyncpa [#allocation7], 0
    %12 = vsyncpa [#allocation5], 0
    %s13 = scalar_lea.sflag [#allocation5], 1
    %14 = vsyncpa %s13, 0
    loop: start=0, step=1, limit=4
    $region2: #{tpu_custom_call.1} parent=1 // loop_pre_header
      _
    $region3: #{tpu_custom_call.1} parent=1 // loop_header
      %s16 = sphi 0, %s20
      %p17 = scmp.ge.s32.totalorder %s16, 4
      %s26 = sphi 0, %s28
      %s29 = sphi 0, %s26
      %s30 = sphi 0, %s29
      %s46 = sphi 0, %s30
      %s50 = sphi 0, %s50
      %s52 = sphi 0, %s50
      %s53 = sphi 0, %s52
      %s67 = sphi 0, %s53
      %s71 = sphi 0, %s71
      %s73 = sphi 0, %s71
      %s74 = sphi 0, %s73
      %s88 = sphi 0, %s74
      %s94 = sphi 0, %s96
      %s97 = sphi 0, %s94
      %s98 = sphi 0, %s97
      %s114 = sphi 0, %s98
    $region4: #{tpu_custom_call.1} parent=1 // loop_header_branch
      %19 = sbr.rel (%p17) target = $region8
    $region5: #{tpu_custom_call.1} parent=1 // loop_body
      %s21 = ssub.s32 %s16, 1
      %s22 = ssub.s32 %s16, 2
      %s23 = sadd.s32 %s16, 1
      %s24 = ssub.s32 %s16, %s23
      %p25 = scmp.eq.s32.totalorder %s24, 0
      %s27 = sadd.s32 %s26, 1
      %s28 = scalar_select %p25, %s26, %s27
      %p31 = pneg %p25
      %p32 = scmp.eq.s32.totalorder %s16, 1
      %p33 = por %p31, %p32
      %p34 = scmp.ne.s32.totalorder %s26, %s29
      %p35 = scmp.eq.s32.totalorder %s16, 0
      %p36 = por %p34, %p35
      %p37 = scmp.ne.s32.totalorder %s26, %s29
      %p38 = scmp.eq.s32.totalorder %s21, 1
      %p39 = por %p37, %p38
      %p40 = scmp.ne.s32.totalorder %s29, %s30
      %p41 = scmp.eq.s32.totalorder %s21, 0
      %p42 = por %p40, %p41
      %p43 = scmp.ne.s32.totalorder %s29, %s30
      %p44 = scmp.eq.s32.totalorder %s22, 1
      %p45 = por %p43, %p44
      %p47 = scmp.ne.s32.totalorder %s30, %s46
      %p48 = scmp.eq.s32.totalorder %s22, 0
      %p49 = por %p47, %p48
      %s51 = sadd.s32 %s50, 1
      %p54 = scmp.eq.s32.totalorder %s16, 1
      %p55 = scmp.ne.s32.totalorder %s50, %s52
      %p56 = scmp.eq.s32.totalorder %s16, 0
      %p57 = por %p55, %p56
      %p58 = scmp.ne.s32.totalorder %s50, %s52
      %p59 = scmp.eq.s32.totalorder %s21, 1
      %p60 = por %p58, %p59
      %p61 = scmp.ne.s32.totalorder %s52, %s53
      %p62 = scmp.eq.s32.totalorder %s21, 0
      %p63 = por %p61, %p62
      %p64 = scmp.ne.s32.totalorder %s52, %s53
      %p65 = scmp.eq.s32.totalorder %s22, 1
      %p66 = por %p64, %p65
      %p68 = scmp.ne.s32.totalorder %s53, %s67
      %p69 = scmp.eq.s32.totalorder %s22, 0
      %p70 = por %p68, %p69
      %s72 = sadd.s32 %s71, 1
      %p75 = scmp.eq.s32.totalorder %s16, 1
      %p76 = scmp.ne.s32.totalorder %s71, %s73
      %p77 = scmp.eq.s32.totalorder %s16, 0
      %p78 = por %p76, %p77
      %p79 = scmp.ne.s32.totalorder %s71, %s73
      %p80 = scmp.eq.s32.totalorder %s21, 1
      %p81 = por %p79, %p80
      %p82 = scmp.ne.s32.totalorder %s73, %s74
      %p83 = scmp.eq.s32.totalorder %s21, 0
      %p84 = por %p82, %p83
      %p85 = scmp.ne.s32.totalorder %s73, %s74
      %p86 = scmp.eq.s32.totalorder %s22, 1
      %p87 = por %p85, %p86
      %p89 = scmp.ne.s32.totalorder %s74, %s88
      %p90 = scmp.eq.s32.totalorder %s22, 0
      %p91 = por %p89, %p90
      %s92 = ssub.s32 %s16, %s23
      %p93 = scmp.eq.s32.totalorder %s92, 0
      %s95 = sadd.s32 %s94, 1
      %s96 = scalar_select %p93, %s94, %s95
      %p99 = pneg %p93
      %p100 = scmp.eq.s32.totalorder %s16, 1
      %p101 = por %p99, %p100
      %p102 = scmp.ne.s32.totalorder %s94, %s97
      %p103 = scmp.eq.s32.totalorder %s16, 0
      %p104 = por %p102, %p103
      %p105 = scmp.ne.s32.totalorder %s94, %s97
      %p106 = scmp.eq.s32.totalorder %s21, 1
      %p107 = por %p105, %p106
      %p108 = scmp.ne.s32.totalorder %s97, %s98
      %p109 = scmp.eq.s32.totalorder %s21, 0
      %p110 = por %p108, %p109
      %p111 = scmp.ne.s32.totalorder %s97, %s98
      %p112 = scmp.eq.s32.totalorder %s22, 1
      %p113 = por %p111, %p112
      %p115 = scmp.ne.s32.totalorder %s98, %s114
      %p116 = scmp.eq.s32.totalorder %s22, 0
      %p117 = por %p115, %p116
      %p118 = scmp.le.s32.totalorder 1, %s16
      %p119 = scmp.lt.s32.totalorder %s16, 3
      %p120 = pnand %p118, %p119
      %p121 = pneg %p120
      // Predicated region
      $region9: #{tpu_custom_call.1} parent=5 // pred_check
        _
      $region10: #{tpu_custom_call.1} parent=5 // pred_check_branch
        %123 = sbr.rel (%p120) target = $region12
      $region11: #{tpu_custom_call.1} parent=5 // pred_region
        %s124 = ssub.s32 %s16, 1
        // Predicated region
        $region13: #{tpu_custom_call.1} parent=11 // pred_check
          %p125 = pneg %p63
        $region14: #{tpu_custom_call.1} parent=11 // pred_check_branch
          %127 = sbr.rel (%p125) target = $region16
        $region15: #{tpu_custom_call.1} parent=11 // pred_region
          %s129 = ssub.s32 8192, 8192
          %130 = vsyncadd [#allocation7], %s129
          %s131 = sshll.u32 [#allocation6], 4
          %s132 = int_to_ptr.vmem [resolvable:$true] %s131
          %137 = dma.hbm_to_vmem [thread:$0]  %s1, 8192, %s132, [#allocation7], 512, 512, 32
        $region16: #{tpu_custom_call.1} parent=11 // pred_fallthru
          _
        // Predicated region
        $region17: #{tpu_custom_call.1} parent=11 // pred_check
          %p138 = pneg %p84
        $region18: #{tpu_custom_call.1} parent=11 // pred_check_branch
          %140 = sbr.rel (%p138) target = $region20
        $region19: #{tpu_custom_call.1} parent=11 // pred_region
          %s142 = ssub.s32 128, 128
          %143 = vsyncadd [#allocation7], %s142
          %s145 = sshll.u32 [#allocation8], 4
          %s146 = int_to_ptr.vmem [resolvable:$true] %s145
          %148 = dma.hbm_to_vmem [thread:$0]  %s2, 128, %s146, [#allocation7]
        $region20: #{tpu_custom_call.1} parent=11 // pred_fallthru
          _
      $region12: #{tpu_custom_call.1} parent=5 // pred_fallthru
        _
      %p149 = scmp.lt.s32.totalorder %s16, 2
      // Predicated region
      $region21: #{tpu_custom_call.1} parent=5 // pred_check
        %p150 = pneg %p149
      $region22: #{tpu_custom_call.1} parent=5 // pred_check_branch
        %152 = sbr.rel (%p150) target = $region24
      $region23: #{tpu_custom_call.1} parent=5 // pred_region
        // Predicated region
        $region25: #{tpu_custom_call.1} parent=23 // pred_check
          %p153 = pneg %p36
        $region26: #{tpu_custom_call.1} parent=23 // pred_check_branch
          %155 = sbr.rel (%p153) target = $region28
        $region27: #{tpu_custom_call.1} parent=23 // pred_region
          %s156 = sand.u32 %s26, 1
          %s157 = scalar_lea.sflag [#allocation4], %s156
          %s158 = sand.u32 %s26, 1
          %s159 = smul.addr %s158, 128
          %s160 = scalar_lea.vmem [#allocation3], %s159
          %s162 = ssub.s32 2048, 2048
          %163 = vsyncadd %s157, %s162
          %s164 = smul.addr %s16, 32
          %s165 = smul.addr %s164, 64
          %s166 = scalar_lea.hbm %s0, %s165
          %s167 = sshll.u32 %s160, 4
          %s168 = int_to_ptr.vmem [resolvable:$true] %s167
          %173 = dma.hbm_to_vmem [thread:$0]  %s166, 2048, %s168, %s157, 64, 64, 4
        $region28: #{tpu_custom_call.1} parent=23 // pred_fallthru
          _
      $region24: #{tpu_custom_call.1} parent=5 // pred_fallthru
        _
      %p174 = scmp.le.s32.totalorder 1, %s16
      %p175 = scmp.lt.s32.totalorder %s16, 3
      %p176 = pnand %p174, %p175
      %p177 = pneg %p176
      // Predicated region
      $region29: #{tpu_custom_call.1} parent=5 // pred_check
        _
      $region30: #{tpu_custom_call.1} parent=5 // pred_check_branch
        %179 = sbr.rel (%p176) target = $region32
      $region31: #{tpu_custom_call.1} parent=5 // pred_region
        %s180 = ssub.s32 %s16, 1
        %s181 = sand.u32 %s29, 1
        %s182 = scalar_lea.sflag [#allocation4], %s181
        %s183 = sand.u32 %s29, 1
        %s184 = smul.addr %s183, 128
        %s185 = scalar_lea.vmem [#allocation3], %s184
        // Predicated region
        $region33: #{tpu_custom_call.1} parent=31 // pred_check
          %p186 = pneg %p42
        $region34: #{tpu_custom_call.1} parent=31 // pred_check_branch
          %188 = sbr.rel (%p186) target = $region36
        $region35: #{tpu_custom_call.1} parent=31 // pred_region
          %189 = dma.done %s182, 2048
        $region36: #{tpu_custom_call.1} parent=31 // pred_fallthru
          _
        // Predicated region
        $region37: #{tpu_custom_call.1} parent=31 // pred_check
          %p190 = pneg %p63
        $region38: #{tpu_custom_call.1} parent=31 // pred_check_branch
          %192 = sbr.rel (%p190) target = $region40
        $region39: #{tpu_custom_call.1} parent=31 // pred_region
          %193 = dma.done [#allocation7], 8192
        $region40: #{tpu_custom_call.1} parent=31 // pred_fallthru
          _
        // Predicated region
        $region41: #{tpu_custom_call.1} parent=31 // pred_check
          %p194 = pneg %p84
        $region42: #{tpu_custom_call.1} parent=31 // pred_check_branch
          %196 = sbr.rel (%p194) target = $region44
        $region43: #{tpu_custom_call.1} parent=31 // pred_region
          %197 = dma.done [#allocation7], 128
        $region44: #{tpu_custom_call.1} parent=31 // pred_fallthru
          _
        %s198 = sand.u32 %s29, 1
        %s199 = scalar_lea.sflag [#allocation4], %s198
        %s200 = sand.u32 %s29, 1
        %s201 = smul.addr %s200, 128
        %s202 = scalar_lea.vmem [#allocation3], %s201
        %p203 = pneg %p42
        %p204 = pneg %p39
        %p205 = pneg %p63
        %p206 = pneg %p60
        %p207 = pneg %p84
        %p208 = pneg %p81
        %p209 = pneg %p110
        %p210 = pneg %p107
        %s211 = sand.u32 %s97, 1
        %s212 = scalar_lea.sflag [#allocation5], %s211
        %s213 = sand.u32 %s97, 1
        %s214 = smul.addr %s213, 8
        %s215 = scalar_lea.vmem [#allocation9], %s214
        %v217 = vld [vmem:[%s185] sm:$0xf]
        %v218 = vld [vmem:[%s185 + $0x4] sm:$0xf]
        %v219 = vld [vmem:[%s185 + $0x8] sm:$0xf]
        %v220 = vld [vmem:[%s185 + $0xc] sm:$0xf]
        %v221 = vld [vmem:[%s185 + $0x10] sm:$0xf]
        %v222 = vld [vmem:[%s185 + $0x14] sm:$0xf]
        %v223 = vld [vmem:[%s185 + $0x18] sm:$0xf]
        %v224 = vld [vmem:[%s185 + $0x1c] sm:$0xf]
        %v225 = vld [vmem:[%s185 + $0x20] sm:$0xf]
        %v226 = vld [vmem:[%s185 + $0x24] sm:$0xf]
        %v227 = vld [vmem:[%s185 + $0x28] sm:$0xf]
        %v228 = vld [vmem:[%s185 + $0x2c] sm:$0xf]
        %v229 = vld [vmem:[%s185 + $0x30] sm:$0xf]
        %v230 = vld [vmem:[%s185 + $0x34] sm:$0xf]
        %v231 = vld [vmem:[%s185 + $0x38] sm:$0xf]
        %v232 = vld [vmem:[%s185 + $0x3c] sm:$0xf]
        %v233 = vld [vmem:[%s185 + $0x40] sm:$0xf]
        %v234 = vld [vmem:[%s185 + $0x44] sm:$0xf]
        %v235 = vld [vmem:[%s185 + $0x48] sm:$0xf]
        %v236 = vld [vmem:[%s185 + $0x4c] sm:$0xf]
        %v237 = vld [vmem:[%s185 + $0x50] sm:$0xf]
        %v238 = vld [vmem:[%s185 + $0x54] sm:$0xf]
        %v239 = vld [vmem:[%s185 + $0x58] sm:$0xf]
        %v240 = vld [vmem:[%s185 + $0x5c] sm:$0xf]
        %v241 = vld [vmem:[%s185 + $0x60] sm:$0xf]
        %v242 = vld [vmem:[%s185 + $0x64] sm:$0xf]
        %v243 = vld [vmem:[%s185 + $0x68] sm:$0xf]
        %v244 = vld [vmem:[%s185 + $0x6c] sm:$0xf]
        %v245 = vld [vmem:[%s185 + $0x70] sm:$0xf]
        %v246 = vld [vmem:[%s185 + $0x74] sm:$0xf]
        %v247 = vld [vmem:[%s185 + $0x78] sm:$0xf]
        %v248 = vld [vmem:[%s185 + $0x7c] sm:$0xf]
        %v249 = vld [vmem:[#allocation6] sm:$0xff]
        %v250 = vld [vmem:[#allocation6 + $0x8] sm:$0xff]
        %v251 = vld [vmem:[#allocation6 + $0x10] sm:$0xff]
        %v252 = vld [vmem:[#allocation6 + $0x18] sm:$0xff]
        %v253 = vld [vmem:[#allocation6 + $0x20] sm:$0xff]
        %v254 = vld [vmem:[#allocation6 + $0x28] sm:$0xff]
        %v255 = vld [vmem:[#allocation6 + $0x30] sm:$0xff]
        %v256 = vld [vmem:[#allocation6 + $0x38] sm:$0xff]
        %v257 = vld [vmem:[#allocation6 + $0x40] sm:$0xff]
        %v258 = vld [vmem:[#allocation6 + $0x48] sm:$0xff]
        %v259 = vld [vmem:[#allocation6 + $0x50] sm:$0xff]
        %v260 = vld [vmem:[#allocation6 + $0x58] sm:$0xff]
        %v261 = vld [vmem:[#allocation6 + $0x60] sm:$0xff]
        %v262 = vld [vmem:[#allocation6 + $0x68] sm:$0xff]
        %v263 = vld [vmem:[#allocation6 + $0x70] sm:$0xff]
        %v264 = vld [vmem:[#allocation6 + $0x78] sm:$0xff]
        %v265 = vld [vmem:[#allocation6 + $0x80] sm:$0xff]
        %v266 = vld [vmem:[#allocation6 + $0x88] sm:$0xff]
        %v267 = vld [vmem:[#allocation6 + $0x90] sm:$0xff]
        %v268 = vld [vmem:[#allocation6 + $0x98] sm:$0xff]
        %v269 = vld [vmem:[#allocation6 + $0xa0] sm:$0xff]
        %v270 = vld [vmem:[#allocation6 + $0xa8] sm:$0xff]
        %v271 = vld [vmem:[#allocation6 + $0xb0] sm:$0xff]
        %v272 = vld [vmem:[#allocation6 + $0xb8] sm:$0xff]
        %v273 = vld [vmem:[#allocation6 + $0xc0] sm:$0xff]
        %v274 = vld [vmem:[#allocation6 + $0xc8] sm:$0xff]
        %v275 = vld [vmem:[#allocation6 + $0xd0] sm:$0xff]
        %v276 = vld [vmem:[#allocation6 + $0xd8] sm:$0xff]
        %v277 = vld [vmem:[#allocation6 + $0xe0] sm:$0xff]
        %v278 = vld [vmem:[#allocation6 + $0xe8] sm:$0xff]
        %v279 = vld [vmem:[#allocation6 + $0xf0] sm:$0xff]
        %v280 = vld [vmem:[#allocation6 + $0xf8] sm:$0xff]
        %v281 = vld [vmem:[#allocation6 + $0x100] sm:$0xff]
        %v282 = vld [vmem:[#allocation6 + $0x108] sm:$0xff]
        %v283 = vld [vmem:[#allocation6 + $0x110] sm:$0xff]
        %v284 = vld [vmem:[#allocation6 + $0x118] sm:$0xff]
        %v285 = vld [vmem:[#allocation6 + $0x120] sm:$0xff]
        %v286 = vld [vmem:[#allocation6 + $0x128] sm:$0xff]
        %v287 = vld [vmem:[#allocation6 + $0x130] sm:$0xff]
        %v288 = vld [vmem:[#allocation6 + $0x138] sm:$0xff]
        %v289 = vld [vmem:[#allocation6 + $0x140] sm:$0xff]
        %v290 = vld [vmem:[#allocation6 + $0x148] sm:$0xff]
        %v291 = vld [vmem:[#allocation6 + $0x150] sm:$0xff]
        %v292 = vld [vmem:[#allocation6 + $0x158] sm:$0xff]
        %v293 = vld [vmem:[#allocation6 + $0x160] sm:$0xff]
        %v294 = vld [vmem:[#allocation6 + $0x168] sm:$0xff]
        %v295 = vld [vmem:[#allocation6 + $0x170] sm:$0xff]
        %v296 = vld [vmem:[#allocation6 + $0x178] sm:$0xff]
        %v297 = vld [vmem:[#allocation6 + $0x180] sm:$0xff]
        %v298 = vld [vmem:[#allocation6 + $0x188] sm:$0xff]
        %v299 = vld [vmem:[#allocation6 + $0x190] sm:$0xff]
        %v300 = vld [vmem:[#allocation6 + $0x198] sm:$0xff]
        %v301 = vld [vmem:[#allocation6 + $0x1a0] sm:$0xff]
        %v302 = vld [vmem:[#allocation6 + $0x1a8] sm:$0xff]
        %v303 = vld [vmem:[#allocation6 + $0x1b0] sm:$0xff]
        %v304 = vld [vmem:[#allocation6 + $0x1b8] sm:$0xff]
        %v305 = vld [vmem:[#allocation6 + $0x1c0] sm:$0xff]
        %v306 = vld [vmem:[#allocation6 + $0x1c8] sm:$0xff]
        %v307 = vld [vmem:[#allocation6 + $0x1d0] sm:$0xff]
        %v308 = vld [vmem:[#allocation6 + $0x1d8] sm:$0xff]
        %v309 = vld [vmem:[#allocation6 + $0x1e0] sm:$0xff]
        %v310 = vld [vmem:[#allocation6 + $0x1e8] sm:$0xff]
        %v311 = vld [vmem:[#allocation6 + $0x1f0] sm:$0xff]
        %v312 = vld [vmem:[#allocation6 + $0x1f8] sm:$0xff]
        %v345 = vunpack.c.l.b16 %v217
        %v346 = vunpack.c.l.b16 %v218
        %v347 = vunpack.c.l.b16 %v219
        %v348 = vunpack.c.l.b16 %v220
        %v349 = vunpack.c.l.b16 %v221
        %v350 = vunpack.c.l.b16 %v222
        %v351 = vunpack.c.l.b16 %v223
        %v352 = vunpack.c.l.b16 %v224
        %v353 = vunpack.c.l.b16 %v225
        %v354 = vunpack.c.l.b16 %v226
        %v355 = vunpack.c.l.b16 %v227
        %v356 = vunpack.c.l.b16 %v228
        %v357 = vunpack.c.l.b16 %v229
        %v358 = vunpack.c.l.b16 %v230
        %v359 = vunpack.c.l.b16 %v231
        %v360 = vunpack.c.l.b16 %v232
        %v361 = vunpack.c.l.b16 %v233
        %v362 = vunpack.c.l.b16 %v234
        %v363 = vunpack.c.l.b16 %v235
        %v364 = vunpack.c.l.b16 %v236
        %v365 = vunpack.c.l.b16 %v237
        %v366 = vunpack.c.l.b16 %v238
        %v367 = vunpack.c.l.b16 %v239
        %v368 = vunpack.c.l.b16 %v240
        %v369 = vunpack.c.l.b16 %v241
        %v370 = vunpack.c.l.b16 %v242
        %v371 = vunpack.c.l.b16 %v243
        %v372 = vunpack.c.l.b16 %v244
        %v373 = vunpack.c.l.b16 %v245
        %v374 = vunpack.c.l.b16 %v246
        %v375 = vunpack.c.l.b16 %v247
        %v376 = vunpack.c.l.b16 %v248
        %v377 = vpack.c.b16 %v346, %v345
        %v378 = vpack.c.b16 %v348, %v347
        %v379 = vpack.c.b16 %v350, %v349
        %v380 = vpack.c.b16 %v352, %v351
        %v381 = vpack.c.b16 %v354, %v353
        %v382 = vpack.c.b16 %v356, %v355
        %v383 = vpack.c.b16 %v358, %v357
        %v384 = vpack.c.b16 %v360, %v359
        %v385 = vpack.c.b16 %v362, %v361
        %v386 = vpack.c.b16 %v364, %v363
        %v387 = vpack.c.b16 %v366, %v365
        %v388 = vpack.c.b16 %v368, %v367
        %v389 = vpack.c.b16 %v370, %v369
        %v390 = vpack.c.b16 %v372, %v371
        %v391 = vpack.c.b16 %v374, %v373
        %v392 = vpack.c.b16 %v376, %v375
        %v473 = vunpack.c.l.b16 %v249
        %v474 = vunpack.c.h.b16 %v249
        %v475 = vunpack.c.l.b16 %v250
        %v476 = vunpack.c.h.b16 %v250
        %v477 = vunpack.c.l.b16 %v251
        %v478 = vunpack.c.h.b16 %v251
        %v479 = vunpack.c.l.b16 %v252
        %v480 = vunpack.c.h.b16 %v252
        %v481 = vunpack.c.l.b16 %v253
        %v482 = vunpack.c.h.b16 %v253
        %v483 = vunpack.c.l.b16 %v254
        %v484 = vunpack.c.h.b16 %v254
        %v485 = vunpack.c.l.b16 %v255
        %v486 = vunpack.c.h.b16 %v255
        %v487 = vunpack.c.l.b16 %v256
        %v488 = vunpack.c.h.b16 %v256
        %v489 = vunpack.c.l.b16 %v257
        %v490 = vunpack.c.h.b16 %v257
        %v491 = vunpack.c.l.b16 %v258
        %v492 = vunpack.c.h.b16 %v258
        %v493 = vunpack.c.l.b16 %v259
        %v494 = vunpack.c.h.b16 %v259
        %v495 = vunpack.c.l.b16 %v260
        %v496 = vunpack.c.h.b16 %v260
        %v497 = vunpack.c.l.b16 %v261
        %v498 = vunpack.c.h.b16 %v261
        %v499 = vunpack.c.l.b16 %v262
        %v500 = vunpack.c.h.b16 %v262
        %v501 = vunpack.c.l.b16 %v263
        %v502 = vunpack.c.h.b16 %v263
        %v503 = vunpack.c.l.b16 %v264
        %v504 = vunpack.c.h.b16 %v264
        %v505 = vunpack.c.l.b16 %v265
        %v506 = vunpack.c.h.b16 %v265
        %v507 = vunpack.c.l.b16 %v266
        %v508 = vunpack.c.h.b16 %v266
        %v509 = vunpack.c.l.b16 %v267
        %v510 = vunpack.c.h.b16 %v267
        %v511 = vunpack.c.l.b16 %v268
        %v512 = vunpack.c.h.b16 %v268
        %v513 = vunpack.c.l.b16 %v269
        %v514 = vunpack.c.h.b16 %v269
        %v515 = vunpack.c.l.b16 %v270
        %v516 = vunpack.c.h.b16 %v270
        %v517 = vunpack.c.l.b16 %v271
        %v518 = vunpack.c.h.b16 %v271
        %v519 = vunpack.c.l.b16 %v272
        %v520 = vunpack.c.h.b16 %v272
        %v521 = vunpack.c.l.b16 %v273
        %v522 = vunpack.c.h.b16 %v273
        %v523 = vunpack.c.l.b16 %v274
        %v524 = vunpack.c.h.b16 %v274
        %v525 = vunpack.c.l.b16 %v275
        %v526 = vunpack.c.h.b16 %v275
        %v527 = vunpack.c.l.b16 %v276
        %v528 = vunpack.c.h.b16 %v276
        %v529 = vunpack.c.l.b16 %v277
        %v530 = vunpack.c.h.b16 %v277
        %v531 = vunpack.c.l.b16 %v278
        %v532 = vunpack.c.h.b16 %v278
        %v533 = vunpack.c.l.b16 %v279
        %v534 = vunpack.c.h.b16 %v279
        %v535 = vunpack.c.l.b16 %v280
        %v536 = vunpack.c.h.b16 %v280
        %v537 = vunpack.c.l.b16 %v281
        %v538 = vunpack.c.h.b16 %v281
        %v539 = vunpack.c.l.b16 %v282
        %v540 = vunpack.c.h.b16 %v282
        %v541 = vunpack.c.l.b16 %v283
        %v542 = vunpack.c.h.b16 %v283
        %v543 = vunpack.c.l.b16 %v284
        %v544 = vunpack.c.h.b16 %v284
        %v545 = vunpack.c.l.b16 %v285
        %v546 = vunpack.c.h.b16 %v285
        %v547 = vunpack.c.l.b16 %v286
        %v548 = vunpack.c.h.b16 %v286
        %v549 = vunpack.c.l.b16 %v287
        %v550 = vunpack.c.h.b16 %v287
        %v551 = vunpack.c.l.b16 %v288
        %v552 = vunpack.c.h.b16 %v288
        %v553 = vunpack.c.l.b16 %v289
        %v554 = vunpack.c.h.b16 %v289
        %v555 = vunpack.c.l.b16 %v290
        %v556 = vunpack.c.h.b16 %v290
        %v557 = vunpack.c.l.b16 %v291
        %v558 = vunpack.c.h.b16 %v291
        %v559 = vunpack.c.l.b16 %v292
        %v560 = vunpack.c.h.b16 %v292
        %v561 = vunpack.c.l.b16 %v293
        %v562 = vunpack.c.h.b16 %v293
        %v563 = vunpack.c.l.b16 %v294
        %v564 = vunpack.c.h.b16 %v294
        %v565 = vunpack.c.l.b16 %v295
        %v566 = vunpack.c.h.b16 %v295
        %v567 = vunpack.c.l.b16 %v296
        %v568 = vunpack.c.h.b16 %v296
        %v569 = vunpack.c.l.b16 %v297
        %v570 = vunpack.c.h.b16 %v297
        %v571 = vunpack.c.l.b16 %v298
        %v572 = vunpack.c.h.b16 %v298
        %v573 = vunpack.c.l.b16 %v299
        %v574 = vunpack.c.h.b16 %v299
        %v575 = vunpack.c.l.b16 %v300
        %v576 = vunpack.c.h.b16 %v300
        %v577 = vunpack.c.l.b16 %v301
        %v578 = vunpack.c.h.b16 %v301
        %v579 = vunpack.c.l.b16 %v302
        %v580 = vunpack.c.h.b16 %v302
        %v581 = vunpack.c.l.b16 %v303
        %v582 = vunpack.c.h.b16 %v303
        %v583 = vunpack.c.l.b16 %v304
        %v584 = vunpack.c.h.b16 %v304
        %v585 = vunpack.c.l.b16 %v305
        %v586 = vunpack.c.h.b16 %v305
        %v587 = vunpack.c.l.b16 %v306
        %v588 = vunpack.c.h.b16 %v306
        %v589 = vunpack.c.l.b16 %v307
        %v590 = vunpack.c.h.b16 %v307
        %v591 = vunpack.c.l.b16 %v308
        %v592 = vunpack.c.h.b16 %v308
        %v593 = vunpack.c.l.b16 %v309
        %v594 = vunpack.c.h.b16 %v309
        %v595 = vunpack.c.l.b16 %v310
        %v596 = vunpack.c.h.b16 %v310
        %v597 = vunpack.c.l.b16 %v311
        %v598 = vunpack.c.h.b16 %v311
        %v599 = vunpack.c.l.b16 %v312
        %v600 = vunpack.c.h.b16 %v312
        %v601 = vpack.c.b16 %v481, %v473
        %v602 = vpack.c.b16 %v482, %v474
        %v603 = vpack.c.b16 %v483, %v475
        %v604 = vpack.c.b16 %v484, %v476
        %v605 = vpack.c.b16 %v485, %v477
        %v606 = vpack.c.b16 %v486, %v478
        %v607 = vpack.c.b16 %v487, %v479
        %v608 = vpack.c.b16 %v488, %v480
        %v609 = vpack.c.b16 %v497, %v489
        %v610 = vpack.c.b16 %v498, %v490
        %v611 = vpack.c.b16 %v499, %v491
        %v612 = vpack.c.b16 %v500, %v492
        %v613 = vpack.c.b16 %v501, %v493
        %v614 = vpack.c.b16 %v502, %v494
        %v615 = vpack.c.b16 %v503, %v495
        %v616 = vpack.c.b16 %v504, %v496
        %v617 = vpack.c.b16 %v513, %v505
        %v618 = vpack.c.b16 %v514, %v506
        %v619 = vpack.c.b16 %v515, %v507
        %v620 = vpack.c.b16 %v516, %v508
        %v621 = vpack.c.b16 %v517, %v509
        %v622 = vpack.c.b16 %v518, %v510
        %v623 = vpack.c.b16 %v519, %v511
        %v624 = vpack.c.b16 %v520, %v512
        %v625 = vpack.c.b16 %v529, %v521
        %v626 = vpack.c.b16 %v530, %v522
        %v627 = vpack.c.b16 %v531, %v523
        %v628 = vpack.c.b16 %v532, %v524
        %v629 = vpack.c.b16 %v533, %v525
        %v630 = vpack.c.b16 %v534, %v526
        %v631 = vpack.c.b16 %v535, %v527
        %v632 = vpack.c.b16 %v536, %v528
        %v633 = vpack.c.b16 %v545, %v537
        %v634 = vpack.c.b16 %v546, %v538
        %v635 = vpack.c.b16 %v547, %v539
        %v636 = vpack.c.b16 %v548, %v540
        %v637 = vpack.c.b16 %v549, %v541
        %v638 = vpack.c.b16 %v550, %v542
        %v639 = vpack.c.b16 %v551, %v543
        %v640 = vpack.c.b16 %v552, %v544
        %v641 = vpack.c.b16 %v561, %v553
        %v642 = vpack.c.b16 %v562, %v554
        %v643 = vpack.c.b16 %v563, %v555
        %v644 = vpack.c.b16 %v564, %v556
        %v645 = vpack.c.b16 %v565, %v557
        %v646 = vpack.c.b16 %v566, %v558
        %v647 = vpack.c.b16 %v567, %v559
        %v648 = vpack.c.b16 %v568, %v560
        %v649 = vpack.c.b16 %v577, %v569
        %v650 = vpack.c.b16 %v578, %v570
        %v651 = vpack.c.b16 %v579, %v571
        %v652 = vpack.c.b16 %v580, %v572
        %v653 = vpack.c.b16 %v581, %v573
        %v654 = vpack.c.b16 %v582, %v574
        %v655 = vpack.c.b16 %v583, %v575
        %v656 = vpack.c.b16 %v584, %v576
        %v657 = vpack.c.b16 %v593, %v585
        %v658 = vpack.c.b16 %v594, %v586
        %v659 = vpack.c.b16 %v595, %v587
        %v660 = vpack.c.b16 %v596, %v588
        %v661 = vpack.c.b16 %v597, %v589
        %v662 = vpack.c.b16 %v598, %v590
        %v663 = vpack.c.b16 %v599, %v591
        %v664 = vpack.c.b16 %v600, %v592
        %729 = vmatprep.subr.bf16.mxu0 %v658
        %730 = vmatpush1.bf16.msra.mxu0 %v657
        %731 = vmatprep.subr.bf16.mxu0 %v650
        %732 = vmatpush1.bf16.msra.mxu0 %v649
        %733 = vmatprep.subr.bf16.mxu0 %v642
        %734 = vmatpush1.bf16.msra.mxu0 %v641
        %735 = vmatprep.subr.bf16.mxu0 %v634
        %736 = vmatpush1.bf16.msra.mxu0 %v633
        %737 = vmatprep.subr.bf16.mxu0 %v626
        %738 = vmatpush1.bf16.msra.mxu0 %v625
        %739 = vmatprep.subr.bf16.mxu0 %v618
        %740 = vmatpush1.bf16.msra.mxu0 %v617
        %741 = vmatprep.subr.bf16.mxu0 %v610
        %742 = vmatpush1.bf16.msra.mxu0 %v609
        %743 = vmatprep.subr.bf16.mxu0 %v602
        %744 = vmatpush1.bf16.msra.mxu0 %v601
        %745 = vmatprep.subr.bf16.mxu0 0
        %746 = vmatpush2.bf16.msra.mxu0 0
        %747 = vmatprep.subr.bf16.mxu0 0
        %748 = vmatpush2.bf16.msra.mxu0 0
        %749 = vmatprep.subr.bf16.mxu0 0
        %750 = vmatpush2.bf16.msra.mxu0 0
        %751 = vmatprep.subr.bf16.mxu0 0
        %752 = vmatpush2.bf16.msra.mxu0 0
        %753 = vmatprep.subr.bf16.mxu0 0
        %754 = vmatpush2.bf16.msra.mxu0 0
        %755 = vmatprep.subr.bf16.mxu0 0
        %756 = vmatpush2.bf16.msra.mxu0 0
        %757 = vmatprep.subr.bf16.mxu0 0
        %758 = vmatpush2.bf16.msra.mxu0 0
        %759 = vmatprep.subr.bf16.mxu0 0
        %760 = vmatpush2.bf16.msra.mxu0 0
        %761 = vmatprep.mubr.bf16.mxu0 0
        %762 = vmatmul.mubr.bf16.gmra.mxu0 %v377
        %v763 = vpop.f32.mrf.mxu0
        %v764 = vadd.f32 0.0, %v763
        %v765 = vpop.f32.mrf.mxu0
        %v766 = vadd.f32 0.0, %v765
        %v767 = vpop.f32.mrf.mxu0
        %v768 = vadd.f32 0.0, %v767
        %v769 = vpop.f32.mrf.mxu0
        %v770 = vadd.f32 0.0, %v769
        %771 = vmatprep.mubr.bf16.mxu0 0
        %772 = vmatmul.mubr.bf16.gmra.mxu0 %v378
        %v773 = vpop.f32.mrf.mxu0
        %v774 = vadd.f32 0.0, %v773
        %v775 = vpop.f32.mrf.mxu0
        %v776 = vadd.f32 0.0, %v775
        %v777 = vpop.f32.mrf.mxu0
        %v778 = vadd.f32 0.0, %v777
        %v779 = vpop.f32.mrf.mxu0
        %v780 = vadd.f32 0.0, %v779
        %781 = vmatprep.mubr.bf16.mxu0 0
        %782 = vmatmul.mubr.bf16.gmra.mxu0 %v379
        %v783 = vpop.f32.mrf.mxu0
        %v784 = vadd.f32 0.0, %v783
        %v785 = vpop.f32.mrf.mxu0
        %v786 = vadd.f32 0.0, %v785
        %v787 = vpop.f32.mrf.mxu0
        %v788 = vadd.f32 0.0, %v787
        %v789 = vpop.f32.mrf.mxu0
        %v790 = vadd.f32 0.0, %v789
        %791 = vmatprep.mubr.bf16.mxu0 0
        %792 = vmatmul.mubr.bf16.gmra.mxu0 %v380
        %v793 = vpop.f32.mrf.mxu0
        %v794 = vadd.f32 0.0, %v793
        %v795 = vpop.f32.mrf.mxu0
        %v796 = vadd.f32 0.0, %v795
        %v797 = vpop.f32.mrf.mxu0
        %v798 = vadd.f32 0.0, %v797
        %v799 = vpop.f32.mrf.mxu0
        %v800 = vadd.f32 0.0, %v799
        %801 = vmatprep.mubr.bf16.mxu0 0
        %802 = vmatmul.mubr.bf16.gmra.mxu0 %v381
        %v803 = vpop.f32.mrf.mxu0
        %v804 = vadd.f32 0.0, %v803
        %v805 = vpop.f32.mrf.mxu0
        %v806 = vadd.f32 0.0, %v805
        %v807 = vpop.f32.mrf.mxu0
        %v808 = vadd.f32 0.0, %v807
        %v809 = vpop.f32.mrf.mxu0
        %v810 = vadd.f32 0.0, %v809
        %811 = vmatprep.mubr.bf16.mxu0 0
        %812 = vmatmul.mubr.bf16.gmra.mxu0 %v382
        %v813 = vpop.f32.mrf.mxu0
        %v814 = vadd.f32 0.0, %v813
        %v815 = vpop.f32.mrf.mxu0
        %v816 = vadd.f32 0.0, %v815
        %v817 = vpop.f32.mrf.mxu0
        %v818 = vadd.f32 0.0, %v817
        %v819 = vpop.f32.mrf.mxu0
        %v820 = vadd.f32 0.0, %v819
        %821 = vmatprep.mubr.bf16.mxu0 0
        %822 = vmatmul.mubr.bf16.gmra.mxu0 %v383
        %v823 = vpop.f32.mrf.mxu0
        %v824 = vadd.f32 0.0, %v823
        %v825 = vpop.f32.mrf.mxu0
        %v826 = vadd.f32 0.0, %v825
        %v827 = vpop.f32.mrf.mxu0
        %v828 = vadd.f32 0.0, %v827
        %v829 = vpop.f32.mrf.mxu0
        %v830 = vadd.f32 0.0, %v829
        %831 = vmatprep.mubr.bf16.mxu0 0
        %832 = vmatmul.mubr.bf16.gmra.mxu0 %v384
        %v833 = vpop.f32.mrf.mxu0
        %v834 = vadd.f32 0.0, %v833
        %v835 = vpop.f32.mrf.mxu0
        %v836 = vadd.f32 0.0, %v835
        %v837 = vpop.f32.mrf.mxu0
        %v838 = vadd.f32 0.0, %v837
        %v839 = vpop.f32.mrf.mxu0
        %v840 = vadd.f32 0.0, %v839
        %841 = vmatprep.mubr.bf16.mxu0 0
        %842 = vmatmul.mubr.bf16.gmra.mxu0 %v385
        %v843 = vpop.f32.mrf.mxu0
        %v844 = vadd.f32 0.0, %v843
        %v845 = vpop.f32.mrf.mxu0
        %v846 = vadd.f32 0.0, %v845
        %v847 = vpop.f32.mrf.mxu0
        %v848 = vadd.f32 0.0, %v847
        %v849 = vpop.f32.mrf.mxu0
        %v850 = vadd.f32 0.0, %v849
        %851 = vmatprep.mubr.bf16.mxu0 0
        %852 = vmatmul.mubr.bf16.gmra.mxu0 %v386
        %v853 = vpop.f32.mrf.mxu0
        %v854 = vadd.f32 0.0, %v853
        %v855 = vpop.f32.mrf.mxu0
        %v856 = vadd.f32 0.0, %v855
        %v857 = vpop.f32.mrf.mxu0
        %v858 = vadd.f32 0.0, %v857
        %v859 = vpop.f32.mrf.mxu0
        %v860 = vadd.f32 0.0, %v859
        %861 = vmatprep.mubr.bf16.mxu0 0
        %862 = vmatmul.mubr.bf16.gmra.mxu0 %v387
        %v863 = vpop.f32.mrf.mxu0
        %v864 = vadd.f32 0.0, %v863
        %v865 = vpop.f32.mrf.mxu0
        %v866 = vadd.f32 0.0, %v865
        %v867 = vpop.f32.mrf.mxu0
        %v868 = vadd.f32 0.0, %v867
        %v869 = vpop.f32.mrf.mxu0
        %v870 = vadd.f32 0.0, %v869
        %871 = vmatprep.mubr.bf16.mxu0 0
        %872 = vmatmul.mubr.bf16.gmra.mxu0 %v388
        %v873 = vpop.f32.mrf.mxu0
        %v874 = vadd.f32 0.0, %v873
        %v875 = vpop.f32.mrf.mxu0
        %v876 = vadd.f32 0.0, %v875
        %v877 = vpop.f32.mrf.mxu0
        %v878 = vadd.f32 0.0, %v877
        %v879 = vpop.f32.mrf.mxu0
        %v880 = vadd.f32 0.0, %v879
        %881 = vmatprep.mubr.bf16.mxu0 0
        %882 = vmatmul.mubr.bf16.gmra.mxu0 %v389
        %v883 = vpop.f32.mrf.mxu0
        %v884 = vadd.f32 0.0, %v883
        %v885 = vpop.f32.mrf.mxu0
        %v886 = vadd.f32 0.0, %v885
        %v887 = vpop.f32.mrf.mxu0
        %v888 = vadd.f32 0.0, %v887
        %v889 = vpop.f32.mrf.mxu0
        %v890 = vadd.f32 0.0, %v889
        %891 = vmatprep.mubr.bf16.mxu0 0
        %892 = vmatmul.mubr.bf16.gmra.mxu0 %v390
        %v893 = vpop.f32.mrf.mxu0
        %v894 = vadd.f32 0.0, %v893
        %v895 = vpop.f32.mrf.mxu0
        %v896 = vadd.f32 0.0, %v895
        %v897 = vpop.f32.mrf.mxu0
        %v898 = vadd.f32 0.0, %v897
        %v899 = vpop.f32.mrf.mxu0
        %v900 = vadd.f32 0.0, %v899
        %901 = vmatprep.mubr.bf16.mxu0 0
        %902 = vmatmul.mubr.bf16.gmra.mxu0 %v391
        %v903 = vpop.f32.mrf.mxu0
        %v904 = vadd.f32 0.0, %v903
        %v905 = vpop.f32.mrf.mxu0
        %v906 = vadd.f32 0.0, %v905
        %v907 = vpop.f32.mrf.mxu0
        %v908 = vadd.f32 0.0, %v907
        %v909 = vpop.f32.mrf.mxu0
        %v910 = vadd.f32 0.0, %v909
        %911 = vmatprep.mubr.bf16.mxu0 0
        %912 = vmatmul.mubr.bf16.gmra.mxu0 %v392
        %v913 = vpop.f32.mrf.mxu0
        %v914 = vadd.f32 0.0, %v913
        %v915 = vpop.f32.mrf.mxu0
        %v916 = vadd.f32 0.0, %v915
        %v917 = vpop.f32.mrf.mxu0
        %v918 = vadd.f32 0.0, %v917
        %v919 = vpop.f32.mrf.mxu0
        %v920 = vadd.f32 0.0, %v919
        %921 = vdwg.mxu0
        %922 = vmatprep.subr.bf16.mxu0 %v660
        %923 = vmatpush1.bf16.msra.mxu0 %v659
        %924 = vmatprep.subr.bf16.mxu0 %v652
        %925 = vmatpush1.bf16.msra.mxu0 %v651
        %926 = vmatprep.subr.bf16.mxu0 %v644
        %927 = vmatpush1.bf16.msra.mxu0 %v643
        %928 = vmatprep.subr.bf16.mxu0 %v636
        %929 = vmatpush1.bf16.msra.mxu0 %v635
        %930 = vmatprep.subr.bf16.mxu0 %v628
        %931 = vmatpush1.bf16.msra.mxu0 %v627
        %932 = vmatprep.subr.bf16.mxu0 %v620
        %933 = vmatpush1.bf16.msra.mxu0 %v619
        %934 = vmatprep.subr.bf16.mxu0 %v612
        %935 = vmatpush1.bf16.msra.mxu0 %v611
        %936 = vmatprep.subr.bf16.mxu0 %v604
        %937 = vmatpush1.bf16.msra.mxu0 %v603
        %938 = vmatprep.subr.bf16.mxu0 0
        %939 = vmatpush2.bf16.msra.mxu0 0
        %940 = vmatprep.subr.bf16.mxu0 0
        %941 = vmatpush2.bf16.msra.mxu0 0
        %942 = vmatprep.subr.bf16.mxu0 0
        %943 = vmatpush2.bf16.msra.mxu0 0
        %944 = vmatprep.subr.bf16.mxu0 0
        %945 = vmatpush2.bf16.msra.mxu0 0
        %946 = vmatprep.subr.bf16.mxu0 0
        %947 = vmatpush2.bf16.msra.mxu0 0
        %948 = vmatprep.subr.bf16.mxu0 0
        %949 = vmatpush2.bf16.msra.mxu0 0
        %950 = vmatprep.subr.bf16.mxu0 0
        %951 = vmatpush2.bf16.msra.mxu0 0
        %952 = vmatprep.subr.bf16.mxu0 0
        %953 = vmatpush2.bf16.msra.mxu0 0
        %954 = vmatprep.mubr.bf16.mxu0 0
        %955 = vmatmul.mubr.bf16.gmra.mxu0 %v377
        %v956 = vpop.f32.mrf.mxu0
        %v957 = vadd.f32 0.0, %v956
        %v958 = vpop.f32.mrf.mxu0
        %v959 = vadd.f32 0.0, %v958
        %v960 = vpop.f32.mrf.mxu0
        %v961 = vadd.f32 0.0, %v960
        %v962 = vpop.f32.mrf.mxu0
        %v963 = vadd.f32 0.0, %v962
        %964 = vmatprep.mubr.bf16.mxu0 0
        %965 = vmatmul.mubr.bf16.gmra.mxu0 %v378
        %v966 = vpop.f32.mrf.mxu0
        %v967 = vadd.f32 0.0, %v966
        %v968 = vpop.f32.mrf.mxu0
        %v969 = vadd.f32 0.0, %v968
        %v970 = vpop.f32.mrf.mxu0
        %v971 = vadd.f32 0.0, %v970
        %v972 = vpop.f32.mrf.mxu0
        %v973 = vadd.f32 0.0, %v972
        %974 = vmatprep.mubr.bf16.mxu0 0
        %975 = vmatmul.mubr.bf16.gmra.mxu0 %v379
        %v976 = vpop.f32.mrf.mxu0
        %v977 = vadd.f32 0.0, %v976
        %v978 = vpop.f32.mrf.mxu0
        %v979 = vadd.f32 0.0, %v978
        %v980 = vpop.f32.mrf.mxu0
        %v981 = vadd.f32 0.0, %v980
        %v982 = vpop.f32.mrf.mxu0
        %v983 = vadd.f32 0.0, %v982
        %984 = vmatprep.mubr.bf16.mxu0 0
        %985 = vmatmul.mubr.bf16.gmra.mxu0 %v380
        %v986 = vpop.f32.mrf.mxu0
        %v987 = vadd.f32 0.0, %v986
        %v988 = vpop.f32.mrf.mxu0
        %v989 = vadd.f32 0.0, %v988
        %v990 = vpop.f32.mrf.mxu0
        %v991 = vadd.f32 0.0, %v990
        %v992 = vpop.f32.mrf.mxu0
        %v993 = vadd.f32 0.0, %v992
        %994 = vmatprep.mubr.bf16.mxu0 0
        %995 = vmatmul.mubr.bf16.gmra.mxu0 %v381
        %v996 = vpop.f32.mrf.mxu0
        %v997 = vadd.f32 0.0, %v996
        %v998 = vpop.f32.mrf.mxu0
        %v999 = vadd.f32 0.0, %v998
        %v1000 = vpop.f32.mrf.mxu0
        %v1001 = vadd.f32 0.0, %v1000
        %v1002 = vpop.f32.mrf.mxu0
        %v1003 = vadd.f32 0.0, %v1002
        %1004 = vmatprep.mubr.bf16.mxu0 0
        %1005 = vmatmul.mubr.bf16.gmra.mxu0 %v382
        %v1006 = vpop.f32.mrf.mxu0
        %v1007 = vadd.f32 0.0, %v1006
        %v1008 = vpop.f32.mrf.mxu0
        %v1009 = vadd.f32 0.0, %v1008
        %v1010 = vpop.f32.mrf.mxu0
        %v1011 = vadd.f32 0.0, %v1010
        %v1012 = vpop.f32.mrf.mxu0
        %v1013 = vadd.f32 0.0, %v1012
        %1014 = vmatprep.mubr.bf16.mxu0 0
        %1015 = vmatmul.mubr.bf16.gmra.mxu0 %v383
        %v1016 = vpop.f32.mrf.mxu0
        %v1017 = vadd.f32 0.0, %v1016
        %v1018 = vpop.f32.mrf.mxu0
        %v1019 = vadd.f32 0.0, %v1018
        %v1020 = vpop.f32.mrf.mxu0
        %v1021 = vadd.f32 0.0, %v1020
        %v1022 = vpop.f32.mrf.mxu0
        %v1023 = vadd.f32 0.0, %v1022
        %1024 = vmatprep.mubr.bf16.mxu0 0
        %1025 = vmatmul.mubr.bf16.gmra.mxu0 %v384
        %v1026 = vpop.f32.mrf.mxu0
        %v1027 = vadd.f32 0.0, %v1026
        %v1028 = vpop.f32.mrf.mxu0
        %v1029 = vadd.f32 0.0, %v1028
        %v1030 = vpop.f32.mrf.mxu0
        %v1031 = vadd.f32 0.0, %v1030
        %v1032 = vpop.f32.mrf.mxu0
        %v1033 = vadd.f32 0.0, %v1032
        %1034 = vmatprep.mubr.bf16.mxu0 0
        %1035 = vmatmul.mubr.bf16.gmra.mxu0 %v385
        %v1036 = vpop.f32.mrf.mxu0
        %v1037 = vadd.f32 0.0, %v1036
        %v1038 = vpop.f32.mrf.mxu0
        %v1039 = vadd.f32 0.0, %v1038
        %v1040 = vpop.f32.mrf.mxu0
        %v1041 = vadd.f32 0.0, %v1040
        %v1042 = vpop.f32.mrf.mxu0
        %v1043 = vadd.f32 0.0, %v1042
        %1044 = vmatprep.mubr.bf16.mxu0 0
        %1045 = vmatmul.mubr.bf16.gmra.mxu0 %v386
        %v1046 = vpop.f32.mrf.mxu0
        %v1047 = vadd.f32 0.0, %v1046
        %v1048 = vpop.f32.mrf.mxu0
        %v1049 = vadd.f32 0.0, %v1048
        %v1050 = vpop.f32.mrf.mxu0
        %v1051 = vadd.f32 0.0, %v1050
        %v1052 = vpop.f32.mrf.mxu0
        %v1053 = vadd.f32 0.0, %v1052
        %1054 = vmatprep.mubr.bf16.mxu0 0
        %1055 = vmatmul.mubr.bf16.gmra.mxu0 %v387
        %v1056 = vpop.f32.mrf.mxu0
        %v1057 = vadd.f32 0.0, %v1056
        %v1058 = vpop.f32.mrf.mxu0
        %v1059 = vadd.f32 0.0, %v1058
        %v1060 = vpop.f32.mrf.mxu0
        %v1061 = vadd.f32 0.0, %v1060
        %v1062 = vpop.f32.mrf.mxu0
        %v1063 = vadd.f32 0.0, %v1062
        %1064 = vmatprep.mubr.bf16.mxu0 0
        %1065 = vmatmul.mubr.bf16.gmra.mxu0 %v388
        %v1066 = vpop.f32.mrf.mxu0
        %v1067 = vadd.f32 0.0, %v1066
        %v1068 = vpop.f32.mrf.mxu0
        %v1069 = vadd.f32 0.0, %v1068
        %v1070 = vpop.f32.mrf.mxu0
        %v1071 = vadd.f32 0.0, %v1070
        %v1072 = vpop.f32.mrf.mxu0
        %v1073 = vadd.f32 0.0, %v1072
        %1074 = vmatprep.mubr.bf16.mxu0 0
        %1075 = vmatmul.mubr.bf16.gmra.mxu0 %v389
        %v1076 = vpop.f32.mrf.mxu0
        %v1077 = vadd.f32 0.0, %v1076
        %v1078 = vpop.f32.mrf.mxu0
        %v1079 = vadd.f32 0.0, %v1078
        %v1080 = vpop.f32.mrf.mxu0
        %v1081 = vadd.f32 0.0, %v1080
        %v1082 = vpop.f32.mrf.mxu0
        %v1083 = vadd.f32 0.0, %v1082
        %1084 = vmatprep.mubr.bf16.mxu0 0
        %1085 = vmatmul.mubr.bf16.gmra.mxu0 %v390
        %v1086 = vpop.f32.mrf.mxu0
        %v1087 = vadd.f32 0.0, %v1086
        %v1088 = vpop.f32.mrf.mxu0
        %v1089 = vadd.f32 0.0, %v1088
        %v1090 = vpop.f32.mrf.mxu0
        %v1091 = vadd.f32 0.0, %v1090
        %v1092 = vpop.f32.mrf.mxu0
        %v1093 = vadd.f32 0.0, %v1092
        %1094 = vmatprep.mubr.bf16.mxu0 0
        %1095 = vmatmul.mubr.bf16.gmra.mxu0 %v391
        %v1096 = vpop.f32.mrf.mxu0
        %v1097 = vadd.f32 0.0, %v1096
        %v1098 = vpop.f32.mrf.mxu0
        %v1099 = vadd.f32 0.0, %v1098
        %v1100 = vpop.f32.mrf.mxu0
        %v1101 = vadd.f32 0.0, %v1100
        %v1102 = vpop.f32.mrf.mxu0
        %v1103 = vadd.f32 0.0, %v1102
        %1104 = vmatprep.mubr.bf16.mxu0 0
        %1105 = vmatmul.mubr.bf16.gmra.mxu0 %v392
        %v1106 = vpop.f32.mrf.mxu0
        %v1107 = vadd.f32 0.0, %v1106
        %v1108 = vpop.f32.mrf.mxu0
        %v1109 = vadd.f32 0.0, %v1108
        %v1110 = vpop.f32.mrf.mxu0
        %v1111 = vadd.f32 0.0, %v1110
        %v1112 = vpop.f32.mrf.mxu0
        %v1113 = vadd.f32 0.0, %v1112
        %1114 = vdwg.mxu0
        %1115 = vmatprep.subr.bf16.mxu0 %v662
        %1116 = vmatpush1.bf16.msra.mxu0 %v661
        %1117 = vmatprep.subr.bf16.mxu0 %v654
        %1118 = vmatpush1.bf16.msra.mxu0 %v653
        %1119 = vmatprep.subr.bf16.mxu0 %v646
        %1120 = vmatpush1.bf16.msra.mxu0 %v645
        %1121 = vmatprep.subr.bf16.mxu0 %v638
        %1122 = vmatpush1.bf16.msra.mxu0 %v637
        %1123 = vmatprep.subr.bf16.mxu0 %v630
        %1124 = vmatpush1.bf16.msra.mxu0 %v629
        %1125 = vmatprep.subr.bf16.mxu0 %v622
        %1126 = vmatpush1.bf16.msra.mxu0 %v621
        %1127 = vmatprep.subr.bf16.mxu0 %v614
        %1128 = vmatpush1.bf16.msra.mxu0 %v613
        %1129 = vmatprep.subr.bf16.mxu0 %v606
        %1130 = vmatpush1.bf16.msra.mxu0 %v605
        %1131 = vmatprep.subr.bf16.mxu0 0
        %1132 = vmatpush2.bf16.msra.mxu0 0
        %1133 = vmatprep.subr.bf16.mxu0 0
        %1134 = vmatpush2.bf16.msra.mxu0 0
        %1135 = vmatprep.subr.bf16.mxu0 0
        %1136 = vmatpush2.bf16.msra.mxu0 0
        %1137 = vmatprep.subr.bf16.mxu0 0
        %1138 = vmatpush2.bf16.msra.mxu0 0
        %1139 = vmatprep.subr.bf16.mxu0 0
        %1140 = vmatpush2.bf16.msra.mxu0 0
        %1141 = vmatprep.subr.bf16.mxu0 0
        %1142 = vmatpush2.bf16.msra.mxu0 0
        %1143 = vmatprep.subr.bf16.mxu0 0
        %1144 = vmatpush2.bf16.msra.mxu0 0
        %1145 = vmatprep.subr.bf16.mxu0 0
        %1146 = vmatpush2.bf16.msra.mxu0 0
        %1147 = vmatprep.mubr.bf16.mxu0 0
        %1148 = vmatmul.mubr.bf16.gmra.mxu0 %v377
        %v1149 = vpop.f32.mrf.mxu0
        %v1150 = vadd.f32 0.0, %v1149
        %v1151 = vpop.f32.mrf.mxu0
        %v1152 = vadd.f32 0.0, %v1151
        %v1153 = vpop.f32.mrf.mxu0
        %v1154 = vadd.f32 0.0, %v1153
        %v1155 = vpop.f32.mrf.mxu0
        %v1156 = vadd.f32 0.0, %v1155
        %1157 = vmatprep.mubr.bf16.mxu0 0
        %1158 = vmatmul.mubr.bf16.gmra.mxu0 %v378
        %v1159 = vpop.f32.mrf.mxu0
        %v1160 = vadd.f32 0.0, %v1159
        %v1161 = vpop.f32.mrf.mxu0
        %v1162 = vadd.f32 0.0, %v1161
        %v1163 = vpop.f32.mrf.mxu0
        %v1164 = vadd.f32 0.0, %v1163
        %v1165 = vpop.f32.mrf.mxu0
        %v1166 = vadd.f32 0.0, %v1165
        %1167 = vmatprep.mubr.bf16.mxu0 0
        %1168 = vmatmul.mubr.bf16.gmra.mxu0 %v379
        %v1169 = vpop.f32.mrf.mxu0
        %v1170 = vadd.f32 0.0, %v1169
        %v1171 = vpop.f32.mrf.mxu0
        %v1172 = vadd.f32 0.0, %v1171
        %v1173 = vpop.f32.mrf.mxu0
        %v1174 = vadd.f32 0.0, %v1173
        %v1175 = vpop.f32.mrf.mxu0
        %v1176 = vadd.f32 0.0, %v1175
        %1177 = vmatprep.mubr.bf16.mxu0 0
        %1178 = vmatmul.mubr.bf16.gmra.mxu0 %v380
        %v1179 = vpop.f32.mrf.mxu0
        %v1180 = vadd.f32 0.0, %v1179
        %v1181 = vpop.f32.mrf.mxu0
        %v1182 = vadd.f32 0.0, %v1181
        %v1183 = vpop.f32.mrf.mxu0
        %v1184 = vadd.f32 0.0, %v1183
        %v1185 = vpop.f32.mrf.mxu0
        %v1186 = vadd.f32 0.0, %v1185
        %1187 = vmatprep.mubr.bf16.mxu0 0
        %1188 = vmatmul.mubr.bf16.gmra.mxu0 %v381
        %v1189 = vpop.f32.mrf.mxu0
        %v1190 = vadd.f32 0.0, %v1189
        %v1191 = vpop.f32.mrf.mxu0
        %v1192 = vadd.f32 0.0, %v1191
        %v1193 = vpop.f32.mrf.mxu0
        %v1194 = vadd.f32 0.0, %v1193
        %v1195 = vpop.f32.mrf.mxu0
        %v1196 = vadd.f32 0.0, %v1195
        %1197 = vmatprep.mubr.bf16.mxu0 0
        %1198 = vmatmul.mubr.bf16.gmra.mxu0 %v382
        %v1199 = vpop.f32.mrf.mxu0
        %v1200 = vadd.f32 0.0, %v1199
        %v1201 = vpop.f32.mrf.mxu0
        %v1202 = vadd.f32 0.0, %v1201
        %v1203 = vpop.f32.mrf.mxu0
        %v1204 = vadd.f32 0.0, %v1203
        %v1205 = vpop.f32.mrf.mxu0
        %v1206 = vadd.f32 0.0, %v1205
        %1207 = vmatprep.mubr.bf16.mxu0 0
        %1208 = vmatmul.mubr.bf16.gmra.mxu0 %v383
        %v1209 = vpop.f32.mrf.mxu0
        %v1210 = vadd.f32 0.0, %v1209
        %v1211 = vpop.f32.mrf.mxu0
        %v1212 = vadd.f32 0.0, %v1211
        %v1213 = vpop.f32.mrf.mxu0
        %v1214 = vadd.f32 0.0, %v1213
        %v1215 = vpop.f32.mrf.mxu0
        %v1216 = vadd.f32 0.0, %v1215
        %1217 = vmatprep.mubr.bf16.mxu0 0
        %1218 = vmatmul.mubr.bf16.gmra.mxu0 %v384
        %v1219 = vpop.f32.mrf.mxu0
        %v1220 = vadd.f32 0.0, %v1219
        %v1221 = vpop.f32.mrf.mxu0
        %v1222 = vadd.f32 0.0, %v1221
        %v1223 = vpop.f32.mrf.mxu0
        %v1224 = vadd.f32 0.0, %v1223
        %v1225 = vpop.f32.mrf.mxu0
        %v1226 = vadd.f32 0.0, %v1225
        %1227 = vmatprep.mubr.bf16.mxu0 0
        %1228 = vmatmul.mubr.bf16.gmra.mxu0 %v385
        %v1229 = vpop.f32.mrf.mxu0
        %v1230 = vadd.f32 0.0, %v1229
        %v1231 = vpop.f32.mrf.mxu0
        %v1232 = vadd.f32 0.0, %v1231
        %v1233 = vpop.f32.mrf.mxu0
        %v1234 = vadd.f32 0.0, %v1233
        %v1235 = vpop.f32.mrf.mxu0
        %v1236 = vadd.f32 0.0, %v1235
        %1237 = vmatprep.mubr.bf16.mxu0 0
        %1238 = vmatmul.mubr.bf16.gmra.mxu0 %v386
        %v1239 = vpop.f32.mrf.mxu0
        %v1240 = vadd.f32 0.0, %v1239
        %v1241 = vpop.f32.mrf.mxu0
        %v1242 = vadd.f32 0.0, %v1241
        %v1243 = vpop.f32.mrf.mxu0
        %v1244 = vadd.f32 0.0, %v1243
        %v1245 = vpop.f32.mrf.mxu0
        %v1246 = vadd.f32 0.0, %v1245
        %1247 = vmatprep.mubr.bf16.mxu0 0
        %1248 = vmatmul.mubr.bf16.gmra.mxu0 %v387
        %v1249 = vpop.f32.mrf.mxu0
        %v1250 = vadd.f32 0.0, %v1249
        %v1251 = vpop.f32.mrf.mxu0
        %v1252 = vadd.f32 0.0, %v1251
        %v1253 = vpop.f32.mrf.mxu0
        %v1254 = vadd.f32 0.0, %v1253
        %v1255 = vpop.f32.mrf.mxu0
        %v1256 = vadd.f32 0.0, %v1255
        %1257 = vmatprep.mubr.bf16.mxu0 0
        %1258 = vmatmul.mubr.bf16.gmra.mxu0 %v388
        %v1259 = vpop.f32.mrf.mxu0
        %v1260 = vadd.f32 0.0, %v1259
        %v1261 = vpop.f32.mrf.mxu0
        %v1262 = vadd.f32 0.0, %v1261
        %v1263 = vpop.f32.mrf.mxu0
        %v1264 = vadd.f32 0.0, %v1263
        %v1265 = vpop.f32.mrf.mxu0
        %v1266 = vadd.f32 0.0, %v1265
        %1267 = vmatprep.mubr.bf16.mxu0 0
        %1268 = vmatmul.mubr.bf16.gmra.mxu0 %v389
        %v1269 = vpop.f32.mrf.mxu0
        %v1270 = vadd.f32 0.0, %v1269
        %v1271 = vpop.f32.mrf.mxu0
        %v1272 = vadd.f32 0.0, %v1271
        %v1273 = vpop.f32.mrf.mxu0
        %v1274 = vadd.f32 0.0, %v1273
        %v1275 = vpop.f32.mrf.mxu0
        %v1276 = vadd.f32 0.0, %v1275
        %1277 = vmatprep.mubr.bf16.mxu0 0
        %1278 = vmatmul.mubr.bf16.gmra.mxu0 %v390
        %v1279 = vpop.f32.mrf.mxu0
        %v1280 = vadd.f32 0.0, %v1279
        %v1281 = vpop.f32.mrf.mxu0
        %v1282 = vadd.f32 0.0, %v1281
        %v1283 = vpop.f32.mrf.mxu0
        %v1284 = vadd.f32 0.0, %v1283
        %v1285 = vpop.f32.mrf.mxu0
        %v1286 = vadd.f32 0.0, %v1285
        %1287 = vmatprep.mubr.bf16.mxu0 0
        %1288 = vmatmul.mubr.bf16.gmra.mxu0 %v391
        %v1289 = vpop.f32.mrf.mxu0
        %v1290 = vadd.f32 0.0, %v1289
        %v1291 = vpop.f32.mrf.mxu0
        %v1292 = vadd.f32 0.0, %v1291
        %v1293 = vpop.f32.mrf.mxu0
        %v1294 = vadd.f32 0.0, %v1293
        %v1295 = vpop.f32.mrf.mxu0
        %v1296 = vadd.f32 0.0, %v1295
        %1297 = vmatprep.mubr.bf16.mxu0 0
        %1298 = vmatmul.mubr.bf16.gmra.mxu0 %v392
        %v1299 = vpop.f32.mrf.mxu0
        %v1300 = vadd.f32 0.0, %v1299
        %v1301 = vpop.f32.mrf.mxu0
        %v1302 = vadd.f32 0.0, %v1301
        %v1303 = vpop.f32.mrf.mxu0
        %v1304 = vadd.f32 0.0, %v1303
        %v1305 = vpop.f32.mrf.mxu0
        %v1306 = vadd.f32 0.0, %v1305
        %1307 = vdwg.mxu0
        %1308 = vmatprep.subr.bf16.mxu0 %v664
        %1309 = vmatpush1.bf16.msra.mxu0 %v663
        %1310 = vmatprep.subr.bf16.mxu0 %v656
        %1311 = vmatpush1.bf16.msra.mxu0 %v655
        %1312 = vmatprep.subr.bf16.mxu0 %v648
        %1313 = vmatpush1.bf16.msra.mxu0 %v647
        %1314 = vmatprep.subr.bf16.mxu0 %v640
        %1315 = vmatpush1.bf16.msra.mxu0 %v639
        %1316 = vmatprep.subr.bf16.mxu0 %v632
        %1317 = vmatpush1.bf16.msra.mxu0 %v631
        %1318 = vmatprep.subr.bf16.mxu0 %v624
        %1319 = vmatpush1.bf16.msra.mxu0 %v623
        %1320 = vmatprep.subr.bf16.mxu0 %v616
        %1321 = vmatpush1.bf16.msra.mxu0 %v615
        %1322 = vmatprep.subr.bf16.mxu0 %v608
        %1323 = vmatpush1.bf16.msra.mxu0 %v607
        %1324 = vmatprep.subr.bf16.mxu0 0
        %1325 = vmatpush2.bf16.msra.mxu0 0
        %1326 = vmatprep.subr.bf16.mxu0 0
        %1327 = vmatpush2.bf16.msra.mxu0 0
        %1328 = vmatprep.subr.bf16.mxu0 0
        %1329 = vmatpush2.bf16.msra.mxu0 0
        %1330 = vmatprep.subr.bf16.mxu0 0
        %1331 = vmatpush2.bf16.msra.mxu0 0
        %1332 = vmatprep.subr.bf16.mxu0 0
        %1333 = vmatpush2.bf16.msra.mxu0 0
        %1334 = vmatprep.subr.bf16.mxu0 0
        %1335 = vmatpush2.bf16.msra.mxu0 0
        %1336 = vmatprep.subr.bf16.mxu0 0
        %1337 = vmatpush2.bf16.msra.mxu0 0
        %1338 = vmatprep.subr.bf16.mxu0 0
        %1339 = vmatpush2.bf16.msra.mxu0 0
        %1340 = vmatprep.mubr.bf16.mxu0 0
        %1341 = vmatmul.mubr.bf16.gmra.mxu0 %v377
        %v1342 = vpop.f32.mrf.mxu0
        %v1343 = vadd.f32 0.0, %v1342
        %v1344 = vpop.f32.mrf.mxu0
        %v1345 = vadd.f32 0.0, %v1344
        %v1346 = vpop.f32.mrf.mxu0
        %v1347 = vadd.f32 0.0, %v1346
        %v1348 = vpop.f32.mrf.mxu0
        %v1349 = vadd.f32 0.0, %v1348
        %1350 = vmatprep.mubr.bf16.mxu0 0
        %1351 = vmatmul.mubr.bf16.gmra.mxu0 %v378
        %v1352 = vpop.f32.mrf.mxu0
        %v1353 = vadd.f32 0.0, %v1352
        %v1354 = vpop.f32.mrf.mxu0
        %v1355 = vadd.f32 0.0, %v1354
        %v1356 = vpop.f32.mrf.mxu0
        %v1357 = vadd.f32 0.0, %v1356
        %v1358 = vpop.f32.mrf.mxu0
        %v1359 = vadd.f32 0.0, %v1358
        %1360 = vmatprep.mubr.bf16.mxu0 0
        %1361 = vmatmul.mubr.bf16.gmra.mxu0 %v379
        %v1362 = vpop.f32.mrf.mxu0
        %v1363 = vadd.f32 0.0, %v1362
        %v1364 = vpop.f32.mrf.mxu0
        %v1365 = vadd.f32 0.0, %v1364
        %v1366 = vpop.f32.mrf.mxu0
        %v1367 = vadd.f32 0.0, %v1366
        %v1368 = vpop.f32.mrf.mxu0
        %v1369 = vadd.f32 0.0, %v1368
        %1370 = vmatprep.mubr.bf16.mxu0 0
        %1371 = vmatmul.mubr.bf16.gmra.mxu0 %v380
        %v1372 = vpop.f32.mrf.mxu0
        %v1373 = vadd.f32 0.0, %v1372
        %v1374 = vpop.f32.mrf.mxu0
        %v1375 = vadd.f32 0.0, %v1374
        %v1376 = vpop.f32.mrf.mxu0
        %v1377 = vadd.f32 0.0, %v1376
        %v1378 = vpop.f32.mrf.mxu0
        %v1379 = vadd.f32 0.0, %v1378
        %1380 = vmatprep.mubr.bf16.mxu0 0
        %1381 = vmatmul.mubr.bf16.gmra.mxu0 %v381
        %v1382 = vpop.f32.mrf.mxu0
        %v1383 = vadd.f32 0.0, %v1382
        %v1384 = vpop.f32.mrf.mxu0
        %v1385 = vadd.f32 0.0, %v1384
        %v1386 = vpop.f32.mrf.mxu0
        %v1387 = vadd.f32 0.0, %v1386
        %v1388 = vpop.f32.mrf.mxu0
        %v1389 = vadd.f32 0.0, %v1388
        %1390 = vmatprep.mubr.bf16.mxu0 0
        %1391 = vmatmul.mubr.bf16.gmra.mxu0 %v382
        %v1392 = vpop.f32.mrf.mxu0
        %v1393 = vadd.f32 0.0, %v1392
        %v1394 = vpop.f32.mrf.mxu0
        %v1395 = vadd.f32 0.0, %v1394
        %v1396 = vpop.f32.mrf.mxu0
        %v1397 = vadd.f32 0.0, %v1396
        %v1398 = vpop.f32.mrf.mxu0
        %v1399 = vadd.f32 0.0, %v1398
        %1400 = vmatprep.mubr.bf16.mxu0 0
        %1401 = vmatmul.mubr.bf16.gmra.mxu0 %v383
        %v1402 = vpop.f32.mrf.mxu0
        %v1403 = vadd.f32 0.0, %v1402
        %v1404 = vpop.f32.mrf.mxu0
        %v1405 = vadd.f32 0.0, %v1404
        %v1406 = vpop.f32.mrf.mxu0
        %v1407 = vadd.f32 0.0, %v1406
        %v1408 = vpop.f32.mrf.mxu0
        %v1409 = vadd.f32 0.0, %v1408
        %1410 = vmatprep.mubr.bf16.mxu0 0
        %1411 = vmatmul.mubr.bf16.gmra.mxu0 %v384
        %v1412 = vpop.f32.mrf.mxu0
        %v1413 = vadd.f32 0.0, %v1412
        %v1414 = vpop.f32.mrf.mxu0
        %v1415 = vadd.f32 0.0, %v1414
        %v1416 = vpop.f32.mrf.mxu0
        %v1417 = vadd.f32 0.0, %v1416
        %v1418 = vpop.f32.mrf.mxu0
        %v1419 = vadd.f32 0.0, %v1418
        %1420 = vmatprep.mubr.bf16.mxu0 0
        %1421 = vmatmul.mubr.bf16.gmra.mxu0 %v385
        %v1422 = vpop.f32.mrf.mxu0
        %v1423 = vadd.f32 0.0, %v1422
        %v1424 = vpop.f32.mrf.mxu0
        %v1425 = vadd.f32 0.0, %v1424
        %v1426 = vpop.f32.mrf.mxu0
        %v1427 = vadd.f32 0.0, %v1426
        %v1428 = vpop.f32.mrf.mxu0
        %v1429 = vadd.f32 0.0, %v1428
        %1430 = vmatprep.mubr.bf16.mxu0 0
        %1431 = vmatmul.mubr.bf16.gmra.mxu0 %v386
        %v1432 = vpop.f32.mrf.mxu0
        %v1433 = vadd.f32 0.0, %v1432
        %v1434 = vpop.f32.mrf.mxu0
        %v1435 = vadd.f32 0.0, %v1434
        %v1436 = vpop.f32.mrf.mxu0
        %v1437 = vadd.f32 0.0, %v1436
        %v1438 = vpop.f32.mrf.mxu0
        %v1439 = vadd.f32 0.0, %v1438
        %1440 = vmatprep.mubr.bf16.mxu0 0
        %1441 = vmatmul.mubr.bf16.gmra.mxu0 %v387
        %v1442 = vpop.f32.mrf.mxu0
        %v1443 = vadd.f32 0.0, %v1442
        %v1444 = vpop.f32.mrf.mxu0
        %v1445 = vadd.f32 0.0, %v1444
        %v1446 = vpop.f32.mrf.mxu0
        %v1447 = vadd.f32 0.0, %v1446
        %v1448 = vpop.f32.mrf.mxu0
        %v1449 = vadd.f32 0.0, %v1448
        %1450 = vmatprep.mubr.bf16.mxu0 0
        %1451 = vmatmul.mubr.bf16.gmra.mxu0 %v388
        %v1452 = vpop.f32.mrf.mxu0
        %v1453 = vadd.f32 0.0, %v1452
        %v1454 = vpop.f32.mrf.mxu0
        %v1455 = vadd.f32 0.0, %v1454
        %v1456 = vpop.f32.mrf.mxu0
        %v1457 = vadd.f32 0.0, %v1456
        %v1458 = vpop.f32.mrf.mxu0
        %v1459 = vadd.f32 0.0, %v1458
        %1460 = vmatprep.mubr.bf16.mxu0 0
        %1461 = vmatmul.mubr.bf16.gmra.mxu0 %v389
        %v1462 = vpop.f32.mrf.mxu0
        %v1463 = vadd.f32 0.0, %v1462
        %v1464 = vpop.f32.mrf.mxu0
        %v1465 = vadd.f32 0.0, %v1464
        %v1466 = vpop.f32.mrf.mxu0
        %v1467 = vadd.f32 0.0, %v1466
        %v1468 = vpop.f32.mrf.mxu0
        %v1469 = vadd.f32 0.0, %v1468
        %1470 = vmatprep.mubr.bf16.mxu0 0
        %1471 = vmatmul.mubr.bf16.gmra.mxu0 %v390
        %v1472 = vpop.f32.mrf.mxu0
        %v1473 = vadd.f32 0.0, %v1472
        %v1474 = vpop.f32.mrf.mxu0
        %v1475 = vadd.f32 0.0, %v1474
        %v1476 = vpop.f32.mrf.mxu0
        %v1477 = vadd.f32 0.0, %v1476
        %v1478 = vpop.f32.mrf.mxu0
        %v1479 = vadd.f32 0.0, %v1478
        %1480 = vmatprep.mubr.bf16.mxu0 0
        %1481 = vmatmul.mubr.bf16.gmra.mxu0 %v391
        %v1482 = vpop.f32.mrf.mxu0
        %v1483 = vadd.f32 0.0, %v1482
        %v1484 = vpop.f32.mrf.mxu0
        %v1485 = vadd.f32 0.0, %v1484
        %v1486 = vpop.f32.mrf.mxu0
        %v1487 = vadd.f32 0.0, %v1486
        %v1488 = vpop.f32.mrf.mxu0
        %v1489 = vadd.f32 0.0, %v1488
        %1490 = vmatprep.mubr.bf16.mxu0 0
        %1491 = vmatmul.mubr.bf16.gmra.mxu0 %v392
        %v1492 = vpop.f32.mrf.mxu0
        %v1493 = vadd.f32 0.0, %v1492
        %v1494 = vpop.f32.mrf.mxu0
        %v1495 = vadd.f32 0.0, %v1494
        %v1496 = vpop.f32.mrf.mxu0
        %v1497 = vadd.f32 0.0, %v1496
        %v1498 = vpop.f32.mrf.mxu0
        %v1499 = vadd.f32 0.0, %v1498
        %1500 = vdwg.mxu0
        %1501 = vst [vmem:[#allocation2] sm:$0xff] %v764
        %1502 = vst [vmem:[#allocation2 + $0x8] sm:$0xff] %v766
        %1503 = vst [vmem:[#allocation2 + $0x10] sm:$0xff] %v957
        %1504 = vst [vmem:[#allocation2 + $0x18] sm:$0xff] %v959
        %1505 = vst [vmem:[#allocation2 + $0x20] sm:$0xff] %v1150
        %1506 = vst [vmem:[#allocation2 + $0x28] sm:$0xff] %v1152
        %1507 = vst [vmem:[#allocation2 + $0x30] sm:$0xff] %v1343
        %1508 = vst [vmem:[#allocation2 + $0x38] sm:$0xff] %v1345
        %1509 = vst [vmem:[#allocation2 + $0x40] sm:$0xff] %v768
        %1510 = vst [vmem:[#allocation2 + $0x48] sm:$0xff] %v770
        %1511 = vst [vmem:[#allocation2 + $0x50] sm:$0xff] %v961
        %1512 = vst [vmem:[#allocation2 + $0x58] sm:$0xff] %v963
        %1513 = vst [vmem:[#allocation2 + $0x60] sm:$0xff] %v1154
        %1514 = vst [vmem:[#allocation2 + $0x68] sm:$0xff] %v1156
        %1515 = vst [vmem:[#allocation2 + $0x70] sm:$0xff] %v1347
        %1516 = vst [vmem:[#allocation2 + $0x78] sm:$0xff] %v1349
        %1517 = vst [vmem:[#allocation2 + $0x80] sm:$0xff] %v774
        %1518 = vst [vmem:[#allocation2 + $0x88] sm:$0xff] %v776
        %1519 = vst [vmem:[#allocation2 + $0x90] sm:$0xff] %v967
        %1520 = vst [vmem:[#allocation2 + $0x98] sm:$0xff] %v969
        %1521 = vst [vmem:[#allocation2 + $0xa0] sm:$0xff] %v1160
        %1522 = vst [vmem:[#allocation2 + $0xa8] sm:$0xff] %v1162
        %1523 = vst [vmem:[#allocation2 + $0xb0] sm:$0xff] %v1353
        %1524 = vst [vmem:[#allocation2 + $0xb8] sm:$0xff] %v1355
        %1525 = vst [vmem:[#allocation2 + $0xc0] sm:$0xff] %v778
        %1526 = vst [vmem:[#allocation2 + $0xc8] sm:$0xff] %v780
        %1527 = vst [vmem:[#allocation2 + $0xd0] sm:$0xff] %v971
        %1528 = vst [vmem:[#allocation2 + $0xd8] sm:$0xff] %v973
        %1529 = vst [vmem:[#allocation2 + $0xe0] sm:$0xff] %v1164
        %1530 = vst [vmem:[#allocation2 + $0xe8] sm:$0xff] %v1166
        %1531 = vst [vmem:[#allocation2 + $0xf0] sm:$0xff] %v1357
        %1532 = vst [vmem:[#allocation2 + $0xf8] sm:$0xff] %v1359
        %1533 = vst [vmem:[#allocation2 + $0x100] sm:$0xff] %v784
        %1534 = vst [vmem:[#allocation2 + $0x108] sm:$0xff] %v786
        %1535 = vst [vmem:[#allocation2 + $0x110] sm:$0xff] %v977
        %1536 = vst [vmem:[#allocation2 + $0x118] sm:$0xff] %v979
        %1537 = vst [vmem:[#allocation2 + $0x120] sm:$0xff] %v1170
        %1538 = vst [vmem:[#allocation2 + $0x128] sm:$0xff] %v1172
        %1539 = vst [vmem:[#allocation2 + $0x130] sm:$0xff] %v1363
        %1540 = vst [vmem:[#allocation2 + $0x138] sm:$0xff] %v1365
        %1541 = vst [vmem:[#allocation2 + $0x140] sm:$0xff] %v788
        %1542 = vst [vmem:[#allocation2 + $0x148] sm:$0xff] %v790
        %1543 = vst [vmem:[#allocation2 + $0x150] sm:$0xff] %v981
        %1544 = vst [vmem:[#allocation2 + $0x158] sm:$0xff] %v983
        %1545 = vst [vmem:[#allocation2 + $0x160] sm:$0xff] %v1174
        %1546 = vst [vmem:[#allocation2 + $0x168] sm:$0xff] %v1176
        %1547 = vst [vmem:[#allocation2 + $0x170] sm:$0xff] %v1367
        %1548 = vst [vmem:[#allocation2 + $0x178] sm:$0xff] %v1369
        %1549 = vst [vmem:[#allocation2 + $0x180] sm:$0xff] %v794
        %1550 = vst [vmem:[#allocation2 + $0x188] sm:$0xff] %v796
        %1551 = vst [vmem:[#allocation2 + $0x190] sm:$0xff] %v987
        %1552 = vst [vmem:[#allocation2 + $0x198] sm:$0xff] %v989
        %1553 = vst [vmem:[#allocation2 + $0x1a0] sm:$0xff] %v1180
        %1554 = vst [vmem:[#allocation2 + $0x1a8] sm:$0xff] %v1182
        %1555 = vst [vmem:[#allocation2 + $0x1b0] sm:$0xff] %v1373
        %1556 = vst [vmem:[#allocation2 + $0x1b8] sm:$0xff] %v1375
        %1557 = vst [vmem:[#allocation2 + $0x1c0] sm:$0xff] %v798
        %1558 = vst [vmem:[#allocation2 + $0x1c8] sm:$0xff] %v800
        %1559 = vst [vmem:[#allocation2 + $0x1d0] sm:$0xff] %v991
        %1560 = vst [vmem:[#allocation2 + $0x1d8] sm:$0xff] %v993
        %1561 = vst [vmem:[#allocation2 + $0x1e0] sm:$0xff] %v1184
        %1562 = vst [vmem:[#allocation2 + $0x1e8] sm:$0xff] %v1186
        %1563 = vst [vmem:[#allocation2 + $0x1f0] sm:$0xff] %v1377
        %1564 = vst [vmem:[#allocation2 + $0x1f8] sm:$0xff] %v1379
        %1565 = vst [vmem:[#allocation2 + $0x200] sm:$0xff] %v804
        %1566 = vst [vmem:[#allocation2 + $0x208] sm:$0xff] %v806
        %1567 = vst [vmem:[#allocation2 + $0x210] sm:$0xff] %v997
        %1568 = vst [vmem:[#allocation2 + $0x218] sm:$0xff] %v999
        %1569 = vst [vmem:[#allocation2 + $0x220] sm:$0xff] %v1190
        %1570 = vst [vmem:[#allocation2 + $0x228] sm:$0xff] %v1192
        %1571 = vst [vmem:[#allocation2 + $0x230] sm:$0xff] %v1383
        %1572 = vst [vmem:[#allocation2 + $0x238] sm:$0xff] %v1385
        %1573 = vst [vmem:[#allocation2 + $0x240] sm:$0xff] %v808
        %1574 = vst [vmem:[#allocation2 + $0x248] sm:$0xff] %v810
        %1575 = vst [vmem:[#allocation2 + $0x250] sm:$0xff] %v1001
        %1576 = vst [vmem:[#allocation2 + $0x258] sm:$0xff] %v1003
        %1577 = vst [vmem:[#allocation2 + $0x260] sm:$0xff] %v1194
        %1578 = vst [vmem:[#allocation2 + $0x268] sm:$0xff] %v1196
        %1579 = vst [vmem:[#allocation2 + $0x270] sm:$0xff] %v1387
        %1580 = vst [vmem:[#allocation2 + $0x278] sm:$0xff] %v1389
        %1581 = vst [vmem:[#allocation2 + $0x280] sm:$0xff] %v814
        %1582 = vst [vmem:[#allocation2 + $0x288] sm:$0xff] %v816
        %1583 = vst [vmem:[#allocation2 + $0x290] sm:$0xff] %v1007
        %1584 = vst [vmem:[#allocation2 + $0x298] sm:$0xff] %v1009
        %1585 = vst [vmem:[#allocation2 + $0x2a0] sm:$0xff] %v1200
        %1586 = vst [vmem:[#allocation2 + $0x2a8] sm:$0xff] %v1202
        %1587 = vst [vmem:[#allocation2 + $0x2b0] sm:$0xff] %v1393
        %1588 = vst [vmem:[#allocation2 + $0x2b8] sm:$0xff] %v1395
        %1589 = vst [vmem:[#allocation2 + $0x2c0] sm:$0xff] %v818
        %1590 = vst [vmem:[#allocation2 + $0x2c8] sm:$0xff] %v820
        %1591 = vst [vmem:[#allocation2 + $0x2d0] sm:$0xff] %v1011
        %1592 = vst [vmem:[#allocation2 + $0x2d8] sm:$0xff] %v1013
        %1593 = vst [vmem:[#allocation2 + $0x2e0] sm:$0xff] %v1204
        %1594 = vst [vmem:[#allocation2 + $0x2e8] sm:$0xff] %v1206
        %1595 = vst [vmem:[#allocation2 + $0x2f0] sm:$0xff] %v1397
        %1596 = vst [vmem:[#allocation2 + $0x2f8] sm:$0xff] %v1399
        %1597 = vst [vmem:[#allocation2 + $0x300] sm:$0xff] %v824
        %1598 = vst [vmem:[#allocation2 + $0x308] sm:$0xff] %v826
        %1599 = vst [vmem:[#allocation2 + $0x310] sm:$0xff] %v1017
        %1600 = vst [vmem:[#allocation2 + $0x318] sm:$0xff] %v1019
        %1601 = vst [vmem:[#allocation2 + $0x320] sm:$0xff] %v1210
        %1602 = vst [vmem:[#allocation2 + $0x328] sm:$0xff] %v1212
        %1603 = vst [vmem:[#allocation2 + $0x330] sm:$0xff] %v1403
        %1604 = vst [vmem:[#allocation2 + $0x338] sm:$0xff] %v1405
        %1605 = vst [vmem:[#allocation2 + $0x340] sm:$0xff] %v828
        %1606 = vst [vmem:[#allocation2 + $0x348] sm:$0xff] %v830
        %1607 = vst [vmem:[#allocation2 + $0x350] sm:$0xff] %v1021
        %1608 = vst [vmem:[#allocation2 + $0x358] sm:$0xff] %v1023
        %1609 = vst [vmem:[#allocation2 + $0x360] sm:$0xff] %v1214
        %1610 = vst [vmem:[#allocation2 + $0x368] sm:$0xff] %v1216
        %1611 = vst [vmem:[#allocation2 + $0x370] sm:$0xff] %v1407
        %1612 = vst [vmem:[#allocation2 + $0x378] sm:$0xff] %v1409
        %1613 = vst [vmem:[#allocation2 + $0x380] sm:$0xff] %v834
        %1614 = vst [vmem:[#allocation2 + $0x388] sm:$0xff] %v836
        %1615 = vst [vmem:[#allocation2 + $0x390] sm:$0xff] %v1027
        %1616 = vst [vmem:[#allocation2 + $0x398] sm:$0xff] %v1029
        %1617 = vst [vmem:[#allocation2 + $0x3a0] sm:$0xff] %v1220
        %1618 = vst [vmem:[#allocation2 + $0x3a8] sm:$0xff] %v1222
        %1619 = vst [vmem:[#allocation2 + $0x3b0] sm:$0xff] %v1413
        %1620 = vst [vmem:[#allocation2 + $0x3b8] sm:$0xff] %v1415
        %1621 = vst [vmem:[#allocation2 + $0x3c0] sm:$0xff] %v838
        %1622 = vst [vmem:[#allocation2 + $0x3c8] sm:$0xff] %v840
        %1623 = vst [vmem:[#allocation2 + $0x3d0] sm:$0xff] %v1031
        %1624 = vst [vmem:[#allocation2 + $0x3d8] sm:$0xff] %v1033
        %1625 = vst [vmem:[#allocation2 + $0x3e0] sm:$0xff] %v1224
        %1626 = vst [vmem:[#allocation2 + $0x3e8] sm:$0xff] %v1226
        %1627 = vst [vmem:[#allocation2 + $0x3f0] sm:$0xff] %v1417
        %1628 = vst [vmem:[#allocation2 + $0x3f8] sm:$0xff] %v1419
        %1629 = vst [vmem:[#allocation2 + $0x400] sm:$0xff] %v844
        %1630 = vst [vmem:[#allocation2 + $0x408] sm:$0xff] %v846
        %1631 = vst [vmem:[#allocation2 + $0x410] sm:$0xff] %v1037
        %1632 = vst [vmem:[#allocation2 + $0x418] sm:$0xff] %v1039
        %1633 = vst [vmem:[#allocation2 + $0x420] sm:$0xff] %v1230
        %1634 = vst [vmem:[#allocation2 + $0x428] sm:$0xff] %v1232
        %1635 = vst [vmem:[#allocation2 + $0x430] sm:$0xff] %v1423
        %1636 = vst [vmem:[#allocation2 + $0x438] sm:$0xff] %v1425
        %1637 = vst [vmem:[#allocation2 + $0x440] sm:$0xff] %v848
        %1638 = vst [vmem:[#allocation2 + $0x448] sm:$0xff] %v850
        %1639 = vst [vmem:[#allocation2 + $0x450] sm:$0xff] %v1041
        %1640 = vst [vmem:[#allocation2 + $0x458] sm:$0xff] %v1043
        %1641 = vst [vmem:[#allocation2 + $0x460] sm:$0xff] %v1234
        %1642 = vst [vmem:[#allocation2 + $0x468] sm:$0xff] %v1236
        %1643 = vst [vmem:[#allocation2 + $0x470] sm:$0xff] %v1427
        %1644 = vst [vmem:[#allocation2 + $0x478] sm:$0xff] %v1429
        %1645 = vst [vmem:[#allocation2 + $0x480] sm:$0xff] %v854
        %1646 = vst [vmem:[#allocation2 + $0x488] sm:$0xff] %v856
        %1647 = vst [vmem:[#allocation2 + $0x490] sm:$0xff] %v1047
        %1648 = vst [vmem:[#allocation2 + $0x498] sm:$0xff] %v1049
        %1649 = vst [vmem:[#allocation2 + $0x4a0] sm:$0xff] %v1240
        %1650 = vst [vmem:[#allocation2 + $0x4a8] sm:$0xff] %v1242
        %1651 = vst [vmem:[#allocation2 + $0x4b0] sm:$0xff] %v1433
        %1652 = vst [vmem:[#allocation2 + $0x4b8] sm:$0xff] %v1435
        %1653 = vst [vmem:[#allocation2 + $0x4c0] sm:$0xff] %v858
        %1654 = vst [vmem:[#allocation2 + $0x4c8] sm:$0xff] %v860
        %1655 = vst [vmem:[#allocation2 + $0x4d0] sm:$0xff] %v1051
        %1656 = vst [vmem:[#allocation2 + $0x4d8] sm:$0xff] %v1053
        %1657 = vst [vmem:[#allocation2 + $0x4e0] sm:$0xff] %v1244
        %1658 = vst [vmem:[#allocation2 + $0x4e8] sm:$0xff] %v1246
        %1659 = vst [vmem:[#allocation2 + $0x4f0] sm:$0xff] %v1437
        %1660 = vst [vmem:[#allocation2 + $0x4f8] sm:$0xff] %v1439
        %1661 = vst [vmem:[#allocation2 + $0x500] sm:$0xff] %v864
        %1662 = vst [vmem:[#allocation2 + $0x508] sm:$0xff] %v866
        %1663 = vst [vmem:[#allocation2 + $0x510] sm:$0xff] %v1057
        %1664 = vst [vmem:[#allocation2 + $0x518] sm:$0xff] %v1059
        %1665 = vst [vmem:[#allocation2 + $0x520] sm:$0xff] %v1250
        %1666 = vst [vmem:[#allocation2 + $0x528] sm:$0xff] %v1252
        %1667 = vst [vmem:[#allocation2 + $0x530] sm:$0xff] %v1443
        %1668 = vst [vmem:[#allocation2 + $0x538] sm:$0xff] %v1445
        %1669 = vst [vmem:[#allocation2 + $0x540] sm:$0xff] %v868
        %1670 = vst [vmem:[#allocation2 + $0x548] sm:$0xff] %v870
        %1671 = vst [vmem:[#allocation2 + $0x550] sm:$0xff] %v1061
        %1672 = vst [vmem:[#allocation2 + $0x558] sm:$0xff] %v1063
        %1673 = vst [vmem:[#allocation2 + $0x560] sm:$0xff] %v1254
        %1674 = vst [vmem:[#allocation2 + $0x568] sm:$0xff] %v1256
        %1675 = vst [vmem:[#allocation2 + $0x570] sm:$0xff] %v1447
        %1676 = vst [vmem:[#allocation2 + $0x578] sm:$0xff] %v1449
        %1677 = vst [vmem:[#allocation2 + $0x580] sm:$0xff] %v874
        %1678 = vst [vmem:[#allocation2 + $0x588] sm:$0xff] %v876
        %1679 = vst [vmem:[#allocation2 + $0x590] sm:$0xff] %v1067
        %1680 = vst [vmem:[#allocation2 + $0x598] sm:$0xff] %v1069
        %1681 = vst [vmem:[#allocation2 + $0x5a0] sm:$0xff] %v1260
        %1682 = vst [vmem:[#allocation2 + $0x5a8] sm:$0xff] %v1262
        %1683 = vst [vmem:[#allocation2 + $0x5b0] sm:$0xff] %v1453
        %1684 = vst [vmem:[#allocation2 + $0x5b8] sm:$0xff] %v1455
        %1685 = vst [vmem:[#allocation2 + $0x5c0] sm:$0xff] %v878
        %1686 = vst [vmem:[#allocation2 + $0x5c8] sm:$0xff] %v880
        %1687 = vst [vmem:[#allocation2 + $0x5d0] sm:$0xff] %v1071
        %1688 = vst [vmem:[#allocation2 + $0x5d8] sm:$0xff] %v1073
        %1689 = vst [vmem:[#allocation2 + $0x5e0] sm:$0xff] %v1264
        %1690 = vst [vmem:[#allocation2 + $0x5e8] sm:$0xff] %v1266
        %1691 = vst [vmem:[#allocation2 + $0x5f0] sm:$0xff] %v1457
        %1692 = vst [vmem:[#allocation2 + $0x5f8] sm:$0xff] %v1459
        %1693 = vst [vmem:[#allocation2 + $0x600] sm:$0xff] %v884
        %1694 = vst [vmem:[#allocation2 + $0x608] sm:$0xff] %v886
        %1695 = vst [vmem:[#allocation2 + $0x610] sm:$0xff] %v1077
        %1696 = vst [vmem:[#allocation2 + $0x618] sm:$0xff] %v1079
        %1697 = vst [vmem:[#allocation2 + $0x620] sm:$0xff] %v1270
        %1698 = vst [vmem:[#allocation2 + $0x628] sm:$0xff] %v1272
        %1699 = vst [vmem:[#allocation2 + $0x630] sm:$0xff] %v1463
        %1700 = vst [vmem:[#allocation2 + $0x638] sm:$0xff] %v1465
        %1701 = vst [vmem:[#allocation2 + $0x640] sm:$0xff] %v888
        %1702 = vst [vmem:[#allocation2 + $0x648] sm:$0xff] %v890
        %1703 = vst [vmem:[#allocation2 + $0x650] sm:$0xff] %v1081
        %1704 = vst [vmem:[#allocation2 + $0x658] sm:$0xff] %v1083
        %1705 = vst [vmem:[#allocation2 + $0x660] sm:$0xff] %v1274
        %1706 = vst [vmem:[#allocation2 + $0x668] sm:$0xff] %v1276
        %1707 = vst [vmem:[#allocation2 + $0x670] sm:$0xff] %v1467
        %1708 = vst [vmem:[#allocation2 + $0x678] sm:$0xff] %v1469
        %1709 = vst [vmem:[#allocation2 + $0x680] sm:$0xff] %v894
        %1710 = vst [vmem:[#allocation2 + $0x688] sm:$0xff] %v896
        %1711 = vst [vmem:[#allocation2 + $0x690] sm:$0xff] %v1087
        %1712 = vst [vmem:[#allocation2 + $0x698] sm:$0xff] %v1089
        %1713 = vst [vmem:[#allocation2 + $0x6a0] sm:$0xff] %v1280
        %1714 = vst [vmem:[#allocation2 + $0x6a8] sm:$0xff] %v1282
        %1715 = vst [vmem:[#allocation2 + $0x6b0] sm:$0xff] %v1473
        %1716 = vst [vmem:[#allocation2 + $0x6b8] sm:$0xff] %v1475
        %1717 = vst [vmem:[#allocation2 + $0x6c0] sm:$0xff] %v898
        %1718 = vst [vmem:[#allocation2 + $0x6c8] sm:$0xff] %v900
        %1719 = vst [vmem:[#allocation2 + $0x6d0] sm:$0xff] %v1091
        %1720 = vst [vmem:[#allocation2 + $0x6d8] sm:$0xff] %v1093
        %1721 = vst [vmem:[#allocation2 + $0x6e0] sm:$0xff] %v1284
        %1722 = vst [vmem:[#allocation2 + $0x6e8] sm:$0xff] %v1286
        %1723 = vst [vmem:[#allocation2 + $0x6f0] sm:$0xff] %v1477
        %1724 = vst [vmem:[#allocation2 + $0x6f8] sm:$0xff] %v1479
        %1725 = vst [vmem:[#allocation2 + $0x700] sm:$0xff] %v904
        %1726 = vst [vmem:[#allocation2 + $0x708] sm:$0xff] %v906
        %1727 = vst [vmem:[#allocation2 + $0x710] sm:$0xff] %v1097
        %1728 = vst [vmem:[#allocation2 + $0x718] sm:$0xff] %v1099
        %1729 = vst [vmem:[#allocation2 + $0x720] sm:$0xff] %v1290
        %1730 = vst [vmem:[#allocation2 + $0x728] sm:$0xff] %v1292
        %1731 = vst [vmem:[#allocation2 + $0x730] sm:$0xff] %v1483
        %1732 = vst [vmem:[#allocation2 + $0x738] sm:$0xff] %v1485
        %1733 = vst [vmem:[#allocation2 + $0x740] sm:$0xff] %v908
        %1734 = vst [vmem:[#allocation2 + $0x748] sm:$0xff] %v910
        %1735 = vst [vmem:[#allocation2 + $0x750] sm:$0xff] %v1101
        %1736 = vst [vmem:[#allocation2 + $0x758] sm:$0xff] %v1103
        %1737 = vst [vmem:[#allocation2 + $0x760] sm:$0xff] %v1294
        %1738 = vst [vmem:[#allocation2 + $0x768] sm:$0xff] %v1296
        %1739 = vst [vmem:[#allocation2 + $0x770] sm:$0xff] %v1487
        %1740 = vst [vmem:[#allocation2 + $0x778] sm:$0xff] %v1489
        %1741 = vst [vmem:[#allocation2 + $0x780] sm:$0xff] %v914
        %1742 = vst [vmem:[#allocation2 + $0x788] sm:$0xff] %v916
        %1743 = vst [vmem:[#allocation2 + $0x790] sm:$0xff] %v1107
        %1744 = vst [vmem:[#allocation2 + $0x798] sm:$0xff] %v1109
        %1745 = vst [vmem:[#allocation2 + $0x7a0] sm:$0xff] %v1300
        %1746 = vst [vmem:[#allocation2 + $0x7a8] sm:$0xff] %v1302
        %1747 = vst [vmem:[#allocation2 + $0x7b0] sm:$0xff] %v1493
        %1748 = vst [vmem:[#allocation2 + $0x7b8] sm:$0xff] %v1495
        %1749 = vst [vmem:[#allocation2 + $0x7c0] sm:$0xff] %v918
        %1750 = vst [vmem:[#allocation2 + $0x7c8] sm:$0xff] %v920
        %1751 = vst [vmem:[#allocation2 + $0x7d0] sm:$0xff] %v1111
        %1752 = vst [vmem:[#allocation2 + $0x7d8] sm:$0xff] %v1113
        %1753 = vst [vmem:[#allocation2 + $0x7e0] sm:$0xff] %v1304
        %1754 = vst [vmem:[#allocation2 + $0x7e8] sm:$0xff] %v1306
        %1755 = vst [vmem:[#allocation2 + $0x7f0] sm:$0xff] %v1497
        %1756 = vst [vmem:[#allocation2 + $0x7f8] sm:$0xff] %v1499
        %v1757 = vld [vmem:[#allocation8] sm:$0xff]
        %v1759 = vlaneseq
        %v1760 = vshrl.u32 %v1759, 7
        %v1761 = vsub.s32 0, %v1760
        %v1762 = vrot.slane %v1757, %v1761
        %v1763 = vlaneseq
        %v1764 = vshrl.u32 %v1763, 7
        %v1765 = vsub.s32 1, %v1764
        %v1766 = vrot.slane %v1757, %v1765
        %v1767 = vlaneseq
        %v1768 = vshrl.u32 %v1767, 7
        %v1769 = vsub.s32 2, %v1768
        %v1770 = vrot.slane %v1757, %v1769
        %v1771 = vlaneseq
        %v1772 = vshrl.u32 %v1771, 7
        %v1773 = vsub.s32 3, %v1772
        %v1774 = vrot.slane %v1757, %v1773
        %v1775 = vlaneseq
        %v1776 = vshrl.u32 %v1775, 7
        %v1777 = vsub.s32 4, %v1776
        %v1778 = vrot.slane %v1757, %v1777
        %v1779 = vlaneseq
        %v1780 = vshrl.u32 %v1779, 7
        %v1781 = vsub.s32 5, %v1780
        %v1782 = vrot.slane %v1757, %v1781
        %v1783 = vlaneseq
        %v1784 = vshrl.u32 %v1783, 7
        %v1785 = vsub.s32 6, %v1784
        %v1786 = vrot.slane %v1757, %v1785
        %v1787 = vlaneseq
        %v1788 = vshrl.u32 %v1787, 7
        %v1789 = vsub.s32 7, %v1788
        %v1790 = vrot.slane %v1757, %v1789
        %s1799 = smul.u32 0, 8
        %s1800 = smul.addr %s1799, 8
        %s1801 = scalar_lea.vmem [#allocation2], %s1800
        %v1802 = vld [vmem:[%s1801] sm:$0xff]
        %v1803 = vld [vmem:[%s1801 + $0x8] sm:$0xff]
        %v1804 = vld [vmem:[%s1801 + $0x10] sm:$0xff]
        %v1805 = vld [vmem:[%s1801 + $0x18] sm:$0xff]
        %v1806 = vld [vmem:[%s1801 + $0x20] sm:$0xff]
        %v1807 = vld [vmem:[%s1801 + $0x28] sm:$0xff]
        %v1808 = vld [vmem:[%s1801 + $0x30] sm:$0xff]
        %v1809 = vld [vmem:[%s1801 + $0x38] sm:$0xff]
        %v1810 = vadd.f32 %v1802, %v1762
        %v1811 = vadd.f32 %v1803, %v1766
        %v1812 = vadd.f32 %v1804, %v1770
        %v1813 = vadd.f32 %v1805, %v1774
        %v1814 = vadd.f32 %v1806, %v1778
        %v1815 = vadd.f32 %v1807, %v1782
        %v1816 = vadd.f32 %v1808, %v1786
        %v1817 = vadd.f32 %v1809, %v1790
        %v1818 = vmax.f32 %v1810, 0.0
        %v1819 = vmax.f32 %v1811, 0.0
        %v1820 = vmax.f32 %v1812, 0.0
        %v1821 = vmax.f32 %v1813, 0.0
        %v1822 = vmax.f32 %v1814, 0.0
        %v1823 = vmax.f32 %v1815, 0.0
        %v1824 = vmax.f32 %v1816, 0.0
        %v1825 = vmax.f32 %v1817, 0.0
        %v1826 = vadd.f32 %v1818, 0.0
        %v1827 = vadd.f32 %v1819, 0.0
        %v1828 = vadd.f32 %v1820, 0.0
        %v1829 = vadd.f32 %v1821, 0.0
        %v1830 = vadd.f32 %v1822, 0.0
        %v1831 = vadd.f32 %v1823, 0.0
        %v1832 = vadd.f32 %v1824, 0.0
        %v1833 = vadd.f32 %v1825, 0.0
        %s1834 = smul.u32 1, 8
        %s1835 = smul.addr %s1834, 8
        %s1836 = scalar_lea.vmem [#allocation2], %s1835
        %v1837 = vld [vmem:[%s1836] sm:$0xff]
        %v1838 = vld [vmem:[%s1836 + $0x8] sm:$0xff]
        %v1839 = vld [vmem:[%s1836 + $0x10] sm:$0xff]
        %v1840 = vld [vmem:[%s1836 + $0x18] sm:$0xff]
        %v1841 = vld [vmem:[%s1836 + $0x20] sm:$0xff]
        %v1842 = vld [vmem:[%s1836 + $0x28] sm:$0xff]
        %v1843 = vld [vmem:[%s1836 + $0x30] sm:$0xff]
        %v1844 = vld [vmem:[%s1836 + $0x38] sm:$0xff]
        %v1845 = vadd.f32 %v1837, %v1762
        %v1846 = vadd.f32 %v1838, %v1766
        %v1847 = vadd.f32 %v1839, %v1770
        %v1848 = vadd.f32 %v1840, %v1774
        %v1849 = vadd.f32 %v1841, %v1778
        %v1850 = vadd.f32 %v1842, %v1782
        %v1851 = vadd.f32 %v1843, %v1786
        %v1852 = vadd.f32 %v1844, %v1790
        %v1853 = vmax.f32 %v1845, 0.0
        %v1854 = vmax.f32 %v1846, 0.0
        %v1855 = vmax.f32 %v1847, 0.0
        %v1856 = vmax.f32 %v1848, 0.0
        %v1857 = vmax.f32 %v1849, 0.0
        %v1858 = vmax.f32 %v1850, 0.0
        %v1859 = vmax.f32 %v1851, 0.0
        %v1860 = vmax.f32 %v1852, 0.0
        %v1861 = vadd.f32 %v1826, %v1853
        %v1862 = vadd.f32 %v1827, %v1854
        %v1863 = vadd.f32 %v1828, %v1855
        %v1864 = vadd.f32 %v1829, %v1856
        %v1865 = vadd.f32 %v1830, %v1857
        %v1866 = vadd.f32 %v1831, %v1858
        %v1867 = vadd.f32 %v1832, %v1859
        %v1868 = vadd.f32 %v1833, %v1860
        %s1869 = smul.u32 2, 8
        %s1870 = smul.addr %s1869, 8
        %s1871 = scalar_lea.vmem [#allocation2], %s1870
        %v1872 = vld [vmem:[%s1871] sm:$0xff]
        %v1873 = vld [vmem:[%s1871 + $0x8] sm:$0xff]
        %v1874 = vld [vmem:[%s1871 + $0x10] sm:$0xff]
        %v1875 = vld [vmem:[%s1871 + $0x18] sm:$0xff]
        %v1876 = vld [vmem:[%s1871 + $0x20] sm:$0xff]
        %v1877 = vld [vmem:[%s1871 + $0x28] sm:$0xff]
        %v1878 = vld [vmem:[%s1871 + $0x30] sm:$0xff]
        %v1879 = vld [vmem:[%s1871 + $0x38] sm:$0xff]
        %v1880 = vadd.f32 %v1872, %v1762
        %v1881 = vadd.f32 %v1873, %v1766
        %v1882 = vadd.f32 %v1874, %v1770
        %v1883 = vadd.f32 %v1875, %v1774
        %v1884 = vadd.f32 %v1876, %v1778
        %v1885 = vadd.f32 %v1877, %v1782
        %v1886 = vadd.f32 %v1878, %v1786
        %v1887 = vadd.f32 %v1879, %v1790
        %v1888 = vmax.f32 %v1880, 0.0
        %v1889 = vmax.f32 %v1881, 0.0
        %v1890 = vmax.f32 %v1882, 0.0
        %v1891 = vmax.f32 %v1883, 0.0
        %v1892 = vmax.f32 %v1884, 0.0
        %v1893 = vmax.f32 %v1885, 0.0
        %v1894 = vmax.f32 %v1886, 0.0
        %v1895 = vmax.f32 %v1887, 0.0
        %v1896 = vadd.f32 %v1861, %v1888
        %v1897 = vadd.f32 %v1862, %v1889
        %v1898 = vadd.f32 %v1863, %v1890
        %v1899 = vadd.f32 %v1864, %v1891
        %v1900 = vadd.f32 %v1865, %v1892
        %v1901 = vadd.f32 %v1866, %v1893
        %v1902 = vadd.f32 %v1867, %v1894
        %v1903 = vadd.f32 %v1868, %v1895
        %s1904 = smul.u32 3, 8
        %s1905 = smul.addr %s1904, 8
        %s1906 = scalar_lea.vmem [#allocation2], %s1905
        %v1907 = vld [vmem:[%s1906] sm:$0xff]
        %v1908 = vld [vmem:[%s1906 + $0x8] sm:$0xff]
        %v1909 = vld [vmem:[%s1906 + $0x10] sm:$0xff]
        %v1910 = vld [vmem:[%s1906 + $0x18] sm:$0xff]
        %v1911 = vld [vmem:[%s1906 + $0x20] sm:$0xff]
        %v1912 = vld [vmem:[%s1906 + $0x28] sm:$0xff]
        %v1913 = vld [vmem:[%s1906 + $0x30] sm:$0xff]
        %v1914 = vld [vmem:[%s1906 + $0x38] sm:$0xff]
        %v1915 = vadd.f32 %v1907, %v1762
        %v1916 = vadd.f32 %v1908, %v1766
        %v1917 = vadd.f32 %v1909, %v1770
        %v1918 = vadd.f32 %v1910, %v1774
        %v1919 = vadd.f32 %v1911, %v1778
        %v1920 = vadd.f32 %v1912, %v1782
        %v1921 = vadd.f32 %v1913, %v1786
        %v1922 = vadd.f32 %v1914, %v1790
        %v1923 = vmax.f32 %v1915, 0.0
        %v1924 = vmax.f32 %v1916, 0.0
        %v1925 = vmax.f32 %v1917, 0.0
        %v1926 = vmax.f32 %v1918, 0.0
        %v1927 = vmax.f32 %v1919, 0.0
        %v1928 = vmax.f32 %v1920, 0.0
        %v1929 = vmax.f32 %v1921, 0.0
        %v1930 = vmax.f32 %v1922, 0.0
        %v1931 = vadd.f32 %v1896, %v1923
        %v1932 = vadd.f32 %v1897, %v1924
        %v1933 = vadd.f32 %v1898, %v1925
        %v1934 = vadd.f32 %v1899, %v1926
        %v1935 = vadd.f32 %v1900, %v1927
        %v1936 = vadd.f32 %v1901, %v1928
        %v1937 = vadd.f32 %v1902, %v1929
        %v1938 = vadd.f32 %v1903, %v1930
        %s1939 = smul.u32 4, 8
        %s1940 = smul.addr %s1939, 8
        %s1941 = scalar_lea.vmem [#allocation2], %s1940
        %v1942 = vld [vmem:[%s1941] sm:$0xff]
        %v1943 = vld [vmem:[%s1941 + $0x8] sm:$0xff]
        %v1944 = vld [vmem:[%s1941 + $0x10] sm:$0xff]
        %v1945 = vld [vmem:[%s1941 + $0x18] sm:$0xff]
        %v1946 = vld [vmem:[%s1941 + $0x20] sm:$0xff]
        %v1947 = vld [vmem:[%s1941 + $0x28] sm:$0xff]
        %v1948 = vld [vmem:[%s1941 + $0x30] sm:$0xff]
        %v1949 = vld [vmem:[%s1941 + $0x38] sm:$0xff]
        %v1950 = vadd.f32 %v1942, %v1762
        %v1951 = vadd.f32 %v1943, %v1766
        %v1952 = vadd.f32 %v1944, %v1770
        %v1953 = vadd.f32 %v1945, %v1774
        %v1954 = vadd.f32 %v1946, %v1778
        %v1955 = vadd.f32 %v1947, %v1782
        %v1956 = vadd.f32 %v1948, %v1786
        %v1957 = vadd.f32 %v1949, %v1790
        %v1958 = vmax.f32 %v1950, 0.0
        %v1959 = vmax.f32 %v1951, 0.0
        %v1960 = vmax.f32 %v1952, 0.0
        %v1961 = vmax.f32 %v1953, 0.0
        %v1962 = vmax.f32 %v1954, 0.0
        %v1963 = vmax.f32 %v1955, 0.0
        %v1964 = vmax.f32 %v1956, 0.0
        %v1965 = vmax.f32 %v1957, 0.0
        %v1966 = vadd.f32 %v1931, %v1958
        %v1967 = vadd.f32 %v1932, %v1959
        %v1968 = vadd.f32 %v1933, %v1960
        %v1969 = vadd.f32 %v1934, %v1961
        %v1970 = vadd.f32 %v1935, %v1962
        %v1971 = vadd.f32 %v1936, %v1963
        %v1972 = vadd.f32 %v1937, %v1964
        %v1973 = vadd.f32 %v1938, %v1965
        %s1974 = smul.u32 5, 8
        %s1975 = smul.addr %s1974, 8
        %s1976 = scalar_lea.vmem [#allocation2], %s1975
        %v1977 = vld [vmem:[%s1976] sm:$0xff]
        %v1978 = vld [vmem:[%s1976 + $0x8] sm:$0xff]
        %v1979 = vld [vmem:[%s1976 + $0x10] sm:$0xff]
        %v1980 = vld [vmem:[%s1976 + $0x18] sm:$0xff]
        %v1981 = vld [vmem:[%s1976 + $0x20] sm:$0xff]
        %v1982 = vld [vmem:[%s1976 + $0x28] sm:$0xff]
        %v1983 = vld [vmem:[%s1976 + $0x30] sm:$0xff]
        %v1984 = vld [vmem:[%s1976 + $0x38] sm:$0xff]
        %v1985 = vadd.f32 %v1977, %v1762
        %v1986 = vadd.f32 %v1978, %v1766
        %v1987 = vadd.f32 %v1979, %v1770
        %v1988 = vadd.f32 %v1980, %v1774
        %v1989 = vadd.f32 %v1981, %v1778
        %v1990 = vadd.f32 %v1982, %v1782
        %v1991 = vadd.f32 %v1983, %v1786
        %v1992 = vadd.f32 %v1984, %v1790
        %v1993 = vmax.f32 %v1985, 0.0
        %v1994 = vmax.f32 %v1986, 0.0
        %v1995 = vmax.f32 %v1987, 0.0
        %v1996 = vmax.f32 %v1988, 0.0
        %v1997 = vmax.f32 %v1989, 0.0
        %v1998 = vmax.f32 %v1990, 0.0
        %v1999 = vmax.f32 %v1991, 0.0
        %v2000 = vmax.f32 %v1992, 0.0
        %v2001 = vadd.f32 %v1966, %v1993
        %v2002 = vadd.f32 %v1967, %v1994
        %v2003 = vadd.f32 %v1968, %v1995
        %v2004 = vadd.f32 %v1969, %v1996
        %v2005 = vadd.f32 %v1970, %v1997
        %v2006 = vadd.f32 %v1971, %v1998
        %v2007 = vadd.f32 %v1972, %v1999
        %v2008 = vadd.f32 %v1973, %v2000
        %s2009 = smul.u32 6, 8
        %s2010 = smul.addr %s2009, 8
        %s2011 = scalar_lea.vmem [#allocation2], %s2010
        %v2012 = vld [vmem:[%s2011] sm:$0xff]
        %v2013 = vld [vmem:[%s2011 + $0x8] sm:$0xff]
        %v2014 = vld [vmem:[%s2011 + $0x10] sm:$0xff]
        %v2015 = vld [vmem:[%s2011 + $0x18] sm:$0xff]
        %v2016 = vld [vmem:[%s2011 + $0x20] sm:$0xff]
        %v2017 = vld [vmem:[%s2011 + $0x28] sm:$0xff]
        %v2018 = vld [vmem:[%s2011 + $0x30] sm:$0xff]
        %v2019 = vld [vmem:[%s2011 + $0x38] sm:$0xff]
        %v2020 = vadd.f32 %v2012, %v1762
        %v2021 = vadd.f32 %v2013, %v1766
        %v2022 = vadd.f32 %v2014, %v1770
        %v2023 = vadd.f32 %v2015, %v1774
        %v2024 = vadd.f32 %v2016, %v1778
        %v2025 = vadd.f32 %v2017, %v1782
        %v2026 = vadd.f32 %v2018, %v1786
        %v2027 = vadd.f32 %v2019, %v1790
        %v2028 = vmax.f32 %v2020, 0.0
        %v2029 = vmax.f32 %v2021, 0.0
        %v2030 = vmax.f32 %v2022, 0.0
        %v2031 = vmax.f32 %v2023, 0.0
        %v2032 = vmax.f32 %v2024, 0.0
        %v2033 = vmax.f32 %v2025, 0.0
        %v2034 = vmax.f32 %v2026, 0.0
        %v2035 = vmax.f32 %v2027, 0.0
        %v2036 = vadd.f32 %v2001, %v2028
        %v2037 = vadd.f32 %v2002, %v2029
        %v2038 = vadd.f32 %v2003, %v2030
        %v2039 = vadd.f32 %v2004, %v2031
        %v2040 = vadd.f32 %v2005, %v2032
        %v2041 = vadd.f32 %v2006, %v2033
        %v2042 = vadd.f32 %v2007, %v2034
        %v2043 = vadd.f32 %v2008, %v2035
        %s2044 = smul.u32 7, 8
        %s2045 = smul.addr %s2044, 8
        %s2046 = scalar_lea.vmem [#allocation2], %s2045
        %v2047 = vld [vmem:[%s2046] sm:$0xff]
        %v2048 = vld [vmem:[%s2046 + $0x8] sm:$0xff]
        %v2049 = vld [vmem:[%s2046 + $0x10] sm:$0xff]
        %v2050 = vld [vmem:[%s2046 + $0x18] sm:$0xff]
        %v2051 = vld [vmem:[%s2046 + $0x20] sm:$0xff]
        %v2052 = vld [vmem:[%s2046 + $0x28] sm:$0xff]
        %v2053 = vld [vmem:[%s2046 + $0x30] sm:$0xff]
        %v2054 = vld [vmem:[%s2046 + $0x38] sm:$0xff]
        %v2055 = vadd.f32 %v2047, %v1762
        %v2056 = vadd.f32 %v2048, %v1766
        %v2057 = vadd.f32 %v2049, %v1770
        %v2058 = vadd.f32 %v2050, %v1774
        %v2059 = vadd.f32 %v2051, %v1778
        %v2060 = vadd.f32 %v2052, %v1782
        %v2061 = vadd.f32 %v2053, %v1786
        %v2062 = vadd.f32 %v2054, %v1790
        %v2063 = vmax.f32 %v2055, 0.0
        %v2064 = vmax.f32 %v2056, 0.0
        %v2065 = vmax.f32 %v2057, 0.0
        %v2066 = vmax.f32 %v2058, 0.0
        %v2067 = vmax.f32 %v2059, 0.0
        %v2068 = vmax.f32 %v2060, 0.0
        %v2069 = vmax.f32 %v2061, 0.0
        %v2070 = vmax.f32 %v2062, 0.0
        %v2071 = vadd.f32 %v2036, %v2063
        %v2072 = vadd.f32 %v2037, %v2064
        %v2073 = vadd.f32 %v2038, %v2065
        %v2074 = vadd.f32 %v2039, %v2066
        %v2075 = vadd.f32 %v2040, %v2067
        %v2076 = vadd.f32 %v2041, %v2068
        %v2077 = vadd.f32 %v2042, %v2069
        %v2078 = vadd.f32 %v2043, %v2070
        %s2079 = smul.u32 8, 8
        %s2080 = smul.addr %s2079, 8
        %s2081 = scalar_lea.vmem [#allocation2], %s2080
        %v2082 = vld [vmem:[%s2081] sm:$0xff]
        %v2083 = vld [vmem:[%s2081 + $0x8] sm:$0xff]
        %v2084 = vld [vmem:[%s2081 + $0x10] sm:$0xff]
        %v2085 = vld [vmem:[%s2081 + $0x18] sm:$0xff]
        %v2086 = vld [vmem:[%s2081 + $0x20] sm:$0xff]
        %v2087 = vld [vmem:[%s2081 + $0x28] sm:$0xff]
        %v2088 = vld [vmem:[%s2081 + $0x30] sm:$0xff]
        %v2089 = vld [vmem:[%s2081 + $0x38] sm:$0xff]
        %v2090 = vadd.f32 %v2082, %v1762
        %v2091 = vadd.f32 %v2083, %v1766
        %v2092 = vadd.f32 %v2084, %v1770
        %v2093 = vadd.f32 %v2085, %v1774
        %v2094 = vadd.f32 %v2086, %v1778
        %v2095 = vadd.f32 %v2087, %v1782
        %v2096 = vadd.f32 %v2088, %v1786
        %v2097 = vadd.f32 %v2089, %v1790
        %v2098 = vmax.f32 %v2090, 0.0
        %v2099 = vmax.f32 %v2091, 0.0
        %v2100 = vmax.f32 %v2092, 0.0
        %v2101 = vmax.f32 %v2093, 0.0
        %v2102 = vmax.f32 %v2094, 0.0
        %v2103 = vmax.f32 %v2095, 0.0
        %v2104 = vmax.f32 %v2096, 0.0
        %v2105 = vmax.f32 %v2097, 0.0
        %v2106 = vadd.f32 %v2071, %v2098
        %v2107 = vadd.f32 %v2072, %v2099
        %v2108 = vadd.f32 %v2073, %v2100
        %v2109 = vadd.f32 %v2074, %v2101
        %v2110 = vadd.f32 %v2075, %v2102
        %v2111 = vadd.f32 %v2076, %v2103
        %v2112 = vadd.f32 %v2077, %v2104
        %v2113 = vadd.f32 %v2078, %v2105
        %s2114 = smul.u32 9, 8
        %s2115 = smul.addr %s2114, 8
        %s2116 = scalar_lea.vmem [#allocation2], %s2115
        %v2117 = vld [vmem:[%s2116] sm:$0xff]
        %v2118 = vld [vmem:[%s2116 + $0x8] sm:$0xff]
        %v2119 = vld [vmem:[%s2116 + $0x10] sm:$0xff]
        %v2120 = vld [vmem:[%s2116 + $0x18] sm:$0xff]
        %v2121 = vld [vmem:[%s2116 + $0x20] sm:$0xff]
        %v2122 = vld [vmem:[%s2116 + $0x28] sm:$0xff]
        %v2123 = vld [vmem:[%s2116 + $0x30] sm:$0xff]
        %v2124 = vld [vmem:[%s2116 + $0x38] sm:$0xff]
        %v2125 = vadd.f32 %v2117, %v1762
        %v2126 = vadd.f32 %v2118, %v1766
        %v2127 = vadd.f32 %v2119, %v1770
        %v2128 = vadd.f32 %v2120, %v1774
        %v2129 = vadd.f32 %v2121, %v1778
        %v2130 = vadd.f32 %v2122, %v1782
        %v2131 = vadd.f32 %v2123, %v1786
        %v2132 = vadd.f32 %v2124, %v1790
        %v2133 = vmax.f32 %v2125, 0.0
        %v2134 = vmax.f32 %v2126, 0.0
        %v2135 = vmax.f32 %v2127, 0.0
        %v2136 = vmax.f32 %v2128, 0.0
        %v2137 = vmax.f32 %v2129, 0.0
        %v2138 = vmax.f32 %v2130, 0.0
        %v2139 = vmax.f32 %v2131, 0.0
        %v2140 = vmax.f32 %v2132, 0.0
        %v2141 = vadd.f32 %v2106, %v2133
        %v2142 = vadd.f32 %v2107, %v2134
        %v2143 = vadd.f32 %v2108, %v2135
        %v2144 = vadd.f32 %v2109, %v2136
        %v2145 = vadd.f32 %v2110, %v2137
        %v2146 = vadd.f32 %v2111, %v2138
        %v2147 = vadd.f32 %v2112, %v2139
        %v2148 = vadd.f32 %v2113, %v2140
        %s2149 = smul.u32 10, 8
        %s2150 = smul.addr %s2149, 8
        %s2151 = scalar_lea.vmem [#allocation2], %s2150
        %v2152 = vld [vmem:[%s2151] sm:$0xff]
        %v2153 = vld [vmem:[%s2151 + $0x8] sm:$0xff]
        %v2154 = vld [vmem:[%s2151 + $0x10] sm:$0xff]
        %v2155 = vld [vmem:[%s2151 + $0x18] sm:$0xff]
        %v2156 = vld [vmem:[%s2151 + $0x20] sm:$0xff]
        %v2157 = vld [vmem:[%s2151 + $0x28] sm:$0xff]
        %v2158 = vld [vmem:[%s2151 + $0x30] sm:$0xff]
        %v2159 = vld [vmem:[%s2151 + $0x38] sm:$0xff]
        %v2160 = vadd.f32 %v2152, %v1762
        %v2161 = vadd.f32 %v2153, %v1766
        %v2162 = vadd.f32 %v2154, %v1770
        %v2163 = vadd.f32 %v2155, %v1774
        %v2164 = vadd.f32 %v2156, %v1778
        %v2165 = vadd.f32 %v2157, %v1782
        %v2166 = vadd.f32 %v2158, %v1786
        %v2167 = vadd.f32 %v2159, %v1790
        %v2168 = vmax.f32 %v2160, 0.0
        %v2169 = vmax.f32 %v2161, 0.0
        %v2170 = vmax.f32 %v2162, 0.0
        %v2171 = vmax.f32 %v2163, 0.0
        %v2172 = vmax.f32 %v2164, 0.0
        %v2173 = vmax.f32 %v2165, 0.0
        %v2174 = vmax.f32 %v2166, 0.0
        %v2175 = vmax.f32 %v2167, 0.0
        %v2176 = vadd.f32 %v2141, %v2168
        %v2177 = vadd.f32 %v2142, %v2169
        %v2178 = vadd.f32 %v2143, %v2170
        %v2179 = vadd.f32 %v2144, %v2171
        %v2180 = vadd.f32 %v2145, %v2172
        %v2181 = vadd.f32 %v2146, %v2173
        %v2182 = vadd.f32 %v2147, %v2174
        %v2183 = vadd.f32 %v2148, %v2175
        %s2184 = smul.u32 11, 8
        %s2185 = smul.addr %s2184, 8
        %s2186 = scalar_lea.vmem [#allocation2], %s2185
        %v2187 = vld [vmem:[%s2186] sm:$0xff]
        %v2188 = vld [vmem:[%s2186 + $0x8] sm:$0xff]
        %v2189 = vld [vmem:[%s2186 + $0x10] sm:$0xff]
        %v2190 = vld [vmem:[%s2186 + $0x18] sm:$0xff]
        %v2191 = vld [vmem:[%s2186 + $0x20] sm:$0xff]
        %v2192 = vld [vmem:[%s2186 + $0x28] sm:$0xff]
        %v2193 = vld [vmem:[%s2186 + $0x30] sm:$0xff]
        %v2194 = vld [vmem:[%s2186 + $0x38] sm:$0xff]
        %v2195 = vadd.f32 %v2187, %v1762
        %v2196 = vadd.f32 %v2188, %v1766
        %v2197 = vadd.f32 %v2189, %v1770
        %v2198 = vadd.f32 %v2190, %v1774
        %v2199 = vadd.f32 %v2191, %v1778
        %v2200 = vadd.f32 %v2192, %v1782
        %v2201 = vadd.f32 %v2193, %v1786
        %v2202 = vadd.f32 %v2194, %v1790
        %v2203 = vmax.f32 %v2195, 0.0
        %v2204 = vmax.f32 %v2196, 0.0
        %v2205 = vmax.f32 %v2197, 0.0
        %v2206 = vmax.f32 %v2198, 0.0
        %v2207 = vmax.f32 %v2199, 0.0
        %v2208 = vmax.f32 %v2200, 0.0
        %v2209 = vmax.f32 %v2201, 0.0
        %v2210 = vmax.f32 %v2202, 0.0
        %v2211 = vadd.f32 %v2176, %v2203
        %v2212 = vadd.f32 %v2177, %v2204
        %v2213 = vadd.f32 %v2178, %v2205
        %v2214 = vadd.f32 %v2179, %v2206
        %v2215 = vadd.f32 %v2180, %v2207
        %v2216 = vadd.f32 %v2181, %v2208
        %v2217 = vadd.f32 %v2182, %v2209
        %v2218 = vadd.f32 %v2183, %v2210
        %s2219 = smul.u32 12, 8
        %s2220 = smul.addr %s2219, 8
        %s2221 = scalar_lea.vmem [#allocation2], %s2220
        %v2222 = vld [vmem:[%s2221] sm:$0xff]
        %v2223 = vld [vmem:[%s2221 + $0x8] sm:$0xff]
        %v2224 = vld [vmem:[%s2221 + $0x10] sm:$0xff]
        %v2225 = vld [vmem:[%s2221 + $0x18] sm:$0xff]
        %v2226 = vld [vmem:[%s2221 + $0x20] sm:$0xff]
        %v2227 = vld [vmem:[%s2221 + $0x28] sm:$0xff]
        %v2228 = vld [vmem:[%s2221 + $0x30] sm:$0xff]
        %v2229 = vld [vmem:[%s2221 + $0x38] sm:$0xff]
        %v2230 = vadd.f32 %v2222, %v1762
        %v2231 = vadd.f32 %v2223, %v1766
        %v2232 = vadd.f32 %v2224, %v1770
        %v2233 = vadd.f32 %v2225, %v1774
        %v2234 = vadd.f32 %v2226, %v1778
        %v2235 = vadd.f32 %v2227, %v1782
        %v2236 = vadd.f32 %v2228, %v1786
        %v2237 = vadd.f32 %v2229, %v1790
        %v2238 = vmax.f32 %v2230, 0.0
        %v2239 = vmax.f32 %v2231, 0.0
        %v2240 = vmax.f32 %v2232, 0.0
        %v2241 = vmax.f32 %v2233, 0.0
        %v2242 = vmax.f32 %v2234, 0.0
        %v2243 = vmax.f32 %v2235, 0.0
        %v2244 = vmax.f32 %v2236, 0.0
        %v2245 = vmax.f32 %v2237, 0.0
        %v2246 = vadd.f32 %v2211, %v2238
        %v2247 = vadd.f32 %v2212, %v2239
        %v2248 = vadd.f32 %v2213, %v2240
        %v2249 = vadd.f32 %v2214, %v2241
        %v2250 = vadd.f32 %v2215, %v2242
        %v2251 = vadd.f32 %v2216, %v2243
        %v2252 = vadd.f32 %v2217, %v2244
        %v2253 = vadd.f32 %v2218, %v2245
        %s2254 = smul.u32 13, 8
        %s2255 = smul.addr %s2254, 8
        %s2256 = scalar_lea.vmem [#allocation2], %s2255
        %v2257 = vld [vmem:[%s2256] sm:$0xff]
        %v2258 = vld [vmem:[%s2256 + $0x8] sm:$0xff]
        %v2259 = vld [vmem:[%s2256 + $0x10] sm:$0xff]
        %v2260 = vld [vmem:[%s2256 + $0x18] sm:$0xff]
        %v2261 = vld [vmem:[%s2256 + $0x20] sm:$0xff]
        %v2262 = vld [vmem:[%s2256 + $0x28] sm:$0xff]
        %v2263 = vld [vmem:[%s2256 + $0x30] sm:$0xff]
        %v2264 = vld [vmem:[%s2256 + $0x38] sm:$0xff]
        %v2265 = vadd.f32 %v2257, %v1762
        %v2266 = vadd.f32 %v2258, %v1766
        %v2267 = vadd.f32 %v2259, %v1770
        %v2268 = vadd.f32 %v2260, %v1774
        %v2269 = vadd.f32 %v2261, %v1778
        %v2270 = vadd.f32 %v2262, %v1782
        %v2271 = vadd.f32 %v2263, %v1786
        %v2272 = vadd.f32 %v2264, %v1790
        %v2273 = vmax.f32 %v2265, 0.0
        %v2274 = vmax.f32 %v2266, 0.0
        %v2275 = vmax.f32 %v2267, 0.0
        %v2276 = vmax.f32 %v2268, 0.0
        %v2277 = vmax.f32 %v2269, 0.0
        %v2278 = vmax.f32 %v2270, 0.0
        %v2279 = vmax.f32 %v2271, 0.0
        %v2280 = vmax.f32 %v2272, 0.0
        %v2281 = vadd.f32 %v2246, %v2273
        %v2282 = vadd.f32 %v2247, %v2274
        %v2283 = vadd.f32 %v2248, %v2275
        %v2284 = vadd.f32 %v2249, %v2276
        %v2285 = vadd.f32 %v2250, %v2277
        %v2286 = vadd.f32 %v2251, %v2278
        %v2287 = vadd.f32 %v2252, %v2279
        %v2288 = vadd.f32 %v2253, %v2280
        %s2289 = smul.u32 14, 8
        %s2290 = smul.addr %s2289, 8
        %s2291 = scalar_lea.vmem [#allocation2], %s2290
        %v2292 = vld [vmem:[%s2291] sm:$0xff]
        %v2293 = vld [vmem:[%s2291 + $0x8] sm:$0xff]
        %v2294 = vld [vmem:[%s2291 + $0x10] sm:$0xff]
        %v2295 = vld [vmem:[%s2291 + $0x18] sm:$0xff]
        %v2296 = vld [vmem:[%s2291 + $0x20] sm:$0xff]
        %v2297 = vld [vmem:[%s2291 + $0x28] sm:$0xff]
        %v2298 = vld [vmem:[%s2291 + $0x30] sm:$0xff]
        %v2299 = vld [vmem:[%s2291 + $0x38] sm:$0xff]
        %v2300 = vadd.f32 %v2292, %v1762
        %v2301 = vadd.f32 %v2293, %v1766
        %v2302 = vadd.f32 %v2294, %v1770
        %v2303 = vadd.f32 %v2295, %v1774
        %v2304 = vadd.f32 %v2296, %v1778
        %v2305 = vadd.f32 %v2297, %v1782
        %v2306 = vadd.f32 %v2298, %v1786
        %v2307 = vadd.f32 %v2299, %v1790
        %v2308 = vmax.f32 %v2300, 0.0
        %v2309 = vmax.f32 %v2301, 0.0
        %v2310 = vmax.f32 %v2302, 0.0
        %v2311 = vmax.f32 %v2303, 0.0
        %v2312 = vmax.f32 %v2304, 0.0
        %v2313 = vmax.f32 %v2305, 0.0
        %v2314 = vmax.f32 %v2306, 0.0
        %v2315 = vmax.f32 %v2307, 0.0
        %v2316 = vadd.f32 %v2281, %v2308
        %v2317 = vadd.f32 %v2282, %v2309
        %v2318 = vadd.f32 %v2283, %v2310
        %v2319 = vadd.f32 %v2284, %v2311
        %v2320 = vadd.f32 %v2285, %v2312
        %v2321 = vadd.f32 %v2286, %v2313
        %v2322 = vadd.f32 %v2287, %v2314
        %v2323 = vadd.f32 %v2288, %v2315
        %s2324 = smul.u32 15, 8
        %s2325 = smul.addr %s2324, 8
        %s2326 = scalar_lea.vmem [#allocation2], %s2325
        %v2327 = vld [vmem:[%s2326] sm:$0xff]
        %v2328 = vld [vmem:[%s2326 + $0x8] sm:$0xff]
        %v2329 = vld [vmem:[%s2326 + $0x10] sm:$0xff]
        %v2330 = vld [vmem:[%s2326 + $0x18] sm:$0xff]
        %v2331 = vld [vmem:[%s2326 + $0x20] sm:$0xff]
        %v2332 = vld [vmem:[%s2326 + $0x28] sm:$0xff]
        %v2333 = vld [vmem:[%s2326 + $0x30] sm:$0xff]
        %v2334 = vld [vmem:[%s2326 + $0x38] sm:$0xff]
        %v2335 = vadd.f32 %v2327, %v1762
        %v2336 = vadd.f32 %v2328, %v1766
        %v2337 = vadd.f32 %v2329, %v1770
        %v2338 = vadd.f32 %v2330, %v1774
        %v2339 = vadd.f32 %v2331, %v1778
        %v2340 = vadd.f32 %v2332, %v1782
        %v2341 = vadd.f32 %v2333, %v1786
        %v2342 = vadd.f32 %v2334, %v1790
        %v2343 = vmax.f32 %v2335, 0.0
        %v2344 = vmax.f32 %v2336, 0.0
        %v2345 = vmax.f32 %v2337, 0.0
        %v2346 = vmax.f32 %v2338, 0.0
        %v2347 = vmax.f32 %v2339, 0.0
        %v2348 = vmax.f32 %v2340, 0.0
        %v2349 = vmax.f32 %v2341, 0.0
        %v2350 = vmax.f32 %v2342, 0.0
        %v2351 = vadd.f32 %v2316, %v2343
        %v2352 = vadd.f32 %v2317, %v2344
        %v2353 = vadd.f32 %v2318, %v2345
        %v2354 = vadd.f32 %v2319, %v2346
        %v2355 = vadd.f32 %v2320, %v2347
        %v2356 = vadd.f32 %v2321, %v2348
        %v2357 = vadd.f32 %v2322, %v2349
        %v2358 = vadd.f32 %v2323, %v2350
        %s2359 = smul.u32 16, 8
        %s2360 = smul.addr %s2359, 8
        %s2361 = scalar_lea.vmem [#allocation2], %s2360
        %v2362 = vld [vmem:[%s2361] sm:$0xff]
        %v2363 = vld [vmem:[%s2361 + $0x8] sm:$0xff]
        %v2364 = vld [vmem:[%s2361 + $0x10] sm:$0xff]
        %v2365 = vld [vmem:[%s2361 + $0x18] sm:$0xff]
        %v2366 = vld [vmem:[%s2361 + $0x20] sm:$0xff]
        %v2367 = vld [vmem:[%s2361 + $0x28] sm:$0xff]
        %v2368 = vld [vmem:[%s2361 + $0x30] sm:$0xff]
        %v2369 = vld [vmem:[%s2361 + $0x38] sm:$0xff]
        %v2370 = vadd.f32 %v2362, %v1762
        %v2371 = vadd.f32 %v2363, %v1766
        %v2372 = vadd.f32 %v2364, %v1770
        %v2373 = vadd.f32 %v2365, %v1774
        %v2374 = vadd.f32 %v2366, %v1778
        %v2375 = vadd.f32 %v2367, %v1782
        %v2376 = vadd.f32 %v2368, %v1786
        %v2377 = vadd.f32 %v2369, %v1790
        %v2378 = vmax.f32 %v2370, 0.0
        %v2379 = vmax.f32 %v2371, 0.0
        %v2380 = vmax.f32 %v2372, 0.0
        %v2381 = vmax.f32 %v2373, 0.0
        %v2382 = vmax.f32 %v2374, 0.0
        %v2383 = vmax.f32 %v2375, 0.0
        %v2384 = vmax.f32 %v2376, 0.0
        %v2385 = vmax.f32 %v2377, 0.0
        %v2386 = vadd.f32 %v2351, %v2378
        %v2387 = vadd.f32 %v2352, %v2379
        %v2388 = vadd.f32 %v2353, %v2380
        %v2389 = vadd.f32 %v2354, %v2381
        %v2390 = vadd.f32 %v2355, %v2382
        %v2391 = vadd.f32 %v2356, %v2383
        %v2392 = vadd.f32 %v2357, %v2384
        %v2393 = vadd.f32 %v2358, %v2385
        %s2394 = smul.u32 17, 8
        %s2395 = smul.addr %s2394, 8
        %s2396 = scalar_lea.vmem [#allocation2], %s2395
        %v2397 = vld [vmem:[%s2396] sm:$0xff]
        %v2398 = vld [vmem:[%s2396 + $0x8] sm:$0xff]
        %v2399 = vld [vmem:[%s2396 + $0x10] sm:$0xff]
        %v2400 = vld [vmem:[%s2396 + $0x18] sm:$0xff]
        %v2401 = vld [vmem:[%s2396 + $0x20] sm:$0xff]
        %v2402 = vld [vmem:[%s2396 + $0x28] sm:$0xff]
        %v2403 = vld [vmem:[%s2396 + $0x30] sm:$0xff]
        %v2404 = vld [vmem:[%s2396 + $0x38] sm:$0xff]
        %v2405 = vadd.f32 %v2397, %v1762
        %v2406 = vadd.f32 %v2398, %v1766
        %v2407 = vadd.f32 %v2399, %v1770
        %v2408 = vadd.f32 %v2400, %v1774
        %v2409 = vadd.f32 %v2401, %v1778
        %v2410 = vadd.f32 %v2402, %v1782
        %v2411 = vadd.f32 %v2403, %v1786
        %v2412 = vadd.f32 %v2404, %v1790
        %v2413 = vmax.f32 %v2405, 0.0
        %v2414 = vmax.f32 %v2406, 0.0
        %v2415 = vmax.f32 %v2407, 0.0
        %v2416 = vmax.f32 %v2408, 0.0
        %v2417 = vmax.f32 %v2409, 0.0
        %v2418 = vmax.f32 %v2410, 0.0
        %v2419 = vmax.f32 %v2411, 0.0
        %v2420 = vmax.f32 %v2412, 0.0
        %v2421 = vadd.f32 %v2386, %v2413
        %v2422 = vadd.f32 %v2387, %v2414
        %v2423 = vadd.f32 %v2388, %v2415
        %v2424 = vadd.f32 %v2389, %v2416
        %v2425 = vadd.f32 %v2390, %v2417
        %v2426 = vadd.f32 %v2391, %v2418
        %v2427 = vadd.f32 %v2392, %v2419
        %v2428 = vadd.f32 %v2393, %v2420
        %s2429 = smul.u32 18, 8
        %s2430 = smul.addr %s2429, 8
        %s2431 = scalar_lea.vmem [#allocation2], %s2430
        %v2432 = vld [vmem:[%s2431] sm:$0xff]
        %v2433 = vld [vmem:[%s2431 + $0x8] sm:$0xff]
        %v2434 = vld [vmem:[%s2431 + $0x10] sm:$0xff]
        %v2435 = vld [vmem:[%s2431 + $0x18] sm:$0xff]
        %v2436 = vld [vmem:[%s2431 + $0x20] sm:$0xff]
        %v2437 = vld [vmem:[%s2431 + $0x28] sm:$0xff]
        %v2438 = vld [vmem:[%s2431 + $0x30] sm:$0xff]
        %v2439 = vld [vmem:[%s2431 + $0x38] sm:$0xff]
        %v2440 = vadd.f32 %v2432, %v1762
        %v2441 = vadd.f32 %v2433, %v1766
        %v2442 = vadd.f32 %v2434, %v1770
        %v2443 = vadd.f32 %v2435, %v1774
        %v2444 = vadd.f32 %v2436, %v1778
        %v2445 = vadd.f32 %v2437, %v1782
        %v2446 = vadd.f32 %v2438, %v1786
        %v2447 = vadd.f32 %v2439, %v1790
        %v2448 = vmax.f32 %v2440, 0.0
        %v2449 = vmax.f32 %v2441, 0.0
        %v2450 = vmax.f32 %v2442, 0.0
        %v2451 = vmax.f32 %v2443, 0.0
        %v2452 = vmax.f32 %v2444, 0.0
        %v2453 = vmax.f32 %v2445, 0.0
        %v2454 = vmax.f32 %v2446, 0.0
        %v2455 = vmax.f32 %v2447, 0.0
        %v2456 = vadd.f32 %v2421, %v2448
        %v2457 = vadd.f32 %v2422, %v2449
        %v2458 = vadd.f32 %v2423, %v2450
        %v2459 = vadd.f32 %v2424, %v2451
        %v2460 = vadd.f32 %v2425, %v2452
        %v2461 = vadd.f32 %v2426, %v2453
        %v2462 = vadd.f32 %v2427, %v2454
        %v2463 = vadd.f32 %v2428, %v2455
        %s2464 = smul.u32 19, 8
        %s2465 = smul.addr %s2464, 8
        %s2466 = scalar_lea.vmem [#allocation2], %s2465
        %v2467 = vld [vmem:[%s2466] sm:$0xff]
        %v2468 = vld [vmem:[%s2466 + $0x8] sm:$0xff]
        %v2469 = vld [vmem:[%s2466 + $0x10] sm:$0xff]
        %v2470 = vld [vmem:[%s2466 + $0x18] sm:$0xff]
        %v2471 = vld [vmem:[%s2466 + $0x20] sm:$0xff]
        %v2472 = vld [vmem:[%s2466 + $0x28] sm:$0xff]
        %v2473 = vld [vmem:[%s2466 + $0x30] sm:$0xff]
        %v2474 = vld [vmem:[%s2466 + $0x38] sm:$0xff]
        %v2475 = vadd.f32 %v2467, %v1762
        %v2476 = vadd.f32 %v2468, %v1766
        %v2477 = vadd.f32 %v2469, %v1770
        %v2478 = vadd.f32 %v2470, %v1774
        %v2479 = vadd.f32 %v2471, %v1778
        %v2480 = vadd.f32 %v2472, %v1782
        %v2481 = vadd.f32 %v2473, %v1786
        %v2482 = vadd.f32 %v2474, %v1790
        %v2483 = vmax.f32 %v2475, 0.0
        %v2484 = vmax.f32 %v2476, 0.0
        %v2485 = vmax.f32 %v2477, 0.0
        %v2486 = vmax.f32 %v2478, 0.0
        %v2487 = vmax.f32 %v2479, 0.0
        %v2488 = vmax.f32 %v2480, 0.0
        %v2489 = vmax.f32 %v2481, 0.0
        %v2490 = vmax.f32 %v2482, 0.0
        %v2491 = vadd.f32 %v2456, %v2483
        %v2492 = vadd.f32 %v2457, %v2484
        %v2493 = vadd.f32 %v2458, %v2485
        %v2494 = vadd.f32 %v2459, %v2486
        %v2495 = vadd.f32 %v2460, %v2487
        %v2496 = vadd.f32 %v2461, %v2488
        %v2497 = vadd.f32 %v2462, %v2489
        %v2498 = vadd.f32 %v2463, %v2490
        %s2499 = smul.u32 20, 8
        %s2500 = smul.addr %s2499, 8
        %s2501 = scalar_lea.vmem [#allocation2], %s2500
        %v2502 = vld [vmem:[%s2501] sm:$0xff]
        %v2503 = vld [vmem:[%s2501 + $0x8] sm:$0xff]
        %v2504 = vld [vmem:[%s2501 + $0x10] sm:$0xff]
        %v2505 = vld [vmem:[%s2501 + $0x18] sm:$0xff]
        %v2506 = vld [vmem:[%s2501 + $0x20] sm:$0xff]
        %v2507 = vld [vmem:[%s2501 + $0x28] sm:$0xff]
        %v2508 = vld [vmem:[%s2501 + $0x30] sm:$0xff]
        %v2509 = vld [vmem:[%s2501 + $0x38] sm:$0xff]
        %v2510 = vadd.f32 %v2502, %v1762
        %v2511 = vadd.f32 %v2503, %v1766
        %v2512 = vadd.f32 %v2504, %v1770
        %v2513 = vadd.f32 %v2505, %v1774
        %v2514 = vadd.f32 %v2506, %v1778
        %v2515 = vadd.f32 %v2507, %v1782
        %v2516 = vadd.f32 %v2508, %v1786
        %v2517 = vadd.f32 %v2509, %v1790
        %v2518 = vmax.f32 %v2510, 0.0
        %v2519 = vmax.f32 %v2511, 0.0
        %v2520 = vmax.f32 %v2512, 0.0
        %v2521 = vmax.f32 %v2513, 0.0
        %v2522 = vmax.f32 %v2514, 0.0
        %v2523 = vmax.f32 %v2515, 0.0
        %v2524 = vmax.f32 %v2516, 0.0
        %v2525 = vmax.f32 %v2517, 0.0
        %v2526 = vadd.f32 %v2491, %v2518
        %v2527 = vadd.f32 %v2492, %v2519
        %v2528 = vadd.f32 %v2493, %v2520
        %v2529 = vadd.f32 %v2494, %v2521
        %v2530 = vadd.f32 %v2495, %v2522
        %v2531 = vadd.f32 %v2496, %v2523
        %v2532 = vadd.f32 %v2497, %v2524
        %v2533 = vadd.f32 %v2498, %v2525
        %s2534 = smul.u32 21, 8
        %s2535 = smul.addr %s2534, 8
        %s2536 = scalar_lea.vmem [#allocation2], %s2535
        %v2537 = vld [vmem:[%s2536] sm:$0xff]
        %v2538 = vld [vmem:[%s2536 + $0x8] sm:$0xff]
        %v2539 = vld [vmem:[%s2536 + $0x10] sm:$0xff]
        %v2540 = vld [vmem:[%s2536 + $0x18] sm:$0xff]
        %v2541 = vld [vmem:[%s2536 + $0x20] sm:$0xff]
        %v2542 = vld [vmem:[%s2536 + $0x28] sm:$0xff]
        %v2543 = vld [vmem:[%s2536 + $0x30] sm:$0xff]
        %v2544 = vld [vmem:[%s2536 + $0x38] sm:$0xff]
        %v2545 = vadd.f32 %v2537, %v1762
        %v2546 = vadd.f32 %v2538, %v1766
        %v2547 = vadd.f32 %v2539, %v1770
        %v2548 = vadd.f32 %v2540, %v1774
        %v2549 = vadd.f32 %v2541, %v1778
        %v2550 = vadd.f32 %v2542, %v1782
        %v2551 = vadd.f32 %v2543, %v1786
        %v2552 = vadd.f32 %v2544, %v1790
        %v2553 = vmax.f32 %v2545, 0.0
        %v2554 = vmax.f32 %v2546, 0.0
        %v2555 = vmax.f32 %v2547, 0.0
        %v2556 = vmax.f32 %v2548, 0.0
        %v2557 = vmax.f32 %v2549, 0.0
        %v2558 = vmax.f32 %v2550, 0.0
        %v2559 = vmax.f32 %v2551, 0.0
        %v2560 = vmax.f32 %v2552, 0.0
        %v2561 = vadd.f32 %v2526, %v2553
        %v2562 = vadd.f32 %v2527, %v2554
        %v2563 = vadd.f32 %v2528, %v2555
        %v2564 = vadd.f32 %v2529, %v2556
        %v2565 = vadd.f32 %v2530, %v2557
        %v2566 = vadd.f32 %v2531, %v2558
        %v2567 = vadd.f32 %v2532, %v2559
        %v2568 = vadd.f32 %v2533, %v2560
        %s2569 = smul.u32 22, 8
        %s2570 = smul.addr %s2569, 8
        %s2571 = scalar_lea.vmem [#allocation2], %s2570
        %v2572 = vld [vmem:[%s2571] sm:$0xff]
        %v2573 = vld [vmem:[%s2571 + $0x8] sm:$0xff]
        %v2574 = vld [vmem:[%s2571 + $0x10] sm:$0xff]
        %v2575 = vld [vmem:[%s2571 + $0x18] sm:$0xff]
        %v2576 = vld [vmem:[%s2571 + $0x20] sm:$0xff]
        %v2577 = vld [vmem:[%s2571 + $0x28] sm:$0xff]
        %v2578 = vld [vmem:[%s2571 + $0x30] sm:$0xff]
        %v2579 = vld [vmem:[%s2571 + $0x38] sm:$0xff]
        %v2580 = vadd.f32 %v2572, %v1762
        %v2581 = vadd.f32 %v2573, %v1766
        %v2582 = vadd.f32 %v2574, %v1770
        %v2583 = vadd.f32 %v2575, %v1774
        %v2584 = vadd.f32 %v2576, %v1778
        %v2585 = vadd.f32 %v2577, %v1782
        %v2586 = vadd.f32 %v2578, %v1786
        %v2587 = vadd.f32 %v2579, %v1790
        %v2588 = vmax.f32 %v2580, 0.0
        %v2589 = vmax.f32 %v2581, 0.0
        %v2590 = vmax.f32 %v2582, 0.0
        %v2591 = vmax.f32 %v2583, 0.0
        %v2592 = vmax.f32 %v2584, 0.0
        %v2593 = vmax.f32 %v2585, 0.0
        %v2594 = vmax.f32 %v2586, 0.0
        %v2595 = vmax.f32 %v2587, 0.0
        %v2596 = vadd.f32 %v2561, %v2588
        %v2597 = vadd.f32 %v2562, %v2589
        %v2598 = vadd.f32 %v2563, %v2590
        %v2599 = vadd.f32 %v2564, %v2591
        %v2600 = vadd.f32 %v2565, %v2592
        %v2601 = vadd.f32 %v2566, %v2593
        %v2602 = vadd.f32 %v2567, %v2594
        %v2603 = vadd.f32 %v2568, %v2595
        %s2604 = smul.u32 23, 8
        %s2605 = smul.addr %s2604, 8
        %s2606 = scalar_lea.vmem [#allocation2], %s2605
        %v2607 = vld [vmem:[%s2606] sm:$0xff]
        %v2608 = vld [vmem:[%s2606 + $0x8] sm:$0xff]
        %v2609 = vld [vmem:[%s2606 + $0x10] sm:$0xff]
        %v2610 = vld [vmem:[%s2606 + $0x18] sm:$0xff]
        %v2611 = vld [vmem:[%s2606 + $0x20] sm:$0xff]
        %v2612 = vld [vmem:[%s2606 + $0x28] sm:$0xff]
        %v2613 = vld [vmem:[%s2606 + $0x30] sm:$0xff]
        %v2614 = vld [vmem:[%s2606 + $0x38] sm:$0xff]
        %v2615 = vadd.f32 %v2607, %v1762
        %v2616 = vadd.f32 %v2608, %v1766
        %v2617 = vadd.f32 %v2609, %v1770
        %v2618 = vadd.f32 %v2610, %v1774
        %v2619 = vadd.f32 %v2611, %v1778
        %v2620 = vadd.f32 %v2612, %v1782
        %v2621 = vadd.f32 %v2613, %v1786
        %v2622 = vadd.f32 %v2614, %v1790
        %v2623 = vmax.f32 %v2615, 0.0
        %v2624 = vmax.f32 %v2616, 0.0
        %v2625 = vmax.f32 %v2617, 0.0
        %v2626 = vmax.f32 %v2618, 0.0
        %v2627 = vmax.f32 %v2619, 0.0
        %v2628 = vmax.f32 %v2620, 0.0
        %v2629 = vmax.f32 %v2621, 0.0
        %v2630 = vmax.f32 %v2622, 0.0
        %v2631 = vadd.f32 %v2596, %v2623
        %v2632 = vadd.f32 %v2597, %v2624
        %v2633 = vadd.f32 %v2598, %v2625
        %v2634 = vadd.f32 %v2599, %v2626
        %v2635 = vadd.f32 %v2600, %v2627
        %v2636 = vadd.f32 %v2601, %v2628
        %v2637 = vadd.f32 %v2602, %v2629
        %v2638 = vadd.f32 %v2603, %v2630
        %s2639 = smul.u32 24, 8
        %s2640 = smul.addr %s2639, 8
        %s2641 = scalar_lea.vmem [#allocation2], %s2640
        %v2642 = vld [vmem:[%s2641] sm:$0xff]
        %v2643 = vld [vmem:[%s2641 + $0x8] sm:$0xff]
        %v2644 = vld [vmem:[%s2641 + $0x10] sm:$0xff]
        %v2645 = vld [vmem:[%s2641 + $0x18] sm:$0xff]
        %v2646 = vld [vmem:[%s2641 + $0x20] sm:$0xff]
        %v2647 = vld [vmem:[%s2641 + $0x28] sm:$0xff]
        %v2648 = vld [vmem:[%s2641 + $0x30] sm:$0xff]
        %v2649 = vld [vmem:[%s2641 + $0x38] sm:$0xff]
        %v2650 = vadd.f32 %v2642, %v1762
        %v2651 = vadd.f32 %v2643, %v1766
        %v2652 = vadd.f32 %v2644, %v1770
        %v2653 = vadd.f32 %v2645, %v1774
        %v2654 = vadd.f32 %v2646, %v1778
        %v2655 = vadd.f32 %v2647, %v1782
        %v2656 = vadd.f32 %v2648, %v1786
        %v2657 = vadd.f32 %v2649, %v1790
        %v2658 = vmax.f32 %v2650, 0.0
        %v2659 = vmax.f32 %v2651, 0.0
        %v2660 = vmax.f32 %v2652, 0.0
        %v2661 = vmax.f32 %v2653, 0.0
        %v2662 = vmax.f32 %v2654, 0.0
        %v2663 = vmax.f32 %v2655, 0.0
        %v2664 = vmax.f32 %v2656, 0.0
        %v2665 = vmax.f32 %v2657, 0.0
        %v2666 = vadd.f32 %v2631, %v2658
        %v2667 = vadd.f32 %v2632, %v2659
        %v2668 = vadd.f32 %v2633, %v2660
        %v2669 = vadd.f32 %v2634, %v2661
        %v2670 = vadd.f32 %v2635, %v2662
        %v2671 = vadd.f32 %v2636, %v2663
        %v2672 = vadd.f32 %v2637, %v2664
        %v2673 = vadd.f32 %v2638, %v2665
        %s2674 = smul.u32 25, 8
        %s2675 = smul.addr %s2674, 8
        %s2676 = scalar_lea.vmem [#allocation2], %s2675
        %v2677 = vld [vmem:[%s2676] sm:$0xff]
        %v2678 = vld [vmem:[%s2676 + $0x8] sm:$0xff]
        %v2679 = vld [vmem:[%s2676 + $0x10] sm:$0xff]
        %v2680 = vld [vmem:[%s2676 + $0x18] sm:$0xff]
        %v2681 = vld [vmem:[%s2676 + $0x20] sm:$0xff]
        %v2682 = vld [vmem:[%s2676 + $0x28] sm:$0xff]
        %v2683 = vld [vmem:[%s2676 + $0x30] sm:$0xff]
        %v2684 = vld [vmem:[%s2676 + $0x38] sm:$0xff]
        %v2685 = vadd.f32 %v2677, %v1762
        %v2686 = vadd.f32 %v2678, %v1766
        %v2687 = vadd.f32 %v2679, %v1770
        %v2688 = vadd.f32 %v2680, %v1774
        %v2689 = vadd.f32 %v2681, %v1778
        %v2690 = vadd.f32 %v2682, %v1782
        %v2691 = vadd.f32 %v2683, %v1786
        %v2692 = vadd.f32 %v2684, %v1790
        %v2693 = vmax.f32 %v2685, 0.0
        %v2694 = vmax.f32 %v2686, 0.0
        %v2695 = vmax.f32 %v2687, 0.0
        %v2696 = vmax.f32 %v2688, 0.0
        %v2697 = vmax.f32 %v2689, 0.0
        %v2698 = vmax.f32 %v2690, 0.0
        %v2699 = vmax.f32 %v2691, 0.0
        %v2700 = vmax.f32 %v2692, 0.0
        %v2701 = vadd.f32 %v2666, %v2693
        %v2702 = vadd.f32 %v2667, %v2694
        %v2703 = vadd.f32 %v2668, %v2695
        %v2704 = vadd.f32 %v2669, %v2696
        %v2705 = vadd.f32 %v2670, %v2697
        %v2706 = vadd.f32 %v2671, %v2698
        %v2707 = vadd.f32 %v2672, %v2699
        %v2708 = vadd.f32 %v2673, %v2700
        %s2709 = smul.u32 26, 8
        %s2710 = smul.addr %s2709, 8
        %s2711 = scalar_lea.vmem [#allocation2], %s2710
        %v2712 = vld [vmem:[%s2711] sm:$0xff]
        %v2713 = vld [vmem:[%s2711 + $0x8] sm:$0xff]
        %v2714 = vld [vmem:[%s2711 + $0x10] sm:$0xff]
        %v2715 = vld [vmem:[%s2711 + $0x18] sm:$0xff]
        %v2716 = vld [vmem:[%s2711 + $0x20] sm:$0xff]
        %v2717 = vld [vmem:[%s2711 + $0x28] sm:$0xff]
        %v2718 = vld [vmem:[%s2711 + $0x30] sm:$0xff]
        %v2719 = vld [vmem:[%s2711 + $0x38] sm:$0xff]
        %v2720 = vadd.f32 %v2712, %v1762
        %v2721 = vadd.f32 %v2713, %v1766
        %v2722 = vadd.f32 %v2714, %v1770
        %v2723 = vadd.f32 %v2715, %v1774
        %v2724 = vadd.f32 %v2716, %v1778
        %v2725 = vadd.f32 %v2717, %v1782
        %v2726 = vadd.f32 %v2718, %v1786
        %v2727 = vadd.f32 %v2719, %v1790
        %v2728 = vmax.f32 %v2720, 0.0
        %v2729 = vmax.f32 %v2721, 0.0
        %v2730 = vmax.f32 %v2722, 0.0
        %v2731 = vmax.f32 %v2723, 0.0
        %v2732 = vmax.f32 %v2724, 0.0
        %v2733 = vmax.f32 %v2725, 0.0
        %v2734 = vmax.f32 %v2726, 0.0
        %v2735 = vmax.f32 %v2727, 0.0
        %v2736 = vadd.f32 %v2701, %v2728
        %v2737 = vadd.f32 %v2702, %v2729
        %v2738 = vadd.f32 %v2703, %v2730
        %v2739 = vadd.f32 %v2704, %v2731
        %v2740 = vadd.f32 %v2705, %v2732
        %v2741 = vadd.f32 %v2706, %v2733
        %v2742 = vadd.f32 %v2707, %v2734
        %v2743 = vadd.f32 %v2708, %v2735
        %s2744 = smul.u32 27, 8
        %s2745 = smul.addr %s2744, 8
        %s2746 = scalar_lea.vmem [#allocation2], %s2745
        %v2747 = vld [vmem:[%s2746] sm:$0xff]
        %v2748 = vld [vmem:[%s2746 + $0x8] sm:$0xff]
        %v2749 = vld [vmem:[%s2746 + $0x10] sm:$0xff]
        %v2750 = vld [vmem:[%s2746 + $0x18] sm:$0xff]
        %v2751 = vld [vmem:[%s2746 + $0x20] sm:$0xff]
        %v2752 = vld [vmem:[%s2746 + $0x28] sm:$0xff]
        %v2753 = vld [vmem:[%s2746 + $0x30] sm:$0xff]
        %v2754 = vld [vmem:[%s2746 + $0x38] sm:$0xff]
        %v2755 = vadd.f32 %v2747, %v1762
        %v2756 = vadd.f32 %v2748, %v1766
        %v2757 = vadd.f32 %v2749, %v1770
        %v2758 = vadd.f32 %v2750, %v1774
        %v2759 = vadd.f32 %v2751, %v1778
        %v2760 = vadd.f32 %v2752, %v1782
        %v2761 = vadd.f32 %v2753, %v1786
        %v2762 = vadd.f32 %v2754, %v1790
        %v2763 = vmax.f32 %v2755, 0.0
        %v2764 = vmax.f32 %v2756, 0.0
        %v2765 = vmax.f32 %v2757, 0.0
        %v2766 = vmax.f32 %v2758, 0.0
        %v2767 = vmax.f32 %v2759, 0.0
        %v2768 = vmax.f32 %v2760, 0.0
        %v2769 = vmax.f32 %v2761, 0.0
        %v2770 = vmax.f32 %v2762, 0.0
        %v2771 = vadd.f32 %v2736, %v2763
        %v2772 = vadd.f32 %v2737, %v2764
        %v2773 = vadd.f32 %v2738, %v2765
        %v2774 = vadd.f32 %v2739, %v2766
        %v2775 = vadd.f32 %v2740, %v2767
        %v2776 = vadd.f32 %v2741, %v2768
        %v2777 = vadd.f32 %v2742, %v2769
        %v2778 = vadd.f32 %v2743, %v2770
        %s2779 = smul.u32 28, 8
        %s2780 = smul.addr %s2779, 8
        %s2781 = scalar_lea.vmem [#allocation2], %s2780
        %v2782 = vld [vmem:[%s2781] sm:$0xff]
        %v2783 = vld [vmem:[%s2781 + $0x8] sm:$0xff]
        %v2784 = vld [vmem:[%s2781 + $0x10] sm:$0xff]
        %v2785 = vld [vmem:[%s2781 + $0x18] sm:$0xff]
        %v2786 = vld [vmem:[%s2781 + $0x20] sm:$0xff]
        %v2787 = vld [vmem:[%s2781 + $0x28] sm:$0xff]
        %v2788 = vld [vmem:[%s2781 + $0x30] sm:$0xff]
        %v2789 = vld [vmem:[%s2781 + $0x38] sm:$0xff]
        %v2790 = vadd.f32 %v2782, %v1762
        %v2791 = vadd.f32 %v2783, %v1766
        %v2792 = vadd.f32 %v2784, %v1770
        %v2793 = vadd.f32 %v2785, %v1774
        %v2794 = vadd.f32 %v2786, %v1778
        %v2795 = vadd.f32 %v2787, %v1782
        %v2796 = vadd.f32 %v2788, %v1786
        %v2797 = vadd.f32 %v2789, %v1790
        %v2798 = vmax.f32 %v2790, 0.0
        %v2799 = vmax.f32 %v2791, 0.0
        %v2800 = vmax.f32 %v2792, 0.0
        %v2801 = vmax.f32 %v2793, 0.0
        %v2802 = vmax.f32 %v2794, 0.0
        %v2803 = vmax.f32 %v2795, 0.0
        %v2804 = vmax.f32 %v2796, 0.0
        %v2805 = vmax.f32 %v2797, 0.0
        %v2806 = vadd.f32 %v2771, %v2798
        %v2807 = vadd.f32 %v2772, %v2799
        %v2808 = vadd.f32 %v2773, %v2800
        %v2809 = vadd.f32 %v2774, %v2801
        %v2810 = vadd.f32 %v2775, %v2802
        %v2811 = vadd.f32 %v2776, %v2803
        %v2812 = vadd.f32 %v2777, %v2804
        %v2813 = vadd.f32 %v2778, %v2805
        %s2814 = smul.u32 29, 8
        %s2815 = smul.addr %s2814, 8
        %s2816 = scalar_lea.vmem [#allocation2], %s2815
        %v2817 = vld [vmem:[%s2816] sm:$0xff]
        %v2818 = vld [vmem:[%s2816 + $0x8] sm:$0xff]
        %v2819 = vld [vmem:[%s2816 + $0x10] sm:$0xff]
        %v2820 = vld [vmem:[%s2816 + $0x18] sm:$0xff]
        %v2821 = vld [vmem:[%s2816 + $0x20] sm:$0xff]
        %v2822 = vld [vmem:[%s2816 + $0x28] sm:$0xff]
        %v2823 = vld [vmem:[%s2816 + $0x30] sm:$0xff]
        %v2824 = vld [vmem:[%s2816 + $0x38] sm:$0xff]
        %v2825 = vadd.f32 %v2817, %v1762
        %v2826 = vadd.f32 %v2818, %v1766
        %v2827 = vadd.f32 %v2819, %v1770
        %v2828 = vadd.f32 %v2820, %v1774
        %v2829 = vadd.f32 %v2821, %v1778
        %v2830 = vadd.f32 %v2822, %v1782
        %v2831 = vadd.f32 %v2823, %v1786
        %v2832 = vadd.f32 %v2824, %v1790
        %v2833 = vmax.f32 %v2825, 0.0
        %v2834 = vmax.f32 %v2826, 0.0
        %v2835 = vmax.f32 %v2827, 0.0
        %v2836 = vmax.f32 %v2828, 0.0
        %v2837 = vmax.f32 %v2829, 0.0
        %v2838 = vmax.f32 %v2830, 0.0
        %v2839 = vmax.f32 %v2831, 0.0
        %v2840 = vmax.f32 %v2832, 0.0
        %v2841 = vadd.f32 %v2806, %v2833
        %v2842 = vadd.f32 %v2807, %v2834
        %v2843 = vadd.f32 %v2808, %v2835
        %v2844 = vadd.f32 %v2809, %v2836
        %v2845 = vadd.f32 %v2810, %v2837
        %v2846 = vadd.f32 %v2811, %v2838
        %v2847 = vadd.f32 %v2812, %v2839
        %v2848 = vadd.f32 %v2813, %v2840
        %s2849 = smul.u32 30, 8
        %s2850 = smul.addr %s2849, 8
        %s2851 = scalar_lea.vmem [#allocation2], %s2850
        %v2852 = vld [vmem:[%s2851] sm:$0xff]
        %v2853 = vld [vmem:[%s2851 + $0x8] sm:$0xff]
        %v2854 = vld [vmem:[%s2851 + $0x10] sm:$0xff]
        %v2855 = vld [vmem:[%s2851 + $0x18] sm:$0xff]
        %v2856 = vld [vmem:[%s2851 + $0x20] sm:$0xff]
        %v2857 = vld [vmem:[%s2851 + $0x28] sm:$0xff]
        %v2858 = vld [vmem:[%s2851 + $0x30] sm:$0xff]
        %v2859 = vld [vmem:[%s2851 + $0x38] sm:$0xff]
        %v2860 = vadd.f32 %v2852, %v1762
        %v2861 = vadd.f32 %v2853, %v1766
        %v2862 = vadd.f32 %v2854, %v1770
        %v2863 = vadd.f32 %v2855, %v1774
        %v2864 = vadd.f32 %v2856, %v1778
        %v2865 = vadd.f32 %v2857, %v1782
        %v2866 = vadd.f32 %v2858, %v1786
        %v2867 = vadd.f32 %v2859, %v1790
        %v2868 = vmax.f32 %v2860, 0.0
        %v2869 = vmax.f32 %v2861, 0.0
        %v2870 = vmax.f32 %v2862, 0.0
        %v2871 = vmax.f32 %v2863, 0.0
        %v2872 = vmax.f32 %v2864, 0.0
        %v2873 = vmax.f32 %v2865, 0.0
        %v2874 = vmax.f32 %v2866, 0.0
        %v2875 = vmax.f32 %v2867, 0.0
        %v2876 = vadd.f32 %v2841, %v2868
        %v2877 = vadd.f32 %v2842, %v2869
        %v2878 = vadd.f32 %v2843, %v2870
        %v2879 = vadd.f32 %v2844, %v2871
        %v2880 = vadd.f32 %v2845, %v2872
        %v2881 = vadd.f32 %v2846, %v2873
        %v2882 = vadd.f32 %v2847, %v2874
        %v2883 = vadd.f32 %v2848, %v2875
        %s2884 = smul.u32 31, 8
        %s2885 = smul.addr %s2884, 8
        %s2886 = scalar_lea.vmem [#allocation2], %s2885
        %v2887 = vld [vmem:[%s2886] sm:$0xff]
        %v2888 = vld [vmem:[%s2886 + $0x8] sm:$0xff]
        %v2889 = vld [vmem:[%s2886 + $0x10] sm:$0xff]
        %v2890 = vld [vmem:[%s2886 + $0x18] sm:$0xff]
        %v2891 = vld [vmem:[%s2886 + $0x20] sm:$0xff]
        %v2892 = vld [vmem:[%s2886 + $0x28] sm:$0xff]
        %v2893 = vld [vmem:[%s2886 + $0x30] sm:$0xff]
        %v2894 = vld [vmem:[%s2886 + $0x38] sm:$0xff]
        %v2895 = vadd.f32 %v2887, %v1762
        %v2896 = vadd.f32 %v2888, %v1766
        %v2897 = vadd.f32 %v2889, %v1770
        %v2898 = vadd.f32 %v2890, %v1774
        %v2899 = vadd.f32 %v2891, %v1778
        %v2900 = vadd.f32 %v2892, %v1782
        %v2901 = vadd.f32 %v2893, %v1786
        %v2902 = vadd.f32 %v2894, %v1790
        %v2903 = vmax.f32 %v2895, 0.0
        %v2904 = vmax.f32 %v2896, 0.0
        %v2905 = vmax.f32 %v2897, 0.0
        %v2906 = vmax.f32 %v2898, 0.0
        %v2907 = vmax.f32 %v2899, 0.0
        %v2908 = vmax.f32 %v2900, 0.0
        %v2909 = vmax.f32 %v2901, 0.0
        %v2910 = vmax.f32 %v2902, 0.0
        %v2911 = vadd.f32 %v2876, %v2903
        %v2912 = vadd.f32 %v2877, %v2904
        %v2913 = vadd.f32 %v2878, %v2905
        %v2914 = vadd.f32 %v2879, %v2906
        %v2915 = vadd.f32 %v2880, %v2907
        %v2916 = vadd.f32 %v2881, %v2908
        %v2917 = vadd.f32 %v2882, %v2909
        %v2918 = vadd.f32 %v2883, %v2910
        %v2919 = vrot.slane %v2911, 4
        %v2920 = vadd.f32 %v2911, %v2919
        %v2921 = vrot.slane %v2920, 2
        %v2922 = vadd.f32 %v2920, %v2921
        %v2923 = vrot.slane %v2922, 1
        %v2924 = vadd.f32 %v2922, %v2923
        %v2925 = vrot.slane %v2912, 4
        %v2926 = vadd.f32 %v2912, %v2925
        %v2927 = vrot.slane %v2926, 2
        %v2928 = vadd.f32 %v2926, %v2927
        %v2929 = vrot.slane %v2928, 1
        %v2930 = vadd.f32 %v2928, %v2929
        %v2931 = vrot.slane %v2913, 4
        %v2932 = vadd.f32 %v2913, %v2931
        %v2933 = vrot.slane %v2932, 2
        %v2934 = vadd.f32 %v2932, %v2933
        %v2935 = vrot.slane %v2934, 1
        %v2936 = vadd.f32 %v2934, %v2935
        %v2937 = vrot.slane %v2914, 4
        %v2938 = vadd.f32 %v2914, %v2937
        %v2939 = vrot.slane %v2938, 2
        %v2940 = vadd.f32 %v2938, %v2939
        %v2941 = vrot.slane %v2940, 1
        %v2942 = vadd.f32 %v2940, %v2941
        %v2943 = vrot.slane %v2915, 4
        %v2944 = vadd.f32 %v2915, %v2943
        %v2945 = vrot.slane %v2944, 2
        %v2946 = vadd.f32 %v2944, %v2945
        %v2947 = vrot.slane %v2946, 1
        %v2948 = vadd.f32 %v2946, %v2947
        %v2949 = vrot.slane %v2916, 4
        %v2950 = vadd.f32 %v2916, %v2949
        %v2951 = vrot.slane %v2950, 2
        %v2952 = vadd.f32 %v2950, %v2951
        %v2953 = vrot.slane %v2952, 1
        %v2954 = vadd.f32 %v2952, %v2953
        %v2955 = vrot.slane %v2917, 4
        %v2956 = vadd.f32 %v2917, %v2955
        %v2957 = vrot.slane %v2956, 2
        %v2958 = vadd.f32 %v2956, %v2957
        %v2959 = vrot.slane %v2958, 1
        %v2960 = vadd.f32 %v2958, %v2959
        %v2961 = vrot.slane %v2918, 4
        %v2962 = vadd.f32 %v2918, %v2961
        %v2963 = vrot.slane %v2962, 2
        %v2964 = vadd.f32 %v2962, %v2963
        %v2965 = vrot.slane %v2964, 1
        %v2966 = vadd.f32 %v2964, %v2965
        %v2967 = vmul.f32 %v2924, 0.00390625
        %v2968 = vmul.f32 %v2930, 0.00390625
        %v2969 = vmul.f32 %v2936, 0.00390625
        %v2970 = vmul.f32 %v2942, 0.00390625
        %v2971 = vmul.f32 %v2948, 0.00390625
        %v2972 = vmul.f32 %v2954, 0.00390625
        %v2973 = vmul.f32 %v2960, 0.00390625
        %v2974 = vmul.f32 %v2966, 0.00390625
        %v2983 = vcombine.low %v2967, %v2968
        %v2984 = vcombine.low %v2969, %v2970
        %v2985 = vcombine.low %v2971, %v2972
        %v2986 = vcombine.low %v2973, %v2974
        %v2988 = vunpack.c.l.s4 1966171168
        %v2989 = vunpack.c.0.s8 %v2988
        %v2990 = vlaneseq
        %v2991 = vshrl.u32 %v2990, 7
        %v2992 = vsub.s32 %v2989, %v2991
        %v2993 = vrot.slane %v2983, %v2992
        %v2995 = vunpack.c.l.s4 1966171168
        %v2996 = vunpack.c.0.s8 %v2995
        %v2997 = vlaneseq
        %v2998 = vshrl.u32 %v2997, 7
        %v2999 = vsub.s32 %v2996, %v2998
        %v3000 = vrot.slane %v2984, %v2999
        %v3002 = vunpack.c.l.s4 1966171168
        %v3003 = vunpack.c.0.s8 %v3002
        %v3004 = vlaneseq
        %v3005 = vshrl.u32 %v3004, 7
        %v3006 = vsub.s32 %v3003, %v3005
        %v3007 = vrot.slane %v2985, %v3006
        %v3009 = vunpack.c.l.s4 1966171168
        %v3010 = vunpack.c.0.s8 %v3009
        %v3011 = vlaneseq
        %v3012 = vshrl.u32 %v3011, 7
        %v3013 = vsub.s32 %v3010, %v3012
        %v3014 = vrot.slane %v2986, %v3013
        %v3015 = vcombine.low %v2993, %v3000
        %v3016 = vcombine.low %v3007, %v3014
        %v3018 = vunpack.c.l.s4 1966171168
        %v3019 = vunpack.c.0.s8 %v3018
        %v3020 = vlaneseq
        %v3021 = vshrl.u32 %v3020, 7
        %v3022 = vsub.s32 %v3019, %v3021
        %v3023 = vrot.slane %v3015, %v3022
        %v3025 = vunpack.c.l.s4 1966171168
        %v3026 = vunpack.c.0.s8 %v3025
        %v3027 = vlaneseq
        %v3028 = vshrl.u32 %v3027, 7
        %v3029 = vsub.s32 %v3026, %v3028
        %v3030 = vrot.slane %v3016, %v3029
        %v3031 = vcombine.low %v3023, %v3030
        %3033 = vst [vmem:[%s215] sm:$0xff] %v3031
        %s3034 = sand.u32 %s97, 1
        %s3035 = scalar_lea.sflag [#allocation5], %s3034
        %s3036 = sand.u32 %s97, 1
        %s3037 = smul.addr %s3036, 8
        %s3038 = scalar_lea.vmem [#allocation9], %s3037
        // Predicated region
        $region45: #{tpu_custom_call.1} parent=31 // pred_check
          %p3039 = pneg %p107
        $region46: #{tpu_custom_call.1} parent=31 // pred_check_branch
          %3041 = sbr.rel (%p3039) target = $region48
        $region47: #{tpu_custom_call.1} parent=31 // pred_region
          %s3043 = ssub.s32 128, 128
          %3044 = vsyncadd %s3035, %s3043
          %s3045 = smul.addr %s21, 8
          %s3046 = smul.addr %s3045, 16
          %s3047 = scalar_lea.hbm %s3, %s3046
          %s3049 = sshll.u32 %s3038, 4
          %s3050 = int_to_ptr.vmem [resolvable:$true] %s3049
          %3052 = dma.vmem_to_hbm [thread:$0]  %s3050, 128, %s3047, %s3035
        $region48: #{tpu_custom_call.1} parent=31 // pred_fallthru
          _
      $region32: #{tpu_custom_call.1} parent=5 // pred_fallthru
        _
      %p3053 = scmp.le.s32.totalorder 2, %s16
      // Predicated region
      $region49: #{tpu_custom_call.1} parent=5 // pred_check
        %p3054 = pneg %p3053
      $region50: #{tpu_custom_call.1} parent=5 // pred_check_branch
        %3056 = sbr.rel (%p3054) target = $region52
      $region51: #{tpu_custom_call.1} parent=5 // pred_region
        %s3057 = ssub.s32 %s16, 2
        // Predicated region
        $region53: #{tpu_custom_call.1} parent=51 // pred_check
          %p3058 = pneg %p113
        $region54: #{tpu_custom_call.1} parent=51 // pred_check_branch
          %3060 = sbr.rel (%p3058) target = $region56
        $region55: #{tpu_custom_call.1} parent=51 // pred_region
          %s3061 = sand.u32 %s98, 1
          %s3062 = scalar_lea.sflag [#allocation5], %s3061
          %s3063 = sand.u32 %s98, 1
          %s3064 = smul.addr %s3063, 8
          %s3065 = scalar_lea.vmem [#allocation9], %s3064
          %3066 = dma.done %s3062, 128
        $region56: #{tpu_custom_call.1} parent=51 // pred_fallthru
          _
      $region52: #{tpu_custom_call.1} parent=5 // pred_fallthru
        _
    $region6: #{tpu_custom_call.1} parent=1 // loop_footer
      %s20 = sadd.s32 1, %s16
    $region7: #{tpu_custom_call.1} parent=1 // loop_footer_branch
      %15 = sbr.rel target = $region3
    $region8: #{tpu_custom_call.1} parent=1 // loop_exit
      _
    %3067 = vsyncpa [#allocation4], 1
    %s3068 = scalar_lea.sflag [#allocation4], 1
    %3069 = vsyncpa %s3068, 1
    %3070 = vsyncpa [#allocation7], 1
    %3071 = vsyncpa [#allocation5], 1
    %s3072 = scalar_lea.sflag [#allocation5], 1
    %3073 = vsyncpa %s3072, 1

</llo_original>
